<compile_context>
chip_gen: v7x
topology: tpu7x:2x2x1
jax: 0.10.0
libtpu: 0.0.40
codegen_flags: <defaults>
</compile_context>

<pallas_src>
import functools
import math

import jax
import jax.numpy as jnp
from jax.experimental import pallas as pl
from jax.experimental.pallas import tpu as pltpu

# Row indices of the packed per-channel parameter array (shape (10, E), f32).
_QB, _KB, _VB, _OUTB, _L1B, _L2B, _N1G, _N1B, _N2G, _N2B = range(10)


def _layernorm(x, gamma, beta, eps=1e-5):
    mean = jnp.mean(x, axis=-1, keepdims=True)
    var = jnp.mean((x - mean) ** 2, axis=-1, keepdims=True)
    return (x - mean) * jax.lax.rsqrt(var + eps) * gamma + beta


def attention_layer_kernel(
    x_ref,     # (TB*S, E)  f32   flat activation block (lane-dense 2-D slab)
    wqkv_ref,  # (E, 3E)    cdt   pre-transposed in_proj weight (Q columns pre-scaled)
    wout_ref,  # (E, E)     cdt   pre-transposed out_proj weight
    w1_ref,    # (E, E)     cdt   pre-transposed linear_net[0] weight
    w2_ref,    # (E, E)     cdt   pre-transposed linear_net[3] weight
    vec_ref,   # (10, E)    f32   packed biases + LayerNorm gamma/beta (q bias pre-scaled)
    o_ref,     # (TB*S, E)  f32
    *,
    num_heads,
    seq_len,
):
    N, E = x_ref.shape
    S = seq_len
    TB = N // S
    H = num_heads
    D = E // H
    cdt = wqkv_ref.dtype          # MXU operand dtype (bf16 by default)
    f32 = jnp.float32

    x = x_ref[...]                # (N, E) f32
    vec = vec_ref[...]            # (10, E) f32

    # --- fused QKV projection: one MXU matmul, pre-transposed weight ---------
    qkv = jnp.dot(x.astype(cdt), wqkv_ref[...], preferred_element_type=f32)  # (N, 3E)
    # 1/sqrt(D) was folded into wqkv[:, :E] and vec[_QB] on the host, so q is
    # already scaled here; cast to the MXU dtype *before* the head split so the
    # relayouts below move half the bytes and the f32 copies die early.
    q = (qkv[:, 0 * E:1 * E] + vec[_QB:_QB + 1]).astype(cdt)
    k = (qkv[:, 1 * E:2 * E] + vec[_KB:_KB + 1]).astype(cdt)
    v = (qkv[:, 2 * E:3 * E] + vec[_VB:_VB + 1]).astype(cdt)

    # --- batched multi-head attention (all heads in one pair of MXU calls) ---
    def split_heads(t):            # (N, H*D) cdt -> (H*TB, S, D) head-major batch
        # TODO(synk): a single pltpu.einshape("n(hd)->hnd", t, h=H) relayout would
        # replace the H lane-slices + stack where that grouped form is available.
        per_head = [t[:, h * D:(h + 1) * D] for h in range(H)]
        return jnp.stack(per_head, axis=0).reshape(H * TB, S, D)

    qh = split_heads(q)
    kh = split_heads(k)
    vh = split_heads(v)

    s = jnp.einsum("nqd,nkd->nqk", qh, kh, preferred_element_type=f32)   # (H*TB, S, S)
    # TODO(synk): for S large enough that H*TB*S*S f32 scores blow the VMEM budget
    # even at TB=1 (v7x 64 MiB), tile the KV axis with an online (flash) softmax.
    s = s - jnp.max(s, axis=-1, keepdims=True)
    p = jnp.exp(s)
    inv = pl.reciprocal(jnp.sum(p, axis=-1, keepdims=True), approx=True)  # EUP slot
    p = (p * inv).astype(cdt)
    # TODO(synk): on v6e/v7x the exp/scale could run in bf16 (2x VPU/EUP); kept f32
    # so the kernel matches the f32-softmax reference on all generations incl. v5e.
    o = jnp.einsum("nqk,nkd->nqd", p, vh, preferred_element_type=f32)    # (H*TB, S, D)

    # Cast before the head merge: the lane concat relayout moves bf16, not f32.
    o = o.astype(cdt).reshape(H, N, D)
    attn_cat = jnp.concatenate([o[h] for h in range(H)], axis=-1)        # (N, E) cdt

    attn_out = (jnp.dot(attn_cat, wout_ref[...], preferred_element_type=f32)
                + vec[_OUTB:_OUTB + 1])

    # --- residual + norm1 (f32 elementwise) ----------------------------------
    # TODO(synk): dropout is identity here (inference mode; no RNG mask applied).
    x1 = _layernorm(x + attn_out, vec[_N1G:_N1G + 1], vec[_N1B:_N1B + 1])

    # --- feed-forward: Linear -> ReLU -> Linear -------------------------------
    h1 = jnp.dot(x1.astype(cdt), w1_ref[...], preferred_element_type=f32) + vec[_L1B:_L1B + 1]
    h1 = jnp.maximum(h1, 0.0)
    ff = jnp.dot(h1.astype(cdt), w2_ref[...], preferred_element_type=f32) + vec[_L2B:_L2B + 1]

    # --- residual + norm2 ------------------------------------------------------
    out = _layernorm(x1 + ff, vec[_N2G:_N2G + 1], vec[_N2B:_N2B + 1])
    o_ref[...] = out.astype(o_ref.dtype)


def _vmem_capacity_bytes():
    """Per-core VMEM capacity; conservative 64 MiB (v7x) fallback if the query fails."""
    try:
        return int(pltpu.get_tpu_info().vmem_capacity_bytes)
    except Exception:
        return 64 * 1024 * 1024


def _vmem_estimate(tb, S, E, H, cdt_bytes):
    """Rough upper bound of the per-step VMEM working set (bytes)."""
    n = tb * S
    f32 = 4
    io = 2 * (2 * n * E * f32)                     # double-buffered x-in + out blocks
    weights = 6 * E * E * cdt_bytes                # wqkv(E,3E) + wout + w1 + w2 (single-buffered)
    vec = 10 * E * f32
    qkv = 3 * n * E * f32                          # fused projection result (f32)
    qkv_c = 2 * 3 * n * E * cdt_bytes              # q/k/v cast + head-batched copies
    scores = H * tb * S * S * (f32 + cdt_bytes)    # f32 scores + cdt probs
    ffn = 3 * n * E * f32                          # attn_out / x1 / h1-ff class temps
    return io + weights + vec + qkv + qkv_c + scores + ffn


def _pick_batch_block(B, S, E, H, *, vmem_budget, cdt_bytes, target_rows=1024):
    """Largest TB (divisor of B) whose working set fits the VMEM budget.

    Caps TB <= B/2 (when B > 1) so the 'parallel' grid axis has >= 2 steps and can
    shard across v7x's two TensorCores, and caps M = TB*S near `target_rows` so the
    MXU sees long M runs without starving the pipeline of grid steps.
    """
    tb_cap = B // 2 if B > 1 else 1
    tb_cap = max(1, min(tb_cap, max(1, target_rows // max(S, 1))))
    for tb in range(tb_cap, 0, -1):
        if B % tb == 0 and _vmem_estimate(tb, S, E, H, cdt_bytes) <= vmem_budget:
            return tb
    # TODO(synk): if even TB=1 exceeds the budget (very long S), KV-axis flash
    # tiling inside the kernel is required; fall back to TB=1 here.
    return 1


def _call_kernel(x2d, wqkv, wout, w1, w2, vec, *, B, S, E, TB, num_heads,
                 vmem_limit, weight_pipeline_mode):
    rows = TB * S
    if weight_pipeline_mode is None:
        const = lambda shape: pl.BlockSpec(shape, lambda b: (0,) * len(shape))
    else:
        const = lambda shape: pl.BlockSpec(shape, lambda b: (0,) * len(shape),
                                           pipeline_mode=weight_pipeline_mode)
    return pl.pallas_call(
        functools.partial(attention_layer_kernel, num_heads=num_heads, seq_len=S),
        out_shape=jax.ShapeDtypeStruct((B * S, E), x2d.dtype),
        grid=(B // TB,),
        in_specs=[
            pl.BlockSpec((rows, E), lambda b: (b, 0)),  # x (flat, lane-dense)
            const((E, 3 * E)),                          # wqkv (pre-transposed, Q pre-scaled)
            const((E, E)),                              # wout
            const((E, E)),                              # w1
            const((E, E)),                              # w2
            const((10, E)),                             # packed biases / LN params
        ],
        out_specs=pl.BlockSpec((rows, E), lambda b: (b, 0)),
        compiler_params=pltpu.CompilerParams(
            dimension_semantics=("parallel",),
            vmem_limit_bytes=vmem_limit,
        ),
    )(x2d, wqkv, wout, w1, w2, vec)


def attention_layer(x, params, *, num_heads, matmul_dtype=jnp.bfloat16, block_batch=None):
    """x: (B, S, E) float32. params use the PyTorch nn.Linear (out, in) convention."""
    B, S, E = x.shape
    assert E % num_heads == 0
    f32 = jnp.float32
    cdt_bytes = jnp.dtype(matmul_dtype).itemsize

    # VMEM-aware budgeting: ~100 MiB usable on v5e/v6e (128 MiB), ~50 MiB on v7x (64 MiB).
    vmem_cap = _vmem_capacity_bytes()
    vmem_limit = min(int(vmem_cap * 0.78), 100 * 1024 * 1024)

    TB = block_batch if block_batch is not None else _pick_batch_block(
        B, S, E, num_heads, vmem_budget=vmem_limit, cdt_bytes=cdt_bytes)
    assert B % TB == 0

    # Pre-transpose weights to (in, out), fold the 1/sqrt(D) attention scale into the
    # Q columns + q bias, and pre-cast MXU operands ONCE on the host: no in-kernel
    # transposes or scale multiplies, and half the weight DMA bytes in bf16.
    scale = 1.0 / math.sqrt(E // num_heads)
    wqkv_f = params["in_proj_w"].T.astype(f32)            # (E, 3E)
    wqkv_f = wqkv_f.at[:, :E].multiply(scale)
    wqkv = wqkv_f.astype(matmul_dtype)
    wout = params["out_proj_w"].T.astype(matmul_dtype)     # (E, E)
    w1 = params["lin1_w"].T.astype(matmul_dtype)           # (E, E)
    w2 = params["lin2_w"].T.astype(matmul_dtype)           # (E, E)

    in_b = params["in_proj_b"].reshape(3, E).astype(f32)
    in_b = in_b.at[0].multiply(scale)                      # fold scale into q bias too

    # Pack all per-channel vectors into one (10, E) array -> one BlockSpec / DMA.
    vec = jnp.concatenate(
        [
            in_b,                                # rows 0..2: q/k/v bias (q pre-scaled)
            params["out_proj_b"].reshape(1, E),  # row 3
            params["lin1_b"].reshape(1, E),      # row 4
            params["lin2_b"].reshape(1, E),      # row 5
            params["norm1_g"].reshape(1, E),     # row 6
            params["norm1_b"].reshape(1, E),     # row 7
            params["norm2_g"].reshape(1, E),     # row 8
            params["norm2_b"].reshape(1, E),     # row 9
        ],
        axis=0,
    ).astype(f32)

    # Flatten activations: lane-dense 2-D blocks in and out (unmasked vst).
    # TODO(synk): for HBM-bound configs, bf16 activation I/O would halve x/o DMA bytes.
    x2d = x.reshape(B * S, E)

    kwargs = dict(B=B, S=S, E=E, TB=TB, num_heads=num_heads, vmem_limit=vmem_limit)
    try:
        # Single-buffer the grid-invariant weight/vec blocks (constant index maps):
        # double-buffering them only wastes VMEM, which buys a larger TB instead.
        out2d = _call_kernel(x2d, wqkv, wout, w1, w2, vec,
                             weight_pipeline_mode=pl.Buffered(1), **kwargs)
    except Exception:
        # Fallback: default double-buffering if this Pallas build rejects Buffered(1).
        out2d = _call_kernel(x2d, wqkv, wout, w1, w2, vec,
                             weight_pipeline_mode=None, **kwargs)
    return out2d.reshape(B, S, E)


def init_params(key, embed_dim):
    """Deterministic synthetic weights (shapes mirror nn.MultiheadAttention /
    nn.Linear / nn.LayerNorm in the module's __init__, PyTorch (out,in) layout)."""
    E = embed_dim
    ks = jax.random.split(key, 8)
    s = 1.0 / math.sqrt(E)
    f32 = jnp.float32
    return {
        "in_proj_w": jax.random.uniform(ks[0], (3 * E, E), f32, -s, s),
        "in_proj_b": jax.random.uniform(ks[1], (1, 3 * E), f32, -s, s),
        "out_proj_w": jax.random.uniform(ks[2], (E, E), f32, -s, s),
        "out_proj_b": jnp.zeros((1, E), f32),
        "lin1_w": jax.random.uniform(ks[3], (E, E), f32, -s, s),
        "lin1_b": jax.random.uniform(ks[4], (1, E), f32, -s, s),
        "lin2_w": jax.random.uniform(ks[5], (E, E), f32, -s, s),
        "lin2_b": jax.random.uniform(ks[6], (1, E), f32, -s, s),
        "norm1_g": jnp.ones((1, E), f32),
        "norm1_b": jnp.zeros((1, E), f32),
        "norm2_g": jnp.ones((1, E), f32),
        "norm2_b": jnp.zeros((1, E), f32),
    }


def reference_jax(x, p, num_heads, matmul_dtype=jnp.float32):
    """Pure-JAX reference mirroring the kernel's cast points (f32 accumulation)."""
    B, S, E = x.shape
    H, D = num_heads, E // num_heads
    f32 = jnp.float32
    cdt = matmul_dtype
    scale = 1.0 / math.sqrt(D)

    wqkv = p["in_proj_w"].T.astype(cdt)
    wout = p["out_proj_w"].T.astype(cdt)
    w1 = p["lin1_w"].T.astype(cdt)
    w2 = p["lin2_w"].T.astype(cdt)

    qkv = jnp.einsum("bse,ef->bsf", x.astype(cdt), wqkv, preferred_element_type=f32)
    q, k, v = jnp.split(qkv, 3, axis=-1)
    qb, kb, vb = jnp.split(p["in_proj_b"].reshape(3 * E).astype(f32), 3)
    q, k, v = q + qb, k + kb, v + vb

    def split_heads(t):  # (B,S,E) -> (B,H,S,D)
        return t.reshape(B, S, H, D).transpose(0, 2, 1, 3)

    qh = split_heads(q) * scale
    kh, vh = split_heads(k), split_heads(v)
    s = jnp.einsum("bhqd,bhkd->bhqk", qh.astype(cdt), kh.astype(cdt),
                   preferred_element_type=f32)
    attn = jax.nn.softmax(s, axis=-1)
    o = jnp.einsum("bhqk,bhkd->bhqd", attn.astype(cdt), vh.astype(cdt),
                   preferred_element_type=f32)
    o = o.transpose(0, 2, 1, 3).reshape(B, S, E)
    attn_out = jnp.einsum("bse,ef->bsf", o.astype(cdt), wout,
                          preferred_element_type=f32) + p["out_proj_b"][0]

    def ln(t, g, b, eps=1e-5):
        m = jnp.mean(t, -1, keepdims=True)
        var = jnp.mean((t - m) ** 2, -1, keepdims=True)
        return (t - m) * jax.lax.rsqrt(var + eps) * g[0] + b[0]

    x1 = ln(x + attn_out, p["norm1_g"], p["norm1_b"])
    h1 = jnp.maximum(jnp.einsum("bse,ef->bsf", x1.astype(cdt), w1,
                                preferred_element_type=f32) + p["lin1_b"][0], 0.0)
    ff = jnp.einsum("bse,ef->bsf", h1.astype(cdt), w2,
                    preferred_element_type=f32) + p["lin2_b"][0]
    return ln(x1 + ff, p["norm2_g"], p["norm2_b"])


if __name__ == "__main__":
    B, S, E, H = 2, 8, 32, 4
    key = jax.random.PRNGKey(0)
    kx, kp = jax.random.split(key)
    x = jax.random.normal(kx, (B, S, E), jnp.float32)
    params = init_params(kp, E)

    # f32-matmul path: tight structural check against the pure-JAX reference
    # (differences: approx-reciprocal softmax and the host-folded 1/sqrt(D) scale).
    out_f32 = jax.block_until_ready(
        attention_layer(x, params, num_heads=H, matmul_dtype=jnp.float32))
    ref_f32 = reference_jax(x, params, H, matmul_dtype=jnp.float32)
    assert out_f32.shape == (B, S, E)
    assert jnp.allclose(out_f32, ref_f32, atol=1e-2, rtol=1e-2), "f32 kernel mismatch"

    # Default path: bf16 MXU operands / f32 accumulation, checked against a
    # reference that mirrors the same casts.
    out_bf16 = jax.block_until_ready(attention_layer(x, params, num_heads=H))
    ref_bf16 = reference_jax(x, params, H, matmul_dtype=jnp.bfloat16)
    assert jnp.allclose(out_bf16, ref_bf16, atol=3e-2, rtol=3e-2), "bf16 kernel mismatch"

    print("KERNEL_OK")
</pallas_src>

<mosaic_0001>
module attributes {stable_mosaic.version = 11 : i64} {
  func.func @attention_layer_kernel(%arg0: i32, %arg1: memref<8x32xf32, #tpu.memory_space<vmem>>, %arg2: memref<32x96xf32, #tpu.memory_space<vmem>>, %arg3: memref<32x32xf32, #tpu.memory_space<vmem>>, %arg4: memref<32x32xf32, #tpu.memory_space<vmem>>, %arg5: memref<32x32xf32, #tpu.memory_space<vmem>>, %arg6: memref<10x32xf32, #tpu.memory_space<vmem>>, %arg7: memref<8x32xf32, #tpu.memory_space<vmem>>) attributes {dimension_semantics = [#tpu.dimension_semantics<parallel>], iteration_bounds = array<i64: 2>, scalar_prefetch = 0 : i64, scratch_operands = 0 : i64, tpu.core_type = #tpu.core_type<tc>, window_params = [{transform_indices = @transform_0, window_bounds = array<i64: 8, 32>}, {pipeline_mode = #tpu.pipeline_mode<synchronous>, transform_indices = @transform_1, window_bounds = array<i64: 32, 96>}, {pipeline_mode = #tpu.pipeline_mode<synchronous>, transform_indices = @transform_2, window_bounds = array<i64: 32, 32>}, {pipeline_mode = #tpu.pipeline_mode<synchronous>, transform_indices = @transform_3, window_bounds = array<i64: 32, 32>}, {pipeline_mode = #tpu.pipeline_mode<synchronous>, transform_indices = @transform_4, window_bounds = array<i64: 32, 32>}, {pipeline_mode = #tpu.pipeline_mode<synchronous>, transform_indices = @transform_5, window_bounds = array<i64: 10, 32>}, {transform_indices = @transform_6, window_bounds = array<i64: 8, 32>}]} {
    %c0 = arith.constant 0 : index
    %c0_0 = arith.constant 0 : index
    %0 = vector.load %arg1[%c0, %c0_0] : memref<8x32xf32, #tpu.memory_space<vmem>>, vector<8x32xf32>
    %c0_1 = arith.constant 0 : index
    %c0_2 = arith.constant 0 : index
    %1 = vector.load %arg6[%c0_1, %c0_2] : memref<10x32xf32, #tpu.memory_space<vmem>>, vector<10x32xf32>
    %c0_3 = arith.constant 0 : index
    %c0_4 = arith.constant 0 : index
    %2 = vector.load %arg2[%c0_3, %c0_4] : memref<32x96xf32, #tpu.memory_space<vmem>>, vector<32x96xf32>
    %cst = arith.constant dense<0.000000e+00> : vector<8x96xf32>
    %3 = tpu.matmul %0, %2, %cst {dimension_numbers = #tpu.dot_dimension_numbers<[1], [0], [0], [1], [0, 0, 1, 1], [], []>} : vector<8x32xf32>, vector<32x96xf32>, vector<8x96xf32> -> vector<8x96xf32>
    %4 = vector.extract_strided_slice %3 {offsets = [0, 0], sizes = [8, 32], strides = [1, 1]} : vector<8x96xf32> to vector<8x32xf32>
    %5 = vector.extract_strided_slice %1 {offsets = [0, 0], sizes = [1, 32], strides = [1, 1]} : vector<10x32xf32> to vector<1x32xf32>
    %6 = vector.broadcast %5 : vector<1x32xf32> to vector<8x32xf32>
    %7 = arith.addf %4, %6 : vector<8x32xf32>
    %8 = vector.extract_strided_slice %3 {offsets = [0, 32], sizes = [8, 32], strides = [1, 1]} : vector<8x96xf32> to vector<8x32xf32>
    %9 = vector.extract_strided_slice %1 {offsets = [1, 0], sizes = [1, 32], strides = [1, 1]} : vector<10x32xf32> to vector<1x32xf32>
    %10 = vector.broadcast %9 : vector<1x32xf32> to vector<8x32xf32>
    %11 = arith.addf %8, %10 : vector<8x32xf32>
    %12 = vector.extract_strided_slice %3 {offsets = [0, 64], sizes = [8, 32], strides = [1, 1]} : vector<8x96xf32> to vector<8x32xf32>
    %13 = vector.extract_strided_slice %1 {offsets = [2, 0], sizes = [1, 32], strides = [1, 1]} : vector<10x32xf32> to vector<1x32xf32>
    %14 = vector.broadcast %13 : vector<1x32xf32> to vector<8x32xf32>
    %15 = arith.addf %12, %14 : vector<8x32xf32>
    %16 = vector.extract_strided_slice %7 {offsets = [0, 0], sizes = [8, 8], strides = [1, 1]} : vector<8x32xf32> to vector<8x8xf32>
    %17 = vector.extract_strided_slice %7 {offsets = [0, 8], sizes = [8, 8], strides = [1, 1]} : vector<8x32xf32> to vector<8x8xf32>
    %18 = vector.extract_strided_slice %7 {offsets = [0, 16], sizes = [8, 8], strides = [1, 1]} : vector<8x32xf32> to vector<8x8xf32>
    %19 = vector.extract_strided_slice %7 {offsets = [0, 24], sizes = [8, 8], strides = [1, 1]} : vector<8x32xf32> to vector<8x8xf32>
    %20 = vector.shape_cast %16 : vector<8x8xf32> to vector<1x8x8xf32>
    %21 = vector.shape_cast %17 : vector<8x8xf32> to vector<1x8x8xf32>
    %22 = vector.shape_cast %18 : vector<8x8xf32> to vector<1x8x8xf32>
    %23 = vector.shape_cast %19 : vector<8x8xf32> to vector<1x8x8xf32>
    %24 = tpu.concatenate %20, %21, %22, %23 in 0 : vector<1x8x8xf32>, vector<1x8x8xf32>, vector<1x8x8xf32>, vector<1x8x8xf32> -> vector<4x8x8xf32>
    %25 = vector.extract_strided_slice %11 {offsets = [0, 0], sizes = [8, 8], strides = [1, 1]} : vector<8x32xf32> to vector<8x8xf32>
    %26 = vector.extract_strided_slice %11 {offsets = [0, 8], sizes = [8, 8], strides = [1, 1]} : vector<8x32xf32> to vector<8x8xf32>
    %27 = vector.extract_strided_slice %11 {offsets = [0, 16], sizes = [8, 8], strides = [1, 1]} : vector<8x32xf32> to vector<8x8xf32>
    %28 = vector.extract_strided_slice %11 {offsets = [0, 24], sizes = [8, 8], strides = [1, 1]} : vector<8x32xf32> to vector<8x8xf32>
    %29 = vector.shape_cast %25 : vector<8x8xf32> to vector<1x8x8xf32>
    %30 = vector.shape_cast %26 : vector<8x8xf32> to vector<1x8x8xf32>
    %31 = vector.shape_cast %27 : vector<8x8xf32> to vector<1x8x8xf32>
    %32 = vector.shape_cast %28 : vector<8x8xf32> to vector<1x8x8xf32>
    %33 = tpu.concatenate %29, %30, %31, %32 in 0 : vector<1x8x8xf32>, vector<1x8x8xf32>, vector<1x8x8xf32>, vector<1x8x8xf32> -> vector<4x8x8xf32>
    %34 = vector.extract_strided_slice %15 {offsets = [0, 0], sizes = [8, 8], strides = [1, 1]} : vector<8x32xf32> to vector<8x8xf32>
    %35 = vector.extract_strided_slice %15 {offsets = [0, 8], sizes = [8, 8], strides = [1, 1]} : vector<8x32xf32> to vector<8x8xf32>
    %36 = vector.extract_strided_slice %15 {offsets = [0, 16], sizes = [8, 8], strides = [1, 1]} : vector<8x32xf32> to vector<8x8xf32>
    %37 = vector.extract_strided_slice %15 {offsets = [0, 24], sizes = [8, 8], strides = [1, 1]} : vector<8x32xf32> to vector<8x8xf32>
    %38 = vector.shape_cast %34 : vector<8x8xf32> to vector<1x8x8xf32>
    %39 = vector.shape_cast %35 : vector<8x8xf32> to vector<1x8x8xf32>
    %40 = vector.shape_cast %36 : vector<8x8xf32> to vector<1x8x8xf32>
    %41 = vector.shape_cast %37 : vector<8x8xf32> to vector<1x8x8xf32>
    %42 = tpu.concatenate %38, %39, %40, %41 in 0 : vector<1x8x8xf32>, vector<1x8x8xf32>, vector<1x8x8xf32>, vector<1x8x8xf32> -> vector<4x8x8xf32>
    "tpu.trace_start"() <{level = 10 : i32, message = "nqd,nkd->nqk"}> : () -> ()
    %cst_5 = arith.constant dense<0.000000e+00> : vector<4x8x8xf32>
    %43 = tpu.matmul %24, %33, %cst_5 {dimension_numbers = #tpu.dot_dimension_numbers<[2], [2], [1], [1], [0, 0, 0, 1, 1, 1], [0], [0]>} : vector<4x8x8xf32>, vector<4x8x8xf32>, vector<4x8x8xf32> -> vector<4x8x8xf32>
    "tpu.trace_stop"() : () -> ()
    %cst_6 = arith.constant dense<0xFF800000> : vector<4x8xf32>
    %44 = vector.multi_reduction <maximumf>, %43, %cst_6 [2] : vector<4x8x8xf32> to vector<4x8xf32>
    %45 = vector.shape_cast %44 : vector<4x8xf32> to vector<4x8x1xf32>
    %46 = vector.broadcast %45 : vector<4x8x1xf32> to vector<4x8x8xf32>
    %47 = arith.subf %43, %46 : vector<4x8x8xf32>
    %48 = math.exp %47 : vector<4x8x8xf32>
    %cst_7 = arith.constant dense<0.000000e+00> : vector<4x8xf32>
    %49 = vector.multi_reduction <add>, %48, %cst_7 [2] : vector<4x8x8xf32> to vector<4x8xf32>
    %50 = vector.shape_cast %49 : vector<4x8xf32> to vector<4x8x1xf32>
    %51 = tpu.reciprocal %50 {approx = true} : vector<4x8x1xf32> -> vector<4x8x1xf32>
    %52 = vector.broadcast %51 : vector<4x8x1xf32> to vector<4x8x8xf32>
    %53 = arith.mulf %48, %52 : vector<4x8x8xf32>
    "tpu.trace_start"() <{level = 10 : i32, message = "nqk,nkd->nqd"}> : () -> ()
    %cst_8 = arith.constant dense<0.000000e+00> : vector<4x8x8xf32>
    %54 = tpu.matmul %53, %42, %cst_8 {dimension_numbers = #tpu.dot_dimension_numbers<[2], [1], [1], [2], [0, 0, 0, 1, 1, 2], [0], [0]>} : vector<4x8x8xf32>, vector<4x8x8xf32>, vector<4x8x8xf32> -> vector<4x8x8xf32>
    "tpu.trace_stop"() : () -> ()
    %55 = vector.extract_strided_slice %54 {offsets = [0, 0, 0], sizes = [1, 8, 8], strides = [1, 1, 1]} : vector<4x8x8xf32> to vector<1x8x8xf32>
    %56 = vector.shape_cast %55 : vector<1x8x8xf32> to vector<8x8xf32>
    %57 = vector.extract_strided_slice %54 {offsets = [1, 0, 0], sizes = [1, 8, 8], strides = [1, 1, 1]} : vector<4x8x8xf32> to vector<1x8x8xf32>
    %58 = vector.shape_cast %57 : vector<1x8x8xf32> to vector<8x8xf32>
    %59 = vector.extract_strided_slice %54 {offsets = [2, 0, 0], sizes = [1, 8, 8], strides = [1, 1, 1]} : vector<4x8x8xf32> to vector<1x8x8xf32>
    %60 = vector.shape_cast %59 : vector<1x8x8xf32> to vector<8x8xf32>
    %61 = vector.extract_strided_slice %54 {offsets = [3, 0, 0], sizes = [1, 8, 8], strides = [1, 1, 1]} : vector<4x8x8xf32> to vector<1x8x8xf32>
    %62 = vector.shape_cast %61 : vector<1x8x8xf32> to vector<8x8xf32>
    %63 = tpu.concatenate %56, %58, %60, %62 in 1 : vector<8x8xf32>, vector<8x8xf32>, vector<8x8xf32>, vector<8x8xf32> -> vector<8x32xf32>
    %c0_9 = arith.constant 0 : index
    %c0_10 = arith.constant 0 : index
    %64 = vector.load %arg3[%c0_9, %c0_10] : memref<32x32xf32, #tpu.memory_space<vmem>>, vector<32x32xf32>
    %cst_11 = arith.constant dense<0.000000e+00> : vector<8x32xf32>
    %65 = tpu.matmul %63, %64, %cst_11 {dimension_numbers = #tpu.dot_dimension_numbers<[1], [0], [0], [1], [0, 0, 1, 1], [], []>} : vector<8x32xf32>, vector<32x32xf32>, vector<8x32xf32> -> vector<8x32xf32>
    %66 = vector.extract_strided_slice %1 {offsets = [3, 0], sizes = [1, 32], strides = [1, 1]} : vector<10x32xf32> to vector<1x32xf32>
    %67 = vector.broadcast %66 : vector<1x32xf32> to vector<8x32xf32>
    %68 = arith.addf %65, %67 : vector<8x32xf32>
    %69 = arith.addf %0, %68 : vector<8x32xf32>
    %70 = vector.extract_strided_slice %1 {offsets = [6, 0], sizes = [1, 32], strides = [1, 1]} : vector<10x32xf32> to vector<1x32xf32>
    %71 = vector.extract_strided_slice %1 {offsets = [7, 0], sizes = [1, 32], strides = [1, 1]} : vector<10x32xf32> to vector<1x32xf32>
    %cst_12 = arith.constant dense<0.000000e+00> : vector<8xf32>
    %72 = vector.multi_reduction <add>, %69, %cst_12 [1] : vector<8x32xf32> to vector<8xf32>
    %73 = vector.shape_cast %72 : vector<8xf32> to vector<8x1xf32>
    %cst_13 = arith.constant 3.200000e+01 : f32
    %74 = vector.broadcast %cst_13 : f32 to vector<8x1xf32>
    %75 = arith.divf %73, %74 : vector<8x1xf32>
    %76 = vector.broadcast %75 : vector<8x1xf32> to vector<8x32xf32>
    %77 = arith.subf %69, %76 : vector<8x32xf32>
    %78 = arith.mulf %77, %77 : vector<8x32xf32>
    %cst_14 = arith.constant dense<0.000000e+00> : vector<8xf32>
    %79 = vector.multi_reduction <add>, %78, %cst_14 [1] : vector<8x32xf32> to vector<8xf32>
    %80 = vector.shape_cast %79 : vector<8xf32> to vector<8x1xf32>
    %cst_15 = arith.constant 3.200000e+01 : f32
    %81 = vector.broadcast %cst_15 : f32 to vector<8x1xf32>
    %82 = arith.divf %80, %81 : vector<8x1xf32>
    %83 = vector.broadcast %75 : vector<8x1xf32> to vector<8x32xf32>
    %84 = arith.subf %69, %83 : vector<8x32xf32>
    %cst_16 = arith.constant 9.99999974E-6 : f32
    %85 = vector.broadcast %cst_16 : f32 to vector<8x1xf32>
    %86 = arith.addf %82, %85 : vector<8x1xf32>
    %87 = math.rsqrt %86 : vector<8x1xf32>
    %88 = vector.broadcast %87 : vector<8x1xf32> to vector<8x32xf32>
    %89 = arith.mulf %84, %88 : vector<8x32xf32>
    %90 = vector.broadcast %70 : vector<1x32xf32> to vector<8x32xf32>
    %91 = arith.mulf %89, %90 : vector<8x32xf32>
    %92 = vector.broadcast %71 : vector<1x32xf32> to vector<8x32xf32>
    %93 = arith.addf %91, %92 : vector<8x32xf32>
    %c0_17 = arith.constant 0 : index
    %c0_18 = arith.constant 0 : index
    %94 = vector.load %arg4[%c0_17, %c0_18] : memref<32x32xf32, #tpu.memory_space<vmem>>, vector<32x32xf32>
    %cst_19 = arith.constant dense<0.000000e+00> : vector<8x32xf32>
    %95 = tpu.matmul %93, %94, %cst_19 {dimension_numbers = #tpu.dot_dimension_numbers<[1], [0], [0], [1], [0, 0, 1, 1], [], []>} : vector<8x32xf32>, vector<32x32xf32>, vector<8x32xf32> -> vector<8x32xf32>
    %96 = vector.extract_strided_slice %1 {offsets = [4, 0], sizes = [1, 32], strides = [1, 1]} : vector<10x32xf32> to vector<1x32xf32>
    %97 = vector.broadcast %96 : vector<1x32xf32> to vector<8x32xf32>
    %98 = arith.addf %95, %97 : vector<8x32xf32>
    %cst_20 = arith.constant 0.000000e+00 : f32
    %99 = vector.broadcast %cst_20 : f32 to vector<8x32xf32>
    %100 = arith.maximumf %98, %99 : vector<8x32xf32>
    %c0_21 = arith.constant 0 : index
    %c0_22 = arith.constant 0 : index
    %101 = vector.load %arg5[%c0_21, %c0_22] : memref<32x32xf32, #tpu.memory_space<vmem>>, vector<32x32xf32>
    %cst_23 = arith.constant dense<0.000000e+00> : vector<8x32xf32>
    %102 = tpu.matmul %100, %101, %cst_23 {dimension_numbers = #tpu.dot_dimension_numbers<[1], [0], [0], [1], [0, 0, 1, 1], [], []>} : vector<8x32xf32>, vector<32x32xf32>, vector<8x32xf32> -> vector<8x32xf32>
    %103 = vector.extract_strided_slice %1 {offsets = [5, 0], sizes = [1, 32], strides = [1, 1]} : vector<10x32xf32> to vector<1x32xf32>
    %104 = vector.broadcast %103 : vector<1x32xf32> to vector<8x32xf32>
    %105 = arith.addf %102, %104 : vector<8x32xf32>
    %106 = arith.addf %93, %105 : vector<8x32xf32>
    %107 = vector.extract_strided_slice %1 {offsets = [8, 0], sizes = [1, 32], strides = [1, 1]} : vector<10x32xf32> to vector<1x32xf32>
    %108 = vector.extract_strided_slice %1 {offsets = [9, 0], sizes = [1, 32], strides = [1, 1]} : vector<10x32xf32> to vector<1x32xf32>
    %cst_24 = arith.constant dense<0.000000e+00> : vector<8xf32>
    %109 = vector.multi_reduction <add>, %106, %cst_24 [1] : vector<8x32xf32> to vector<8xf32>
    %110 = vector.shape_cast %109 : vector<8xf32> to vector<8x1xf32>
    %cst_25 = arith.constant 3.200000e+01 : f32
    %111 = vector.broadcast %cst_25 : f32 to vector<8x1xf32>
    %112 = arith.divf %110, %111 : vector<8x1xf32>
    %113 = vector.broadcast %112 : vector<8x1xf32> to vector<8x32xf32>
    %114 = arith.subf %106, %113 : vector<8x32xf32>
    %115 = arith.mulf %114, %114 : vector<8x32xf32>
    %cst_26 = arith.constant dense<0.000000e+00> : vector<8xf32>
    %116 = vector.multi_reduction <add>, %115, %cst_26 [1] : vector<8x32xf32> to vector<8xf32>
    %117 = vector.shape_cast %116 : vector<8xf32> to vector<8x1xf32>
    %cst_27 = arith.constant 3.200000e+01 : f32
    %118 = vector.broadcast %cst_27 : f32 to vector<8x1xf32>
    %119 = arith.divf %117, %118 : vector<8x1xf32>
    %120 = vector.broadcast %112 : vector<8x1xf32> to vector<8x32xf32>
    %121 = arith.subf %106, %120 : vector<8x32xf32>
    %cst_28 = arith.constant 9.99999974E-6 : f32
    %122 = vector.broadcast %cst_28 : f32 to vector<8x1xf32>
    %123 = arith.addf %119, %122 : vector<8x1xf32>
    %124 = math.rsqrt %123 : vector<8x1xf32>
    %125 = vector.broadcast %124 : vector<8x1xf32> to vector<8x32xf32>
    %126 = arith.mulf %121, %125 : vector<8x32xf32>
    %127 = vector.broadcast %107 : vector<1x32xf32> to vector<8x32xf32>
    %128 = arith.mulf %126, %127 : vector<8x32xf32>
    %129 = vector.broadcast %108 : vector<1x32xf32> to vector<8x32xf32>
    %130 = arith.addf %128, %129 : vector<8x32xf32>
    %c0_29 = arith.constant 0 : index
    %c0_30 = arith.constant 0 : index
    %131 = vector.load %arg7[%c0_29, %c0_30] : memref<8x32xf32, #tpu.memory_space<vmem>>, vector<8x32xf32>
    tpu.vector_store %arg7[%c0_29, %c0_30], %130 {strides = array<i32>} : memref<8x32xf32, #tpu.memory_space<vmem>>, vector<8x32xf32>,
    return
  }
  func.func @transform_0(%arg0: i32) -> (i32, i32) {
    %c0_i32 = arith.constant 0 : i32
    %c0_i32_0 = arith.constant 0 : i32
    return %arg0, %c0_i32 : i32, i32
  }
  func.func @transform_1(%arg0: i32) -> (i32, i32) {
    %c0_i32 = arith.constant 0 : i32
    %c0_i32_0 = arith.constant 0 : i32
    %c0_i32_1 = arith.constant 0 : i32
    return %c0_i32, %c0_i32_0 : i32, i32
  }
  func.func @transform_2(%arg0: i32) -> (i32, i32) {
    %c0_i32 = arith.constant 0 : i32
    %c0_i32_0 = arith.constant 0 : i32
    %c0_i32_1 = arith.constant 0 : i32
    return %c0_i32, %c0_i32_0 : i32, i32
  }
  func.func @transform_3(%arg0: i32) -> (i32, i32) {
    %c0_i32 = arith.constant 0 : i32
    %c0_i32_0 = arith.constant 0 : i32
    %c0_i32_1 = arith.constant 0 : i32
    return %c0_i32, %c0_i32_0 : i32, i32
  }
  func.func @transform_4(%arg0: i32) -> (i32, i32) {
    %c0_i32 = arith.constant 0 : i32
    %c0_i32_0 = arith.constant 0 : i32
    %c0_i32_1 = arith.constant 0 : i32
    return %c0_i32, %c0_i32_0 : i32, i32
  }
  func.func @transform_5(%arg0: i32) -> (i32, i32) {
    %c0_i32 = arith.constant 0 : i32
    %c0_i32_0 = arith.constant 0 : i32
    %c0_i32_1 = arith.constant 0 : i32
    return %c0_i32, %c0_i32_0 : i32, i32
  }
  func.func @transform_6(%arg0: i32) -> (i32, i32) {
    %c0_i32 = arith.constant 0 : i32
    %c0_i32_0 = arith.constant 0 : i32
    return %arg0, %c0_i32 : i32, i32
  }
}

module attributes {stable_mosaic.version = 11 : i64} {
  func.func @attention_layer_kernel(%arg0: i32, %arg1: memref<8x32xf32, #tpu.memory_space<vmem>>, %arg2: memref<32x96xf32, #tpu.memory_space<vmem>>, %arg3: memref<32x32xf32, #tpu.memory_space<vmem>>, %arg4: memref<32x32xf32, #tpu.memory_space<vmem>>, %arg5: memref<32x32xf32, #tpu.memory_space<vmem>>, %arg6: memref<10x32xf32, #tpu.memory_space<vmem>>, %arg7: memref<8x32xf32, #tpu.memory_space<vmem>>) attributes {dimension_semantics = [#tpu.dimension_semantics<parallel>], iteration_bounds = array<i64: 2>, scalar_prefetch = 0 : i64, scratch_operands = 0 : i64, tpu.core_type = #tpu.core_type<tc>, window_params = [{transform_indices = @transform_0, window_bounds = array<i64: 8, 32>}, {pipeline_mode = #tpu.pipeline_mode<synchronous>, transform_indices = @transform_1, window_bounds = array<i64: 32, 96>}, {pipeline_mode = #tpu.pipeline_mode<synchronous>, transform_indices = @transform_2, window_bounds = array<i64: 32, 32>}, {pipeline_mode = #tpu.pipeline_mode<synchronous>, transform_indices = @transform_3, window_bounds = array<i64: 32, 32>}, {pipeline_mode = #tpu.pipeline_mode<synchronous>, transform_indices = @transform_4, window_bounds = array<i64: 32, 32>}, {pipeline_mode = #tpu.pipeline_mode<synchronous>, transform_indices = @transform_5, window_bounds = array<i64: 10, 32>}, {transform_indices = @transform_6, window_bounds = array<i64: 8, 32>}]} {
    %c0 = arith.constant 0 : index
    %c0_0 = arith.constant 0 : index
    %0 = vector.load %arg1[%c0, %c0_0] : memref<8x32xf32, #tpu.memory_space<vmem>>, vector<8x32xf32>
    %c0_1 = arith.constant 0 : index
    %c0_2 = arith.constant 0 : index
    %1 = vector.load %arg6[%c0_1, %c0_2] : memref<10x32xf32, #tpu.memory_space<vmem>>, vector<10x32xf32>
    %c0_3 = arith.constant 0 : index
    %c0_4 = arith.constant 0 : index
    %2 = vector.load %arg2[%c0_3, %c0_4] : memref<32x96xf32, #tpu.memory_space<vmem>>, vector<32x96xf32>
    %cst = arith.constant dense<0.000000e+00> : vector<8x96xf32>
    %3 = tpu.matmul %0, %2, %cst {dimension_numbers = #tpu.dot_dimension_numbers<[1], [0], [0], [1], [0, 0, 1, 1], [], []>} : vector<8x32xf32>, vector<32x96xf32>, vector<8x96xf32> -> vector<8x96xf32>
    %4 = vector.extract_strided_slice %3 {offsets = [0, 0], sizes = [8, 32], strides = [1, 1]} : vector<8x96xf32> to vector<8x32xf32>
    %5 = vector.extract_strided_slice %1 {offsets = [0, 0], sizes = [1, 32], strides = [1, 1]} : vector<10x32xf32> to vector<1x32xf32>
    %6 = vector.broadcast %5 : vector<1x32xf32> to vector<8x32xf32>
    %7 = arith.addf %4, %6 : vector<8x32xf32>
    %8 = vector.extract_strided_slice %3 {offsets = [0, 32], sizes = [8, 32], strides = [1, 1]} : vector<8x96xf32> to vector<8x32xf32>
    %9 = vector.extract_strided_slice %1 {offsets = [1, 0], sizes = [1, 32], strides = [1, 1]} : vector<10x32xf32> to vector<1x32xf32>
    %10 = vector.broadcast %9 : vector<1x32xf32> to vector<8x32xf32>
    %11 = arith.addf %8, %10 : vector<8x32xf32>
    %12 = vector.extract_strided_slice %3 {offsets = [0, 64], sizes = [8, 32], strides = [1, 1]} : vector<8x96xf32> to vector<8x32xf32>
    %13 = vector.extract_strided_slice %1 {offsets = [2, 0], sizes = [1, 32], strides = [1, 1]} : vector<10x32xf32> to vector<1x32xf32>
    %14 = vector.broadcast %13 : vector<1x32xf32> to vector<8x32xf32>
    %15 = arith.addf %12, %14 : vector<8x32xf32>
    %16 = vector.extract_strided_slice %7 {offsets = [0, 0], sizes = [8, 8], strides = [1, 1]} : vector<8x32xf32> to vector<8x8xf32>
    %17 = vector.extract_strided_slice %7 {offsets = [0, 8], sizes = [8, 8], strides = [1, 1]} : vector<8x32xf32> to vector<8x8xf32>
    %18 = vector.extract_strided_slice %7 {offsets = [0, 16], sizes = [8, 8], strides = [1, 1]} : vector<8x32xf32> to vector<8x8xf32>
    %19 = vector.extract_strided_slice %7 {offsets = [0, 24], sizes = [8, 8], strides = [1, 1]} : vector<8x32xf32> to vector<8x8xf32>
    %20 = vector.shape_cast %16 : vector<8x8xf32> to vector<1x8x8xf32>
    %21 = vector.shape_cast %17 : vector<8x8xf32> to vector<1x8x8xf32>
    %22 = vector.shape_cast %18 : vector<8x8xf32> to vector<1x8x8xf32>
    %23 = vector.shape_cast %19 : vector<8x8xf32> to vector<1x8x8xf32>
    %24 = tpu.concatenate %20, %21, %22, %23 in 0 : vector<1x8x8xf32>, vector<1x8x8xf32>, vector<1x8x8xf32>, vector<1x8x8xf32> -> vector<4x8x8xf32>
    %25 = vector.extract_strided_slice %11 {offsets = [0, 0], sizes = [8, 8], strides = [1, 1]} : vector<8x32xf32> to vector<8x8xf32>
    %26 = vector.extract_strided_slice %11 {offsets = [0, 8], sizes = [8, 8], strides = [1, 1]} : vector<8x32xf32> to vector<8x8xf32>
    %27 = vector.extract_strided_slice %11 {offsets = [0, 16], sizes = [8, 8], strides = [1, 1]} : vector<8x32xf32> to vector<8x8xf32>
    %28 = vector.extract_strided_slice %11 {offsets = [0, 24], sizes = [8, 8], strides = [1, 1]} : vector<8x32xf32> to vector<8x8xf32>
    %29 = vector.shape_cast %25 : vector<8x8xf32> to vector<1x8x8xf32>
    %30 = vector.shape_cast %26 : vector<8x8xf32> to vector<1x8x8xf32>
    %31 = vector.shape_cast %27 : vector<8x8xf32> to vector<1x8x8xf32>
    %32 = vector.shape_cast %28 : vector<8x8xf32> to vector<1x8x8xf32>
    %33 = tpu.concatenate %29, %30, %31, %32 in 0 : vector<1x8x8xf32>, vector<1x8x8xf32>, vector<1x8x8xf32>, vector<1x8x8xf32> -> vector<4x8x8xf32>
    %34 = vector.extract_strided_slice %15 {offsets = [0, 0], sizes = [8, 8], strides = [1, 1]} : vector<8x32xf32> to vector<8x8xf32>
    %35 = vector.extract_strided_slice %15 {offsets = [0, 8], sizes = [8, 8], strides = [1, 1]} : vector<8x32xf32> to vector<8x8xf32>
    %36 = vector.extract_strided_slice %15 {offsets = [0, 16], sizes = [8, 8], strides = [1, 1]} : vector<8x32xf32> to vector<8x8xf32>
    %37 = vector.extract_strided_slice %15 {offsets = [0, 24], sizes = [8, 8], strides = [1, 1]} : vector<8x32xf32> to vector<8x8xf32>
    %38 = vector.shape_cast %34 : vector<8x8xf32> to vector<1x8x8xf32>
    %39 = vector.shape_cast %35 : vector<8x8xf32> to vector<1x8x8xf32>
    %40 = vector.shape_cast %36 : vector<8x8xf32> to vector<1x8x8xf32>
    %41 = vector.shape_cast %37 : vector<8x8xf32> to vector<1x8x8xf32>
    %42 = tpu.concatenate %38, %39, %40, %41 in 0 : vector<1x8x8xf32>, vector<1x8x8xf32>, vector<1x8x8xf32>, vector<1x8x8xf32> -> vector<4x8x8xf32>
    "tpu.trace_start"() <{level = 10 : i32, message = "nqd,nkd->nqk"}> : () -> ()
    %cst_5 = arith.constant dense<0.000000e+00> : vector<4x8x8xf32>
    %43 = tpu.matmul %24, %33, %cst_5 {dimension_numbers = #tpu.dot_dimension_numbers<[2], [2], [1], [1], [0, 0, 0, 1, 1, 1], [0], [0]>} : vector<4x8x8xf32>, vector<4x8x8xf32>, vector<4x8x8xf32> -> vector<4x8x8xf32>
    "tpu.trace_stop"() : () -> ()
    %cst_6 = arith.constant dense<0xFF800000> : vector<4x8xf32>
    %44 = vector.multi_reduction <maximumf>, %43, %cst_6 [2] : vector<4x8x8xf32> to vector<4x8xf32>
    %45 = vector.shape_cast %44 : vector<4x8xf32> to vector<4x8x1xf32>
    %46 = vector.broadcast %45 : vector<4x8x1xf32> to vector<4x8x8xf32>
    %47 = arith.subf %43, %46 : vector<4x8x8xf32>
    %48 = math.exp %47 : vector<4x8x8xf32>
    %cst_7 = arith.constant dense<0.000000e+00> : vector<4x8xf32>
    %49 = vector.multi_reduction <add>, %48, %cst_7 [2] : vector<4x8x8xf32> to vector<4x8xf32>
    %50 = vector.shape_cast %49 : vector<4x8xf32> to vector<4x8x1xf32>
    %51 = tpu.reciprocal %50 {approx = true} : vector<4x8x1xf32> -> vector<4x8x1xf32>
    %52 = vector.broadcast %51 : vector<4x8x1xf32> to vector<4x8x8xf32>
    %53 = arith.mulf %48, %52 : vector<4x8x8xf32>
    "tpu.trace_start"() <{level = 10 : i32, message = "nqk,nkd->nqd"}> : () -> ()
    %cst_8 = arith.constant dense<0.000000e+00> : vector<4x8x8xf32>
    %54 = tpu.matmul %53, %42, %cst_8 {dimension_numbers = #tpu.dot_dimension_numbers<[2], [1], [1], [2], [0, 0, 0, 1, 1, 2], [0], [0]>} : vector<4x8x8xf32>, vector<4x8x8xf32>, vector<4x8x8xf32> -> vector<4x8x8xf32>
    "tpu.trace_stop"() : () -> ()
    %55 = vector.extract_strided_slice %54 {offsets = [0, 0, 0], sizes = [1, 8, 8], strides = [1, 1, 1]} : vector<4x8x8xf32> to vector<1x8x8xf32>
    %56 = vector.shape_cast %55 : vector<1x8x8xf32> to vector<8x8xf32>
    %57 = vector.extract_strided_slice %54 {offsets = [1, 0, 0], sizes = [1, 8, 8], strides = [1, 1, 1]} : vector<4x8x8xf32> to vector<1x8x8xf32>
    %58 = vector.shape_cast %57 : vector<1x8x8xf32> to vector<8x8xf32>
    %59 = vector.extract_strided_slice %54 {offsets = [2, 0, 0], sizes = [1, 8, 8], strides = [1, 1, 1]} : vector<4x8x8xf32> to vector<1x8x8xf32>
    %60 = vector.shape_cast %59 : vector<1x8x8xf32> to vector<8x8xf32>
    %61 = vector.extract_strided_slice %54 {offsets = [3, 0, 0], sizes = [1, 8, 8], strides = [1, 1, 1]} : vector<4x8x8xf32> to vector<1x8x8xf32>
    %62 = vector.shape_cast %61 : vector<1x8x8xf32> to vector<8x8xf32>
    %63 = tpu.concatenate %56, %58, %60, %62 in 1 : vector<8x8xf32>, vector<8x8xf32>, vector<8x8xf32>, vector<8x8xf32> -> vector<8x32xf32>
    %c0_9 = arith.constant 0 : index
    %c0_10 = arith.constant 0 : index
    %64 = vector.load %arg3[%c0_9, %c0_10] : memref<32x32xf32, #tpu.memory_space<vmem>>, vector<32x32xf32>
    %cst_11 = arith.constant dense<0.000000e+00> : vector<8x32xf32>
    %65 = tpu.matmul %63, %64, %cst_11 {dimension_numbers = #tpu.dot_dimension_numbers<[1], [0], [0], [1], [0, 0, 1, 1], [], []>} : vector<8x32xf32>, vector<32x32xf32>, vector<8x32xf32> -> vector<8x32xf32>
    %66 = vector.extract_strided_slice %1 {offsets = [3, 0], sizes = [1, 32], strides = [1, 1]} : vector<10x32xf32> to vector<1x32xf32>
    %67 = vector.broadcast %66 : vector<1x32xf32> to vector<8x32xf32>
    %68 = arith.addf %65, %67 : vector<8x32xf32>
    %69 = arith.addf %0, %68 : vector<8x32xf32>
    %70 = vector.extract_strided_slice %1 {offsets = [6, 0], sizes = [1, 32], strides = [1, 1]} : vector<10x32xf32> to vector<1x32xf32>
    %71 = vector.extract_strided_slice %1 {offsets = [7, 0], sizes = [1, 32], strides = [1, 1]} : vector<10x32xf32> to vector<1x32xf32>
    %cst_12 = arith.constant dense<0.000000e+00> : vector<8xf32>
    %72 = vector.multi_reduction <add>, %69, %cst_12 [1] : vector<8x32xf32> to vector<8xf32>
    %73 = vector.shape_cast %72 : vector<8xf32> to vector<8x1xf32>
    %cst_13 = arith.constant 3.200000e+01 : f32
    %74 = vector.broadcast %cst_13 : f32 to vector<8x1xf32>
    %75 = arith.divf %73, %74 : vector<8x1xf32>
    %76 = vector.broadcast %75 : vector<8x1xf32> to vector<8x32xf32>
    %77 = arith.subf %69, %76 : vector<8x32xf32>
    %78 = arith.mulf %77, %77 : vector<8x32xf32>
    %cst_14 = arith.constant dense<0.000000e+00> : vector<8xf32>
    %79 = vector.multi_reduction <add>, %78, %cst_14 [1] : vector<8x32xf32> to vector<8xf32>
    %80 = vector.shape_cast %79 : vector<8xf32> to vector<8x1xf32>
    %cst_15 = arith.constant 3.200000e+01 : f32
    %81 = vector.broadcast %cst_15 : f32 to vector<8x1xf32>
    %82 = arith.divf %80, %81 : vector<8x1xf32>
    %83 = vector.broadcast %75 : vector<8x1xf32> to vector<8x32xf32>
    %84 = arith.subf %69, %83 : vector<8x32xf32>
    %cst_16 = arith.constant 9.99999974E-6 : f32
    %85 = vector.broadcast %cst_16 : f32 to vector<8x1xf32>
    %86 = arith.addf %82, %85 : vector<8x1xf32>
    %87 = math.rsqrt %86 : vector<8x1xf32>
    %88 = vector.broadcast %87 : vector<8x1xf32> to vector<8x32xf32>
    %89 = arith.mulf %84, %88 : vector<8x32xf32>
    %90 = vector.broadcast %70 : vector<1x32xf32> to vector<8x32xf32>
    %91 = arith.mulf %89, %90 : vector<8x32xf32>
    %92 = vector.broadcast %71 : vector<1x32xf32> to vector<8x32xf32>
    %93 = arith.addf %91, %92 : vector<8x32xf32>
    %c0_17 = arith.constant 0 : index
    %c0_18 = arith.constant 0 : index
    %94 = vector.load %arg4[%c0_17, %c0_18] : memref<32x32xf32, #tpu.memory_space<vmem>>, vector<32x32xf32>
    %cst_19 = arith.constant dense<0.000000e+00> : vector<8x32xf32>
    %95 = tpu.matmul %93, %94, %cst_19 {dimension_numbers = #tpu.dot_dimension_numbers<[1], [0], [0], [1], [0, 0, 1, 1], [], []>} : vector<8x32xf32>, vector<32x32xf32>, vector<8x32xf32> -> vector<8x32xf32>
    %96 = vector.extract_strided_slice %1 {offsets = [4, 0], sizes = [1, 32], strides = [1, 1]} : vector<10x32xf32> to vector<1x32xf32>
    %97 = vector.broadcast %96 : vector<1x32xf32> to vector<8x32xf32>
    %98 = arith.addf %95, %97 : vector<8x32xf32>
    %cst_20 = arith.constant 0.000000e+00 : f32
    %99 = vector.broadcast %cst_20 : f32 to vector<8x32xf32>
    %100 = arith.maximumf %98, %99 : vector<8x32xf32>
    %c0_21 = arith.constant 0 : index
    %c0_22 = arith.constant 0 : index
    %101 = vector.load %arg5[%c0_21, %c0_22] : memref<32x32xf32, #tpu.memory_space<vmem>>, vector<32x32xf32>
    %cst_23 = arith.constant dense<0.000000e+00> : vector<8x32xf32>
    %102 = tpu.matmul %100, %101, %cst_23 {dimension_numbers = #tpu.dot_dimension_numbers<[1], [0], [0], [1], [0, 0, 1, 1], [], []>} : vector<8x32xf32>, vector<32x32xf32>, vector<8x32xf32> -> vector<8x32xf32>
    %103 = vector.extract_strided_slice %1 {offsets = [5, 0], sizes = [1, 32], strides = [1, 1]} : vector<10x32xf32> to vector<1x32xf32>
    %104 = vector.broadcast %103 : vector<1x32xf32> to vector<8x32xf32>
    %105 = arith.addf %102, %104 : vector<8x32xf32>
    %106 = arith.addf %93, %105 : vector<8x32xf32>
    %107 = vector.extract_strided_slice %1 {offsets = [8, 0], sizes = [1, 32], strides = [1, 1]} : vector<10x32xf32> to vector<1x32xf32>
    %108 = vector.extract_strided_slice %1 {offsets = [9, 0], sizes = [1, 32], strides = [1, 1]} : vector<10x32xf32> to vector<1x32xf32>
    %cst_24 = arith.constant dense<0.000000e+00> : vector<8xf32>
    %109 = vector.multi_reduction <add>, %106, %cst_24 [1] : vector<8x32xf32> to vector<8xf32>
    %110 = vector.shape_cast %109 : vector<8xf32> to vector<8x1xf32>
    %cst_25 = arith.constant 3.200000e+01 : f32
    %111 = vector.broadcast %cst_25 : f32 to vector<8x1xf32>
    %112 = arith.divf %110, %111 : vector<8x1xf32>
    %113 = vector.broadcast %112 : vector<8x1xf32> to vector<8x32xf32>
    %114 = arith.subf %106, %113 : vector<8x32xf32>
    %115 = arith.mulf %114, %114 : vector<8x32xf32>
    %cst_26 = arith.constant dense<0.000000e+00> : vector<8xf32>
    %116 = vector.multi_reduction <add>, %115, %cst_26 [1] : vector<8x32xf32> to vector<8xf32>
    %117 = vector.shape_cast %116 : vector<8xf32> to vector<8x1xf32>
    %cst_27 = arith.constant 3.200000e+01 : f32
    %118 = vector.broadcast %cst_27 : f32 to vector<8x1xf32>
    %119 = arith.divf %117, %118 : vector<8x1xf32>
    %120 = vector.broadcast %112 : vector<8x1xf32> to vector<8x32xf32>
    %121 = arith.subf %106, %120 : vector<8x32xf32>
    %cst_28 = arith.constant 9.99999974E-6 : f32
    %122 = vector.broadcast %cst_28 : f32 to vector<8x1xf32>
    %123 = arith.addf %119, %122 : vector<8x1xf32>
    %124 = math.rsqrt %123 : vector<8x1xf32>
    %125 = vector.broadcast %124 : vector<8x1xf32> to vector<8x32xf32>
    %126 = arith.mulf %121, %125 : vector<8x32xf32>
    %127 = vector.broadcast %107 : vector<1x32xf32> to vector<8x32xf32>
    %128 = arith.mulf %126, %127 : vector<8x32xf32>
    %129 = vector.broadcast %108 : vector<1x32xf32> to vector<8x32xf32>
    %130 = arith.addf %128, %129 : vector<8x32xf32>
    %c0_29 = arith.constant 0 : index
    %c0_30 = arith.constant 0 : index
    %131 = vector.load %arg7[%c0_29, %c0_30] : memref<8x32xf32, #tpu.memory_space<vmem>>, vector<8x32xf32>
    tpu.vector_store %arg7[%c0_29, %c0_30], %130 {strides = array<i32>} : memref<8x32xf32, #tpu.memory_space<vmem>>, vector<8x32xf32>,
    return
  }
  func.func @transform_0(%arg0: i32) -> (i32, i32) {
    %c0_i32 = arith.constant 0 : i32
    %c0_i32_0 = arith.constant 0 : i32
    return %arg0, %c0_i32 : i32, i32
  }
  func.func @transform_1(%arg0: i32) -> (i32, i32) {
    %c0_i32 = arith.constant 0 : i32
    %c0_i32_0 = arith.constant 0 : i32
    %c0_i32_1 = arith.constant 0 : i32
    return %c0_i32, %c0_i32_0 : i32, i32
  }
  func.func @transform_2(%arg0: i32) -> (i32, i32) {
    %c0_i32 = arith.constant 0 : i32
    %c0_i32_0 = arith.constant 0 : i32
    %c0_i32_1 = arith.constant 0 : i32
    return %c0_i32, %c0_i32_0 : i32, i32
  }
  func.func @transform_3(%arg0: i32) -> (i32, i32) {
    %c0_i32 = arith.constant 0 : i32
    %c0_i32_0 = arith.constant 0 : i32
    %c0_i32_1 = arith.constant 0 : i32
    return %c0_i32, %c0_i32_0 : i32, i32
  }
  func.func @transform_4(%arg0: i32) -> (i32, i32) {
    %c0_i32 = arith.constant 0 : i32
    %c0_i32_0 = arith.constant 0 : i32
    %c0_i32_1 = arith.constant 0 : i32
    return %c0_i32, %c0_i32_0 : i32, i32
  }
  func.func @transform_5(%arg0: i32) -> (i32, i32) {
    %c0_i32 = arith.constant 0 : i32
    %c0_i32_0 = arith.constant 0 : i32
    %c0_i32_1 = arith.constant 0 : i32
    return %c0_i32, %c0_i32_0 : i32, i32
  }
  func.func @transform_6(%arg0: i32) -> (i32, i32) {
    %c0_i32 = arith.constant 0 : i32
    %c0_i32_0 = arith.constant 0 : i32
    return %arg0, %c0_i32 : i32, i32
  }
}

</mosaic_0001>

<llo_original>
// kernel: tpu_custom_call.1
$region0: #{tpu_custom_call.1}
  #allocation0 [shape = 'u32[]', space=smem, size = 0x4, offset = 0x4, fixed_abs, tag = 'smem constant byte address 0x4 - core index']
  #allocation1 [shape = 'u32[144,128]{1,0:T(1,128)}', space=vmem, size = 0x12000, scoped, tag = 'internal scratch']
  %s0 = inlined_call_operand.hbm [shape: f32[16,32], index: 0, kind: input, shape index: {}]
  %s1 = inlined_call_operand.hbm [shape: f32[32,96], index: 1, kind: input, shape index: {}]
  %s2 = inlined_call_operand.hbm [shape: f32[32,32], index: 2, kind: input, shape index: {}]
  %s3 = inlined_call_operand.hbm [shape: f32[32,32], index: 3, kind: input, shape index: {}]
  %s4 = inlined_call_operand.hbm [shape: f32[32,32], index: 4, kind: input, shape index: {}]
  %s5 = inlined_call_operand.vmem [shape: f32[10,32], index: 5, kind: input, shape index: {}]
  %s6 = inlined_call_operand.hbm [shape: f32[16,32], index: 6, kind: output, shape index: {}]
  %s7 = sld [smem:[#allocation0]]
  $region77: #{tpu_custom_call.1} parent=0
    _
  %s9 = ssub.s32 1, %s7
  %s10 = scalar_select 0, %s9, %s7
  $region1: #{tpu_custom_call.1} parent=0
    #allocation2 [shape = 'u8[8192]{0}', space=vmem, size = 0x2000, scoped, tag = 'input window, operand 0']
    #allocation3 [shape = 's32[2]{0}', space=sflag, size = 0x8, scoped, tag = 'scoped memory for tpu_custom_call.1']
    #allocation4 [shape = 's32[2]{0}', space=sflag, size = 0x8, scoped, tag = 'scoped memory for tpu_custom_call.1']
    #allocation5 [shape = 'u8[16384]{0}', space=vmem, size = 0x4000, scoped, tag = 'input window, operand 1, single buffered']
    #allocation6 [shape = 's32[1]{0}', space=sflag, size = 0x4, scoped, tag = 'scoped memory for tpu_custom_call.1']
    #allocation7 [shape = 'u8[16384]{0}', space=vmem, size = 0x4000, scoped, tag = 'input window, operand 2, single buffered']
    #allocation8 [shape = 'u8[16384]{0}', space=vmem, size = 0x4000, scoped, tag = 'input window, operand 3, single buffered']
    #allocation9 [shape = 's32[1]{0}', space=sflag, size = 0x4, scoped, tag = 'scoped memory for tpu_custom_call.1']
    #allocation10 [shape = 'u8[16384]{0}', space=vmem, size = 0x4000, scoped, tag = 'input window, operand 4, single buffered']
    #allocation11 [shape = 'u8[8192]{0}', space=vmem, size = 0x2000, scoped, tag = 'output window, operand 0']
    %11 = vsyncpa [#allocation3], 0
    %s12 = scalar_lea.sflag [#allocation3], 1
    %13 = vsyncpa %s12, 0
    %14 = vsyncpa [#allocation6], 0
    %15 = vsyncpa [#allocation9], 0
    %16 = vsyncpa [#allocation4], 0
    %s17 = scalar_lea.sflag [#allocation4], 1
    %18 = vsyncpa %s17, 0
    loop: start=0, step=1, limit=4
    $region2: #{tpu_custom_call.1} parent=1 // loop_pre_header
      _
    $region3: #{tpu_custom_call.1} parent=1 // loop_header
      %s20 = sphi 0, %s24
      %p21 = scmp.ge.s32.totalorder %s20, 4
      %s30 = sphi 0, %s32
      %s33 = sphi 0, %s30
      %s34 = sphi 0, %s33
      %s50 = sphi 0, %s34
      %s54 = sphi 0, %s54
      %s56 = sphi 0, %s54
      %s57 = sphi 0, %s56
      %s71 = sphi 0, %s57
      %s75 = sphi 0, %s75
      %s77 = sphi 0, %s75
      %s78 = sphi 0, %s77
      %s92 = sphi 0, %s78
      %s96 = sphi 0, %s96
      %s98 = sphi 0, %s96
      %s99 = sphi 0, %s98
      %s113 = sphi 0, %s99
      %s117 = sphi 0, %s117
      %s119 = sphi 0, %s117
      %s120 = sphi 0, %s119
      %s134 = sphi 0, %s120
      %s138 = sphi 0, %s138
      %s140 = sphi 0, %s138
      %s141 = sphi 0, %s140
      %s155 = sphi 0, %s141
      %s161 = sphi 0, %s163
      %s164 = sphi 0, %s161
      %s165 = sphi 0, %s164
      %s181 = sphi 0, %s165
    $region4: #{tpu_custom_call.1} parent=1 // loop_header_branch
      %23 = sbr.rel (%p21) target = $region8
    $region5: #{tpu_custom_call.1} parent=1 // loop_body
      %s25 = ssub.s32 %s20, 1
      %s26 = ssub.s32 %s20, 2
      %s27 = sadd.s32 %s20, 1
      %s28 = ssub.s32 %s20, %s27
      %p29 = scmp.eq.s32.totalorder %s28, 0
      %s31 = sadd.s32 %s30, 1
      %s32 = scalar_select %p29, %s30, %s31
      %p35 = pneg %p29
      %p36 = scmp.eq.s32.totalorder %s20, 1
      %p37 = por %p35, %p36
      %p38 = scmp.ne.s32.totalorder %s30, %s33
      %p39 = scmp.eq.s32.totalorder %s20, 0
      %p40 = por %p38, %p39
      %p41 = scmp.ne.s32.totalorder %s30, %s33
      %p42 = scmp.eq.s32.totalorder %s25, 1
      %p43 = por %p41, %p42
      %p44 = scmp.ne.s32.totalorder %s33, %s34
      %p45 = scmp.eq.s32.totalorder %s25, 0
      %p46 = por %p44, %p45
      %p47 = scmp.ne.s32.totalorder %s33, %s34
      %p48 = scmp.eq.s32.totalorder %s26, 1
      %p49 = por %p47, %p48
      %p51 = scmp.ne.s32.totalorder %s34, %s50
      %p52 = scmp.eq.s32.totalorder %s26, 0
      %p53 = por %p51, %p52
      %s55 = sadd.s32 %s54, 1
      %p58 = scmp.eq.s32.totalorder %s20, 1
      %p59 = scmp.ne.s32.totalorder %s54, %s56
      %p60 = scmp.eq.s32.totalorder %s20, 0
      %p61 = por %p59, %p60
      %p62 = scmp.ne.s32.totalorder %s54, %s56
      %p63 = scmp.eq.s32.totalorder %s25, 1
      %p64 = por %p62, %p63
      %p65 = scmp.ne.s32.totalorder %s56, %s57
      %p66 = scmp.eq.s32.totalorder %s25, 0
      %p67 = por %p65, %p66
      %p68 = scmp.ne.s32.totalorder %s56, %s57
      %p69 = scmp.eq.s32.totalorder %s26, 1
      %p70 = por %p68, %p69
      %p72 = scmp.ne.s32.totalorder %s57, %s71
      %p73 = scmp.eq.s32.totalorder %s26, 0
      %p74 = por %p72, %p73
      %s76 = sadd.s32 %s75, 1
      %p79 = scmp.eq.s32.totalorder %s20, 1
      %p80 = scmp.ne.s32.totalorder %s75, %s77
      %p81 = scmp.eq.s32.totalorder %s20, 0
      %p82 = por %p80, %p81
      %p83 = scmp.ne.s32.totalorder %s75, %s77
      %p84 = scmp.eq.s32.totalorder %s25, 1
      %p85 = por %p83, %p84
      %p86 = scmp.ne.s32.totalorder %s77, %s78
      %p87 = scmp.eq.s32.totalorder %s25, 0
      %p88 = por %p86, %p87
      %p89 = scmp.ne.s32.totalorder %s77, %s78
      %p90 = scmp.eq.s32.totalorder %s26, 1
      %p91 = por %p89, %p90
      %p93 = scmp.ne.s32.totalorder %s78, %s92
      %p94 = scmp.eq.s32.totalorder %s26, 0
      %p95 = por %p93, %p94
      %s97 = sadd.s32 %s96, 1
      %p100 = scmp.eq.s32.totalorder %s20, 1
      %p101 = scmp.ne.s32.totalorder %s96, %s98
      %p102 = scmp.eq.s32.totalorder %s20, 0
      %p103 = por %p101, %p102
      %p104 = scmp.ne.s32.totalorder %s96, %s98
      %p105 = scmp.eq.s32.totalorder %s25, 1
      %p106 = por %p104, %p105
      %p107 = scmp.ne.s32.totalorder %s98, %s99
      %p108 = scmp.eq.s32.totalorder %s25, 0
      %p109 = por %p107, %p108
      %p110 = scmp.ne.s32.totalorder %s98, %s99
      %p111 = scmp.eq.s32.totalorder %s26, 1
      %p112 = por %p110, %p111
      %p114 = scmp.ne.s32.totalorder %s99, %s113
      %p115 = scmp.eq.s32.totalorder %s26, 0
      %p116 = por %p114, %p115
      %s118 = sadd.s32 %s117, 1
      %p121 = scmp.eq.s32.totalorder %s20, 1
      %p122 = scmp.ne.s32.totalorder %s117, %s119
      %p123 = scmp.eq.s32.totalorder %s20, 0
      %p124 = por %p122, %p123
      %p125 = scmp.ne.s32.totalorder %s117, %s119
      %p126 = scmp.eq.s32.totalorder %s25, 1
      %p127 = por %p125, %p126
      %p128 = scmp.ne.s32.totalorder %s119, %s120
      %p129 = scmp.eq.s32.totalorder %s25, 0
      %p130 = por %p128, %p129
      %p131 = scmp.ne.s32.totalorder %s119, %s120
      %p132 = scmp.eq.s32.totalorder %s26, 1
      %p133 = por %p131, %p132
      %p135 = scmp.ne.s32.totalorder %s120, %s134
      %p136 = scmp.eq.s32.totalorder %s26, 0
      %p137 = por %p135, %p136
      %s139 = sadd.s32 %s138, 1
      %p142 = scmp.eq.s32.totalorder %s20, 1
      %p143 = scmp.ne.s32.totalorder %s138, %s140
      %p144 = scmp.eq.s32.totalorder %s20, 0
      %p145 = por %p143, %p144
      %p146 = scmp.ne.s32.totalorder %s138, %s140
      %p147 = scmp.eq.s32.totalorder %s25, 1
      %p148 = por %p146, %p147
      %p149 = scmp.ne.s32.totalorder %s140, %s141
      %p150 = scmp.eq.s32.totalorder %s25, 0
      %p151 = por %p149, %p150
      %p152 = scmp.ne.s32.totalorder %s140, %s141
      %p153 = scmp.eq.s32.totalorder %s26, 1
      %p154 = por %p152, %p153
      %p156 = scmp.ne.s32.totalorder %s141, %s155
      %p157 = scmp.eq.s32.totalorder %s26, 0
      %p158 = por %p156, %p157
      %s159 = ssub.s32 %s20, %s27
      %p160 = scmp.eq.s32.totalorder %s159, 0
      %s162 = sadd.s32 %s161, 1
      %s163 = scalar_select %p160, %s161, %s162
      %p166 = pneg %p160
      %p167 = scmp.eq.s32.totalorder %s20, 1
      %p168 = por %p166, %p167
      %p169 = scmp.ne.s32.totalorder %s161, %s164
      %p170 = scmp.eq.s32.totalorder %s20, 0
      %p171 = por %p169, %p170
      %p172 = scmp.ne.s32.totalorder %s161, %s164
      %p173 = scmp.eq.s32.totalorder %s25, 1
      %p174 = por %p172, %p173
      %p175 = scmp.ne.s32.totalorder %s164, %s165
      %p176 = scmp.eq.s32.totalorder %s25, 0
      %p177 = por %p175, %p176
      %p178 = scmp.ne.s32.totalorder %s164, %s165
      %p179 = scmp.eq.s32.totalorder %s26, 1
      %p180 = por %p178, %p179
      %p182 = scmp.ne.s32.totalorder %s165, %s181
      %p183 = scmp.eq.s32.totalorder %s26, 0
      %p184 = por %p182, %p183
      %p185 = scmp.le.s32.totalorder 1, %s20
      %p186 = scmp.lt.s32.totalorder %s20, 3
      %p187 = pnand %p185, %p186
      %p188 = pneg %p187
      // Predicated region
      $region9: #{tpu_custom_call.1} parent=5 // pred_check
        _
      $region10: #{tpu_custom_call.1} parent=5 // pred_check_branch
        %190 = sbr.rel (%p187) target = $region12
      $region11: #{tpu_custom_call.1} parent=5 // pred_region
        %s191 = ssub.s32 %s20, 1
        // Predicated region
        $region13: #{tpu_custom_call.1} parent=11 // pred_check
          %p192 = pneg %p67
        $region14: #{tpu_custom_call.1} parent=11 // pred_check_branch
          %194 = sbr.rel (%p192) target = $region16
        $region15: #{tpu_custom_call.1} parent=11 // pred_region
          %s196 = ssub.s32 512, 512
          %197 = vsyncadd [#allocation6], %s196
          %s198 = sshll.u32 [#allocation5], 4
          %s199 = int_to_ptr.vmem [resolvable:$true] %s198
          %204 = dma.hbm_to_vmem [thread:$0]  %s1, 512, %s199, [#allocation6], 128, 128, 8
        $region16: #{tpu_custom_call.1} parent=11 // pred_fallthru
          _
        // Predicated region
        $region17: #{tpu_custom_call.1} parent=11 // pred_check
          %p205 = pneg %p88
        $region18: #{tpu_custom_call.1} parent=11 // pred_check_branch
          %207 = sbr.rel (%p205) target = $region20
        $region19: #{tpu_custom_call.1} parent=11 // pred_region
          %s209 = ssub.s32 512, 512
          %210 = vsyncadd [#allocation6], %s209
          %s211 = sshll.u32 [#allocation7], 4
          %s212 = int_to_ptr.vmem [resolvable:$true] %s211
          %217 = dma.hbm_to_vmem [thread:$0]  %s2, 512, %s212, [#allocation6], 128, 128, 8
        $region20: #{tpu_custom_call.1} parent=11 // pred_fallthru
          _
        // Predicated region
        $region21: #{tpu_custom_call.1} parent=11 // pred_check
          %p218 = pneg %p109
        $region22: #{tpu_custom_call.1} parent=11 // pred_check_branch
          %220 = sbr.rel (%p218) target = $region24
        $region23: #{tpu_custom_call.1} parent=11 // pred_region
          %s222 = ssub.s32 512, 512
          %223 = vsyncadd [#allocation9], %s222
          %s224 = sshll.u32 [#allocation8], 4
          %s225 = int_to_ptr.vmem [resolvable:$true] %s224
          %230 = dma.hbm_to_vmem [thread:$0]  %s3, 512, %s225, [#allocation9], 128, 128, 8
        $region24: #{tpu_custom_call.1} parent=11 // pred_fallthru
          _
        // Predicated region
        $region25: #{tpu_custom_call.1} parent=11 // pred_check
          %p231 = pneg %p130
        $region26: #{tpu_custom_call.1} parent=11 // pred_check_branch
          %233 = sbr.rel (%p231) target = $region28
        $region27: #{tpu_custom_call.1} parent=11 // pred_region
          %s235 = ssub.s32 512, 512
          %236 = vsyncadd [#allocation9], %s235
          %s237 = sshll.u32 [#allocation10], 4
          %s238 = int_to_ptr.vmem [resolvable:$true] %s237
          %243 = dma.hbm_to_vmem [thread:$0]  %s4, 512, %s238, [#allocation9], 128, 128, 8
        $region28: #{tpu_custom_call.1} parent=11 // pred_fallthru
          _
        // Predicated region
        $region29: #{tpu_custom_call.1} parent=11 // pred_check
          %p244 = pneg %p151
        $region30: #{tpu_custom_call.1} parent=11 // pred_check_branch
          %246 = sbr.rel (%p244) target = $region32
        $region31: #{tpu_custom_call.1} parent=11 // pred_region
          _
        $region32: #{tpu_custom_call.1} parent=11 // pred_fallthru
          _
      $region12: #{tpu_custom_call.1} parent=5 // pred_fallthru
        _
      %p247 = scmp.lt.s32.totalorder %s20, 2
      // Predicated region
      $region33: #{tpu_custom_call.1} parent=5 // pred_check
        %p248 = pneg %p247
      $region34: #{tpu_custom_call.1} parent=5 // pred_check_branch
        %250 = sbr.rel (%p248) target = $region36
      $region35: #{tpu_custom_call.1} parent=5 // pred_region
        // Predicated region
        $region37: #{tpu_custom_call.1} parent=35 // pred_check
          %p251 = pneg %p40
        $region38: #{tpu_custom_call.1} parent=35 // pred_check_branch
          %253 = sbr.rel (%p251) target = $region40
        $region39: #{tpu_custom_call.1} parent=35 // pred_region
          %s254 = sand.u32 %s30, 1
          %s255 = scalar_lea.sflag [#allocation3], %s254
          %s256 = sand.u32 %s30, 1
          %s257 = smul.addr %s256, 8
          %s258 = scalar_lea.vmem [#allocation2], %s257
          %s260 = ssub.s32 128, 128
          %261 = vsyncadd %s255, %s260
          %s262 = smul.addr %s20, 128
          %s263 = scalar_lea.hbm %s0, %s262
          %s265 = sshll.u32 %s258, 4
          %s266 = int_to_ptr.vmem [resolvable:$true] %s265
          %268 = dma.hbm_to_vmem [thread:$0]  %s263, 128, %s266, %s255
        $region40: #{tpu_custom_call.1} parent=35 // pred_fallthru
          _
      $region36: #{tpu_custom_call.1} parent=5 // pred_fallthru
        _
      %p269 = scmp.le.s32.totalorder 1, %s20
      %p270 = scmp.lt.s32.totalorder %s20, 3
      %p271 = pnand %p269, %p270
      %p272 = pneg %p271
      // Predicated region
      $region41: #{tpu_custom_call.1} parent=5 // pred_check
        _
      $region42: #{tpu_custom_call.1} parent=5 // pred_check_branch
        %274 = sbr.rel (%p271) target = $region44
      $region43: #{tpu_custom_call.1} parent=5 // pred_region
        %s275 = ssub.s32 %s20, 1
        %s276 = sand.u32 %s33, 1
        %s277 = scalar_lea.sflag [#allocation3], %s276
        %s278 = sand.u32 %s33, 1
        %s279 = smul.addr %s278, 8
        %s280 = scalar_lea.vmem [#allocation2], %s279
        // Predicated region
        $region45: #{tpu_custom_call.1} parent=43 // pred_check
          %p281 = pneg %p46
        $region46: #{tpu_custom_call.1} parent=43 // pred_check_branch
          %283 = sbr.rel (%p281) target = $region48
        $region47: #{tpu_custom_call.1} parent=43 // pred_region
          %284 = dma.done %s277, 128
        $region48: #{tpu_custom_call.1} parent=43 // pred_fallthru
          _
        // Predicated region
        $region49: #{tpu_custom_call.1} parent=43 // pred_check
          %p285 = pneg %p67
        $region50: #{tpu_custom_call.1} parent=43 // pred_check_branch
          %287 = sbr.rel (%p285) target = $region52
        $region51: #{tpu_custom_call.1} parent=43 // pred_region
          %288 = dma.done [#allocation6], 512
        $region52: #{tpu_custom_call.1} parent=43 // pred_fallthru
          _
        // Predicated region
        $region53: #{tpu_custom_call.1} parent=43 // pred_check
          %p289 = pneg %p88
        $region54: #{tpu_custom_call.1} parent=43 // pred_check_branch
          %291 = sbr.rel (%p289) target = $region56
        $region55: #{tpu_custom_call.1} parent=43 // pred_region
          %292 = dma.done [#allocation6], 512
        $region56: #{tpu_custom_call.1} parent=43 // pred_fallthru
          _
        // Predicated region
        $region57: #{tpu_custom_call.1} parent=43 // pred_check
          %p293 = pneg %p109
        $region58: #{tpu_custom_call.1} parent=43 // pred_check_branch
          %295 = sbr.rel (%p293) target = $region60
        $region59: #{tpu_custom_call.1} parent=43 // pred_region
          %296 = dma.done [#allocation9], 512
        $region60: #{tpu_custom_call.1} parent=43 // pred_fallthru
          _
        // Predicated region
        $region61: #{tpu_custom_call.1} parent=43 // pred_check
          %p297 = pneg %p130
        $region62: #{tpu_custom_call.1} parent=43 // pred_check_branch
          %299 = sbr.rel (%p297) target = $region64
        $region63: #{tpu_custom_call.1} parent=43 // pred_region
          %300 = dma.done [#allocation9], 512
        $region64: #{tpu_custom_call.1} parent=43 // pred_fallthru
          _
        %s301 = sand.u32 %s33, 1
        %s302 = scalar_lea.sflag [#allocation3], %s301
        %s303 = sand.u32 %s33, 1
        %s304 = smul.addr %s303, 8
        %s305 = scalar_lea.vmem [#allocation2], %s304
        %p306 = pneg %p46
        %p307 = pneg %p43
        %p308 = pneg %p67
        %p309 = pneg %p64
        %p310 = pneg %p88
        %p311 = pneg %p85
        %p312 = pneg %p109
        %p313 = pneg %p106
        %p314 = pneg %p130
        %p315 = pneg %p127
        %p316 = pneg %p151
        %p317 = pneg %p148
        %p318 = pneg %p177
        %p319 = pneg %p174
        %s320 = sand.u32 %s164, 1
        %s321 = scalar_lea.sflag [#allocation4], %s320
        %s322 = sand.u32 %s164, 1
        %s323 = smul.addr %s322, 8
        %s324 = scalar_lea.vmem [#allocation11], %s323
        %v325 = vld [vmem:[%s280] sm:$0xff]
        %v326 = vld [vmem:[%s5] sm:$0xff]
        %v327 = vld [vmem:[%s5 + $0x8] sm:$0x3]
        %v328 = vld [vmem:[#allocation5] sm:$0xff]
        %v329 = vld [vmem:[#allocation5 + $0x8] sm:$0xff]
        %v330 = vld [vmem:[#allocation5 + $0x10] sm:$0xff]
        %v331 = vld [vmem:[#allocation5 + $0x18] sm:$0xff]
        %vm332 = vcmask 261120
        %v334 = vsel %vm332, %v325, 0
        %336 = vmatprep.subr.mxu0 0.0
        %337 = vmatpush1.msra.mxu0 %v328
        %338 = vmatprep.subr.mxu0 0.0
        %339 = vmatpush1.msra.mxu0 %v329
        %340 = vmatprep.subr.mxu0 0.0
        %341 = vmatpush1.msra.mxu0 %v330
        %342 = vmatprep.subr.mxu0 0.0
        %343 = vmatpush1.msra.mxu0 %v331
        %344 = vmatprep.subr.mxu0 0.0
        %345 = vmatpush1.msra.mxu0 0.0
        %346 = vmatprep.subr.mxu0 0.0
        %347 = vmatpush1.msra.mxu0 0.0
        %348 = vmatprep.subr.mxu0 0.0
        %349 = vmatpush1.msra.mxu0 0.0
        %350 = vmatprep.subr.mxu0 0.0
        %351 = vmatpush1.msra.mxu0 0.0
        %352 = vmatprep.subr.mxu0 0.0
        %353 = vmatpush1.msra.mxu0 0.0
        %354 = vmatprep.subr.mxu0 0.0
        %355 = vmatpush1.msra.mxu0 0.0
        %356 = vmatprep.subr.mxu0 0.0
        %357 = vmatpush1.msra.mxu0 0.0
        %358 = vmatprep.subr.mxu0 0.0
        %359 = vmatpush1.msra.mxu0 0.0
        %360 = vmatprep.subr.mxu0 0.0
        %361 = vmatpush1.msra.mxu0 0.0
        %362 = vmatprep.subr.mxu0 0.0
        %363 = vmatpush1.msra.mxu0 0.0
        %364 = vmatprep.subr.mxu0 0.0
        %365 = vmatpush1.msra.mxu0 0.0
        %366 = vmatprep.subr.mxu0 0.0
        %367 = vmatpush1.msra.mxu0 0.0
        %368 = vmatprep.subr.mxu0 0.0
        %369 = vmatpush1.msra.mxu0 0.0
        %370 = vmatprep.subr.mxu0 0.0
        %371 = vmatpush1.msra.mxu0 0.0
        %372 = vmatprep.subr.mxu0 0.0
        %373 = vmatpush1.msra.mxu0 0.0
        %374 = vmatprep.subr.mxu0 0.0
        %375 = vmatpush1.msra.mxu0 0.0
        %376 = vmatprep.subr.mxu0 0.0
        %377 = vmatpush1.msra.mxu0 0.0
        %378 = vmatprep.subr.mxu0 0.0
        %379 = vmatpush1.msra.mxu0 0.0
        %380 = vmatprep.subr.mxu0 0.0
        %381 = vmatpush1.msra.mxu0 0.0
        %382 = vmatprep.subr.mxu0 0.0
        %383 = vmatpush1.msra.mxu0 0.0
        %384 = vmatprep.subr.mxu0 0.0
        %385 = vmatpush1.msra.mxu0 0.0
        %386 = vmatprep.subr.mxu0 0.0
        %387 = vmatpush1.msra.mxu0 0.0
        %388 = vmatprep.subr.mxu0 0.0
        %389 = vmatpush1.msra.mxu0 0.0
        %390 = vmatprep.subr.mxu0 0.0
        %391 = vmatpush1.msra.mxu0 0.0
        %392 = vmatprep.subr.mxu0 0.0
        %393 = vmatpush1.msra.mxu0 0.0
        %394 = vmatprep.subr.mxu0 0.0
        %395 = vmatpush1.msra.mxu0 0.0
        %396 = vmatprep.subr.mxu0 0.0
        %397 = vmatpush1.msra.mxu0 0.0
        %398 = vmatprep.subr.mxu0 0.0
        %399 = vmatpush1.msra.mxu0 0.0
        %400 = vmatprep.mubr.f32.mxu0 0.0
        %401 = vmatmul.mubr.f32.gmra.mrb[0].mxu0 %v334
        %v402 = vpop.f32.mrb[0].mxu0
        %v403 = vadd.f32 0.0, %v402
        %v404 = vpop.f32.mrb[0].mxu0
        %405 = vdwg.mxu0
        %v406 = vlaneseq
        %v407 = vshrl.u32 %v406, 7
        %v408 = vsub.s32 0, %v407
        %v409 = vrot.slane %v326, %v408
        %v410 = vadd.f32 %v403, %v409
        %v411 = vlaneseq
        %v412 = vshrl.u32 %v411, 7
        %v413 = vsub.s32 1, %v412
        %v414 = vrot.slane %v326, %v413
        %416 = vrot.lane.b32.xlu0 %v414, 32
        %v417 = vpop.permute.xlu0 %416
        %v419 = vadd.f32 %v403, %v417
        %v420 = vlaneseq
        %v421 = vshrl.u32 %v420, 7
        %v422 = vsub.s32 2, %v421
        %v423 = vrot.slane %v326, %v422
        %425 = vrot.lane.b32.xlu0 %v423, 64
        %v426 = vpop.permute.xlu0 %425
        %v428 = vadd.f32 %v403, %v426
        %430 = vrot.lane.b32.xlu0 %v410, 120
        %v431 = vpop.permute.xlu0 %430
        %432 = vrot.lane.b32.xlu0 %v410, 112
        %v433 = vpop.permute.xlu0 %432
        %434 = vrot.lane.b32.xlu0 %v410, 104
        %v435 = vpop.permute.xlu0 %434
        %437 = vrot.lane.b32.xlu0 %v419, 120
        %v438 = vpop.permute.xlu0 %437
        %439 = vrot.lane.b32.xlu0 %v419, 112
        %v440 = vpop.permute.xlu0 %439
        %441 = vrot.lane.b32.xlu0 %v419, 104
        %v442 = vpop.permute.xlu0 %441
        %444 = vrot.lane.b32.xlu0 %v428, 120
        %v445 = vpop.permute.xlu0 %444
        %446 = vrot.lane.b32.xlu0 %v428, 112
        %v447 = vpop.permute.xlu0 %446
        %448 = vrot.lane.b32.xlu0 %v428, 104
        %v449 = vpop.permute.xlu0 %448
        %450 = vrot.lane.b32.xlu0 %v419, 96
        %v451 = vpop.permute.xlu0 %450
        %vm452 = vcmask 64512
        %v453 = vsel %vm452, %v410, 0
        %v455 = vsel %vm452, %v451, 0
        %457 = vmatprep.subr.mxu0 0.0
        %458 = vmatpush1.xpose.msra.mxu0 %v455
        %459 = vmatprep.subr.mxu0 0.0
        %460 = vmatpush1.xpose.msra.mxu0 0.0
        %461 = vmatprep.subr.mxu0 0.0
        %462 = vmatpush1.xpose.msra.mxu0 0.0
        %463 = vmatprep.subr.mxu0 0.0
        %464 = vmatpush1.xpose.msra.mxu0 0.0
        %465 = vmatprep.subr.mxu0 0.0
        %466 = vmatpush1.xpose.msra.mxu0 0.0
        %467 = vmatprep.subr.mxu0 0.0
        %468 = vmatpush1.xpose.msra.mxu0 0.0
        %469 = vmatprep.subr.mxu0 0.0
        %470 = vmatpush1.xpose.msra.mxu0 0.0
        %471 = vmatprep.subr.mxu0 0.0
        %472 = vmatpush1.xpose.msra.mxu0 0.0
        %473 = vmatprep.subr.mxu0 0.0
        %474 = vmatpush1.xpose.msra.mxu0 0.0
        %475 = vmatprep.subr.mxu0 0.0
        %476 = vmatpush1.xpose.msra.mxu0 0.0
        %477 = vmatprep.subr.mxu0 0.0
        %478 = vmatpush1.xpose.msra.mxu0 0.0
        %479 = vmatprep.subr.mxu0 0.0
        %480 = vmatpush1.xpose.msra.mxu0 0.0
        %481 = vmatprep.subr.mxu0 0.0
        %482 = vmatpush1.xpose.msra.mxu0 0.0
        %483 = vmatprep.subr.mxu0 0.0
        %484 = vmatpush1.xpose.msra.mxu0 0.0
        %485 = vmatprep.subr.mxu0 0.0
        %486 = vmatpush1.xpose.msra.mxu0 0.0
        %487 = vmatprep.subr.mxu0 0.0
        %488 = vmatpush1.xpose.msra.mxu0 0.0
        %489 = vmatprep.subr.mxu0 0.0
        %490 = vmatpush1.xpose.msra.mxu0 0.0
        %491 = vmatprep.subr.mxu0 0.0
        %492 = vmatpush1.xpose.msra.mxu0 0.0
        %493 = vmatprep.subr.mxu0 0.0
        %494 = vmatpush1.xpose.msra.mxu0 0.0
        %495 = vmatprep.subr.mxu0 0.0
        %496 = vmatpush1.xpose.msra.mxu0 0.0
        %497 = vmatprep.subr.mxu0 0.0
        %498 = vmatpush1.xpose.msra.mxu0 0.0
        %499 = vmatprep.subr.mxu0 0.0
        %500 = vmatpush1.xpose.msra.mxu0 0.0
        %501 = vmatprep.subr.mxu0 0.0
        %502 = vmatpush1.xpose.msra.mxu0 0.0
        %503 = vmatprep.subr.mxu0 0.0
        %504 = vmatpush1.xpose.msra.mxu0 0.0
        %505 = vmatprep.subr.mxu0 0.0
        %506 = vmatpush1.xpose.msra.mxu0 0.0
        %507 = vmatprep.subr.mxu0 0.0
        %508 = vmatpush1.xpose.msra.mxu0 0.0
        %509 = vmatprep.subr.mxu0 0.0
        %510 = vmatpush1.xpose.msra.mxu0 0.0
        %511 = vmatprep.subr.mxu0 0.0
        %512 = vmatpush1.xpose.msra.mxu0 0.0
        %513 = vmatprep.subr.mxu0 0.0
        %514 = vmatpush1.xpose.msra.mxu0 0.0
        %515 = vmatprep.subr.mxu0 0.0
        %516 = vmatpush1.xpose.msra.mxu0 0.0
        %517 = vmatprep.subr.mxu0 0.0
        %518 = vmatpush1.xpose.msra.mxu0 0.0
        %519 = vmatprep.subr.mxu0 0.0
        %520 = vmatpush1.xpose.msra.mxu0 0.0
        %521 = vmatprep.mubr.f32.mxu0 0.0
        %522 = vmatmul.mubr.f32.gmra.mrb[0].mxu0 %v453
        %v523 = vpop.f32.mrb[0].mxu0
        %v524 = vadd.f32 0.0, %v523
        %v525 = vpop.f32.mrb[0].mxu0
        %526 = vdwg.mxu0
        %527 = vrot.lane.b32.xlu0 %v438, 96
        %v528 = vpop.permute.xlu0 %527
        %v529 = vsel %vm452, %v431, 0
        %v531 = vsel %vm452, %v528, 0
        %533 = vmatprep.subr.mxu0 0.0
        %534 = vmatpush1.xpose.msra.mxu0 %v531
        %535 = vmatprep.subr.mxu0 0.0
        %536 = vmatpush1.xpose.msra.mxu0 0.0
        %537 = vmatprep.subr.mxu0 0.0
        %538 = vmatpush1.xpose.msra.mxu0 0.0
        %539 = vmatprep.subr.mxu0 0.0
        %540 = vmatpush1.xpose.msra.mxu0 0.0
        %541 = vmatprep.subr.mxu0 0.0
        %542 = vmatpush1.xpose.msra.mxu0 0.0
        %543 = vmatprep.subr.mxu0 0.0
        %544 = vmatpush1.xpose.msra.mxu0 0.0
        %545 = vmatprep.subr.mxu0 0.0
        %546 = vmatpush1.xpose.msra.mxu0 0.0
        %547 = vmatprep.subr.mxu0 0.0
        %548 = vmatpush1.xpose.msra.mxu0 0.0
        %549 = vmatprep.subr.mxu0 0.0
        %550 = vmatpush1.xpose.msra.mxu0 0.0
        %551 = vmatprep.subr.mxu0 0.0
        %552 = vmatpush1.xpose.msra.mxu0 0.0
        %553 = vmatprep.subr.mxu0 0.0
        %554 = vmatpush1.xpose.msra.mxu0 0.0
        %555 = vmatprep.subr.mxu0 0.0
        %556 = vmatpush1.xpose.msra.mxu0 0.0
        %557 = vmatprep.subr.mxu0 0.0
        %558 = vmatpush1.xpose.msra.mxu0 0.0
        %559 = vmatprep.subr.mxu0 0.0
        %560 = vmatpush1.xpose.msra.mxu0 0.0
        %561 = vmatprep.subr.mxu0 0.0
        %562 = vmatpush1.xpose.msra.mxu0 0.0
        %563 = vmatprep.subr.mxu0 0.0
        %564 = vmatpush1.xpose.msra.mxu0 0.0
        %565 = vmatprep.subr.mxu0 0.0
        %566 = vmatpush1.xpose.msra.mxu0 0.0
        %567 = vmatprep.subr.mxu0 0.0
        %568 = vmatpush1.xpose.msra.mxu0 0.0
        %569 = vmatprep.subr.mxu0 0.0
        %570 = vmatpush1.xpose.msra.mxu0 0.0
        %571 = vmatprep.subr.mxu0 0.0
        %572 = vmatpush1.xpose.msra.mxu0 0.0
        %573 = vmatprep.subr.mxu0 0.0
        %574 = vmatpush1.xpose.msra.mxu0 0.0
        %575 = vmatprep.subr.mxu0 0.0
        %576 = vmatpush1.xpose.msra.mxu0 0.0
        %577 = vmatprep.subr.mxu0 0.0
        %578 = vmatpush1.xpose.msra.mxu0 0.0
        %579 = vmatprep.subr.mxu0 0.0
        %580 = vmatpush1.xpose.msra.mxu0 0.0
        %581 = vmatprep.subr.mxu0 0.0
        %582 = vmatpush1.xpose.msra.mxu0 0.0
        %583 = vmatprep.subr.mxu0 0.0
        %584 = vmatpush1.xpose.msra.mxu0 0.0
        %585 = vmatprep.subr.mxu0 0.0
        %586 = vmatpush1.xpose.msra.mxu0 0.0
        %587 = vmatprep.subr.mxu0 0.0
        %588 = vmatpush1.xpose.msra.mxu0 0.0
        %589 = vmatprep.subr.mxu0 0.0
        %590 = vmatpush1.xpose.msra.mxu0 0.0
        %591 = vmatprep.subr.mxu0 0.0
        %592 = vmatpush1.xpose.msra.mxu0 0.0
        %593 = vmatprep.subr.mxu0 0.0
        %594 = vmatpush1.xpose.msra.mxu0 0.0
        %595 = vmatprep.subr.mxu0 0.0
        %596 = vmatpush1.xpose.msra.mxu0 0.0
        %597 = vmatprep.mubr.f32.mxu0 0.0
        %598 = vmatmul.mubr.f32.gmra.mrb[0].mxu0 %v529
        %v599 = vpop.f32.mrb[0].mxu0
        %v600 = vadd.f32 0.0, %v599
        %v601 = vpop.f32.mrb[0].mxu0
        %602 = vdwg.mxu0
        %603 = vrot.lane.b32.xlu0 %v440, 96
        %v604 = vpop.permute.xlu0 %603
        %v605 = vsel %vm452, %v433, 0
        %v607 = vsel %vm452, %v604, 0
        %609 = vmatprep.subr.mxu0 0.0
        %610 = vmatpush1.xpose.msra.mxu0 %v607
        %611 = vmatprep.subr.mxu0 0.0
        %612 = vmatpush1.xpose.msra.mxu0 0.0
        %613 = vmatprep.subr.mxu0 0.0
        %614 = vmatpush1.xpose.msra.mxu0 0.0
        %615 = vmatprep.subr.mxu0 0.0
        %616 = vmatpush1.xpose.msra.mxu0 0.0
        %617 = vmatprep.subr.mxu0 0.0
        %618 = vmatpush1.xpose.msra.mxu0 0.0
        %619 = vmatprep.subr.mxu0 0.0
        %620 = vmatpush1.xpose.msra.mxu0 0.0
        %621 = vmatprep.subr.mxu0 0.0
        %622 = vmatpush1.xpose.msra.mxu0 0.0
        %623 = vmatprep.subr.mxu0 0.0
        %624 = vmatpush1.xpose.msra.mxu0 0.0
        %625 = vmatprep.subr.mxu0 0.0
        %626 = vmatpush1.xpose.msra.mxu0 0.0
        %627 = vmatprep.subr.mxu0 0.0
        %628 = vmatpush1.xpose.msra.mxu0 0.0
        %629 = vmatprep.subr.mxu0 0.0
        %630 = vmatpush1.xpose.msra.mxu0 0.0
        %631 = vmatprep.subr.mxu0 0.0
        %632 = vmatpush1.xpose.msra.mxu0 0.0
        %633 = vmatprep.subr.mxu0 0.0
        %634 = vmatpush1.xpose.msra.mxu0 0.0
        %635 = vmatprep.subr.mxu0 0.0
        %636 = vmatpush1.xpose.msra.mxu0 0.0
        %637 = vmatprep.subr.mxu0 0.0
        %638 = vmatpush1.xpose.msra.mxu0 0.0
        %639 = vmatprep.subr.mxu0 0.0
        %640 = vmatpush1.xpose.msra.mxu0 0.0
        %641 = vmatprep.subr.mxu0 0.0
        %642 = vmatpush1.xpose.msra.mxu0 0.0
        %643 = vmatprep.subr.mxu0 0.0
        %644 = vmatpush1.xpose.msra.mxu0 0.0
        %645 = vmatprep.subr.mxu0 0.0
        %646 = vmatpush1.xpose.msra.mxu0 0.0
        %647 = vmatprep.subr.mxu0 0.0
        %648 = vmatpush1.xpose.msra.mxu0 0.0
        %649 = vmatprep.subr.mxu0 0.0
        %650 = vmatpush1.xpose.msra.mxu0 0.0
        %651 = vmatprep.subr.mxu0 0.0
        %652 = vmatpush1.xpose.msra.mxu0 0.0
        %653 = vmatprep.subr.mxu0 0.0
        %654 = vmatpush1.xpose.msra.mxu0 0.0
        %655 = vmatprep.subr.mxu0 0.0
        %656 = vmatpush1.xpose.msra.mxu0 0.0
        %657 = vmatprep.subr.mxu0 0.0
        %658 = vmatpush1.xpose.msra.mxu0 0.0
        %659 = vmatprep.subr.mxu0 0.0
        %660 = vmatpush1.xpose.msra.mxu0 0.0
        %661 = vmatprep.subr.mxu0 0.0
        %662 = vmatpush1.xpose.msra.mxu0 0.0
        %663 = vmatprep.subr.mxu0 0.0
        %664 = vmatpush1.xpose.msra.mxu0 0.0
        %665 = vmatprep.subr.mxu0 0.0
        %666 = vmatpush1.xpose.msra.mxu0 0.0
        %667 = vmatprep.subr.mxu0 0.0
        %668 = vmatpush1.xpose.msra.mxu0 0.0
        %669 = vmatprep.subr.mxu0 0.0
        %670 = vmatpush1.xpose.msra.mxu0 0.0
        %671 = vmatprep.subr.mxu0 0.0
        %672 = vmatpush1.xpose.msra.mxu0 0.0
        %673 = vmatprep.mubr.f32.mxu0 0.0
        %674 = vmatmul.mubr.f32.gmra.mrb[0].mxu0 %v605
        %v675 = vpop.f32.mrb[0].mxu0
        %v676 = vadd.f32 0.0, %v675
        %v677 = vpop.f32.mrb[0].mxu0
        %678 = vdwg.mxu0
        %679 = vrot.lane.b32.xlu0 %v442, 96
        %v680 = vpop.permute.xlu0 %679
        %v681 = vsel %vm452, %v435, 0
        %v683 = vsel %vm452, %v680, 0
        %685 = vmatprep.subr.mxu0 0.0
        %686 = vmatpush1.xpose.msra.mxu0 %v683
        %687 = vmatprep.subr.mxu0 0.0
        %688 = vmatpush1.xpose.msra.mxu0 0.0
        %689 = vmatprep.subr.mxu0 0.0
        %690 = vmatpush1.xpose.msra.mxu0 0.0
        %691 = vmatprep.subr.mxu0 0.0
        %692 = vmatpush1.xpose.msra.mxu0 0.0
        %693 = vmatprep.subr.mxu0 0.0
        %694 = vmatpush1.xpose.msra.mxu0 0.0
        %695 = vmatprep.subr.mxu0 0.0
        %696 = vmatpush1.xpose.msra.mxu0 0.0
        %697 = vmatprep.subr.mxu0 0.0
        %698 = vmatpush1.xpose.msra.mxu0 0.0
        %699 = vmatprep.subr.mxu0 0.0
        %700 = vmatpush1.xpose.msra.mxu0 0.0
        %701 = vmatprep.subr.mxu0 0.0
        %702 = vmatpush1.xpose.msra.mxu0 0.0
        %703 = vmatprep.subr.mxu0 0.0
        %704 = vmatpush1.xpose.msra.mxu0 0.0
        %705 = vmatprep.subr.mxu0 0.0
        %706 = vmatpush1.xpose.msra.mxu0 0.0
        %707 = vmatprep.subr.mxu0 0.0
        %708 = vmatpush1.xpose.msra.mxu0 0.0
        %709 = vmatprep.subr.mxu0 0.0
        %710 = vmatpush1.xpose.msra.mxu0 0.0
        %711 = vmatprep.subr.mxu0 0.0
        %712 = vmatpush1.xpose.msra.mxu0 0.0
        %713 = vmatprep.subr.mxu0 0.0
        %714 = vmatpush1.xpose.msra.mxu0 0.0
        %715 = vmatprep.subr.mxu0 0.0
        %716 = vmatpush1.xpose.msra.mxu0 0.0
        %717 = vmatprep.subr.mxu0 0.0
        %718 = vmatpush1.xpose.msra.mxu0 0.0
        %719 = vmatprep.subr.mxu0 0.0
        %720 = vmatpush1.xpose.msra.mxu0 0.0
        %721 = vmatprep.subr.mxu0 0.0
        %722 = vmatpush1.xpose.msra.mxu0 0.0
        %723 = vmatprep.subr.mxu0 0.0
        %724 = vmatpush1.xpose.msra.mxu0 0.0
        %725 = vmatprep.subr.mxu0 0.0
        %726 = vmatpush1.xpose.msra.mxu0 0.0
        %727 = vmatprep.subr.mxu0 0.0
        %728 = vmatpush1.xpose.msra.mxu0 0.0
        %729 = vmatprep.subr.mxu0 0.0
        %730 = vmatpush1.xpose.msra.mxu0 0.0
        %731 = vmatprep.subr.mxu0 0.0
        %732 = vmatpush1.xpose.msra.mxu0 0.0
        %733 = vmatprep.subr.mxu0 0.0
        %734 = vmatpush1.xpose.msra.mxu0 0.0
        %735 = vmatprep.subr.mxu0 0.0
        %736 = vmatpush1.xpose.msra.mxu0 0.0
        %737 = vmatprep.subr.mxu0 0.0
        %738 = vmatpush1.xpose.msra.mxu0 0.0
        %739 = vmatprep.subr.mxu0 0.0
        %740 = vmatpush1.xpose.msra.mxu0 0.0
        %741 = vmatprep.subr.mxu0 0.0
        %742 = vmatpush1.xpose.msra.mxu0 0.0
        %743 = vmatprep.subr.mxu0 0.0
        %744 = vmatpush1.xpose.msra.mxu0 0.0
        %745 = vmatprep.subr.mxu0 0.0
        %746 = vmatpush1.xpose.msra.mxu0 0.0
        %747 = vmatprep.subr.mxu0 0.0
        %748 = vmatpush1.xpose.msra.mxu0 0.0
        %749 = vmatprep.mubr.f32.mxu0 0.0
        %750 = vmatmul.mubr.f32.gmra.mrb[0].mxu0 %v681
        %v751 = vpop.f32.mrb[0].mxu0
        %v752 = vadd.f32 0.0, %v751
        %v753 = vpop.f32.mrb[0].mxu0
        %754 = vdwg.mxu0
        %v755 = vsel %vm452, %v524, -inf
        %756 = vmax.xlane.f32.xlu0 %v755
        %v757 = vpop.xlane.xlu0 %756
        %v758 = vsel %vm452, %v600, -inf
        %759 = vmax.xlane.f32.xlu0 %v758
        %v760 = vpop.xlane.xlu0 %759
        %v761 = vsel %vm452, %v676, -inf
        %762 = vmax.xlane.f32.xlu0 %v761
        %v763 = vpop.xlane.xlu0 %762
        %v764 = vsel %vm452, %v752, -inf
        %765 = vmax.xlane.f32.xlu0 %v764
        %v766 = vpop.xlane.xlu0 %765
        %v767 = vsub.f32 %v524, %v757
        %v768 = vsub.f32 %v600, %v760
        %v769 = vsub.f32 %v676, %v763
        %v770 = vsub.f32 %v752, %v766
        %v771 = vmul.f32 %v767, 1.442695
        %v772 = vpow.pop %v771
        %v773 = vmul.f32 %v768, 1.442695
        %v774 = vpow.pop %v773
        %v775 = vmul.f32 %v769, 1.442695
        %v776 = vpow.pop %v775
        %v777 = vmul.f32 %v770, 1.442695
        %v778 = vpow.pop %v777
        %v779 = vsel %vm452, %v772, 0.0
        %780 = vadd.xlane.f32.xlu0 %v779
        %v781 = vpop.xlane.xlu0 %780
        %v782 = vsel %vm452, %v774, 0.0
        %783 = vadd.xlane.f32.xlu0 %v782
        %v784 = vpop.xlane.xlu0 %783
        %v785 = vsel %vm452, %v776, 0.0
        %786 = vadd.xlane.f32.xlu0 %v785
        %v787 = vpop.xlane.xlu0 %786
        %v788 = vsel %vm452, %v778, 0.0
        %789 = vadd.xlane.f32.xlu0 %v788
        %v790 = vpop.xlane.xlu0 %789
        %v791 = vrcp.pop %v781
        %v792 = vrcp.pop %v784
        %v793 = vrcp.pop %v787
        %v794 = vrcp.pop %v790
        %v795 = vmul.f32 %v772, %v791
        %v796 = vmul.f32 %v774, %v792
        %v797 = vmul.f32 %v776, %v793
        %v798 = vmul.f32 %v778, %v794
        %799 = vrot.lane.b32.xlu0 %v428, 64
        %v800 = vpop.permute.xlu0 %799
        %v803 = vsel %vm452, %v795, 0
        %805 = vmatprep.subr.mxu0 0.0
        %806 = vmatpush1.msra.mxu0 %v800
        %807 = vmatprep.subr.mxu0 0.0
        %808 = vmatpush1.msra.mxu0 0.0
        %809 = vmatprep.subr.mxu0 0.0
        %810 = vmatpush1.msra.mxu0 0.0
        %811 = vmatprep.subr.mxu0 0.0
        %812 = vmatpush1.msra.mxu0 0.0
        %813 = vmatprep.subr.mxu0 0.0
        %814 = vmatpush1.msra.mxu0 0.0
        %815 = vmatprep.subr.mxu0 0.0
        %816 = vmatpush1.msra.mxu0 0.0
        %817 = vmatprep.subr.mxu0 0.0
        %818 = vmatpush1.msra.mxu0 0.0
        %819 = vmatprep.subr.mxu0 0.0
        %820 = vmatpush1.msra.mxu0 0.0
        %821 = vmatprep.subr.mxu0 0.0
        %822 = vmatpush1.msra.mxu0 0.0
        %823 = vmatprep.subr.mxu0 0.0
        %824 = vmatpush1.msra.mxu0 0.0
        %825 = vmatprep.subr.mxu0 0.0
        %826 = vmatpush1.msra.mxu0 0.0
        %827 = vmatprep.subr.mxu0 0.0
        %828 = vmatpush1.msra.mxu0 0.0
        %829 = vmatprep.subr.mxu0 0.0
        %830 = vmatpush1.msra.mxu0 0.0
        %831 = vmatprep.subr.mxu0 0.0
        %832 = vmatpush1.msra.mxu0 0.0
        %833 = vmatprep.subr.mxu0 0.0
        %834 = vmatpush1.msra.mxu0 0.0
        %835 = vmatprep.subr.mxu0 0.0
        %836 = vmatpush1.msra.mxu0 0.0
        %837 = vmatprep.subr.mxu0 0.0
        %838 = vmatpush1.msra.mxu0 0.0
        %839 = vmatprep.subr.mxu0 0.0
        %840 = vmatpush1.msra.mxu0 0.0
        %841 = vmatprep.subr.mxu0 0.0
        %842 = vmatpush1.msra.mxu0 0.0
        %843 = vmatprep.subr.mxu0 0.0
        %844 = vmatpush1.msra.mxu0 0.0
        %845 = vmatprep.subr.mxu0 0.0
        %846 = vmatpush1.msra.mxu0 0.0
        %847 = vmatprep.subr.mxu0 0.0
        %848 = vmatpush1.msra.mxu0 0.0
        %849 = vmatprep.subr.mxu0 0.0
        %850 = vmatpush1.msra.mxu0 0.0
        %851 = vmatprep.subr.mxu0 0.0
        %852 = vmatpush1.msra.mxu0 0.0
        %853 = vmatprep.subr.mxu0 0.0
        %854 = vmatpush1.msra.mxu0 0.0
        %855 = vmatprep.subr.mxu0 0.0
        %856 = vmatpush1.msra.mxu0 0.0
        %857 = vmatprep.subr.mxu0 0.0
        %858 = vmatpush1.msra.mxu0 0.0
        %859 = vmatprep.subr.mxu0 0.0
        %860 = vmatpush1.msra.mxu0 0.0
        %861 = vmatprep.subr.mxu0 0.0
        %862 = vmatpush1.msra.mxu0 0.0
        %863 = vmatprep.subr.mxu0 0.0
        %864 = vmatpush1.msra.mxu0 0.0
        %865 = vmatprep.subr.mxu0 0.0
        %866 = vmatpush1.msra.mxu0 0.0
        %867 = vmatprep.subr.mxu0 0.0
        %868 = vmatpush1.msra.mxu0 0.0
        %869 = vmatprep.mubr.f32.mxu0 0.0
        %870 = vmatmul.mubr.f32.gmra.mrb[0].mxu0 %v803
        %v871 = vpop.f32.mrb[0].mxu0
        %v872 = vadd.f32 0.0, %v871
        %v873 = vpop.f32.mrb[0].mxu0
        %874 = vdwg.mxu0
        %875 = vrot.lane.b32.xlu0 %v445, 64
        %v876 = vpop.permute.xlu0 %875
        %v879 = vsel %vm452, %v796, 0
        %881 = vmatprep.subr.mxu0 0.0
        %882 = vmatpush1.msra.mxu0 %v876
        %883 = vmatprep.subr.mxu0 0.0
        %884 = vmatpush1.msra.mxu0 0.0
        %885 = vmatprep.subr.mxu0 0.0
        %886 = vmatpush1.msra.mxu0 0.0
        %887 = vmatprep.subr.mxu0 0.0
        %888 = vmatpush1.msra.mxu0 0.0
        %889 = vmatprep.subr.mxu0 0.0
        %890 = vmatpush1.msra.mxu0 0.0
        %891 = vmatprep.subr.mxu0 0.0
        %892 = vmatpush1.msra.mxu0 0.0
        %893 = vmatprep.subr.mxu0 0.0
        %894 = vmatpush1.msra.mxu0 0.0
        %895 = vmatprep.subr.mxu0 0.0
        %896 = vmatpush1.msra.mxu0 0.0
        %897 = vmatprep.subr.mxu0 0.0
        %898 = vmatpush1.msra.mxu0 0.0
        %899 = vmatprep.subr.mxu0 0.0
        %900 = vmatpush1.msra.mxu0 0.0
        %901 = vmatprep.subr.mxu0 0.0
        %902 = vmatpush1.msra.mxu0 0.0
        %903 = vmatprep.subr.mxu0 0.0
        %904 = vmatpush1.msra.mxu0 0.0
        %905 = vmatprep.subr.mxu0 0.0
        %906 = vmatpush1.msra.mxu0 0.0
        %907 = vmatprep.subr.mxu0 0.0
        %908 = vmatpush1.msra.mxu0 0.0
        %909 = vmatprep.subr.mxu0 0.0
        %910 = vmatpush1.msra.mxu0 0.0
        %911 = vmatprep.subr.mxu0 0.0
        %912 = vmatpush1.msra.mxu0 0.0
        %913 = vmatprep.subr.mxu0 0.0
        %914 = vmatpush1.msra.mxu0 0.0
        %915 = vmatprep.subr.mxu0 0.0
        %916 = vmatpush1.msra.mxu0 0.0
        %917 = vmatprep.subr.mxu0 0.0
        %918 = vmatpush1.msra.mxu0 0.0
        %919 = vmatprep.subr.mxu0 0.0
        %920 = vmatpush1.msra.mxu0 0.0
        %921 = vmatprep.subr.mxu0 0.0
        %922 = vmatpush1.msra.mxu0 0.0
        %923 = vmatprep.subr.mxu0 0.0
        %924 = vmatpush1.msra.mxu0 0.0
        %925 = vmatprep.subr.mxu0 0.0
        %926 = vmatpush1.msra.mxu0 0.0
        %927 = vmatprep.subr.mxu0 0.0
        %928 = vmatpush1.msra.mxu0 0.0
        %929 = vmatprep.subr.mxu0 0.0
        %930 = vmatpush1.msra.mxu0 0.0
        %931 = vmatprep.subr.mxu0 0.0
        %932 = vmatpush1.msra.mxu0 0.0
        %933 = vmatprep.subr.mxu0 0.0
        %934 = vmatpush1.msra.mxu0 0.0
        %935 = vmatprep.subr.mxu0 0.0
        %936 = vmatpush1.msra.mxu0 0.0
        %937 = vmatprep.subr.mxu0 0.0
        %938 = vmatpush1.msra.mxu0 0.0
        %939 = vmatprep.subr.mxu0 0.0
        %940 = vmatpush1.msra.mxu0 0.0
        %941 = vmatprep.subr.mxu0 0.0
        %942 = vmatpush1.msra.mxu0 0.0
        %943 = vmatprep.subr.mxu0 0.0
        %944 = vmatpush1.msra.mxu0 0.0
        %945 = vmatprep.mubr.f32.mxu0 0.0
        %946 = vmatmul.mubr.f32.gmra.mrb[0].mxu0 %v879
        %v947 = vpop.f32.mrb[0].mxu0
        %v948 = vadd.f32 0.0, %v947
        %v949 = vpop.f32.mrb[0].mxu0
        %950 = vdwg.mxu0
        %951 = vrot.lane.b32.xlu0 %v447, 64
        %v952 = vpop.permute.xlu0 %951
        %v955 = vsel %vm452, %v797, 0
        %957 = vmatprep.subr.mxu0 0.0
        %958 = vmatpush1.msra.mxu0 %v952
        %959 = vmatprep.subr.mxu0 0.0
        %960 = vmatpush1.msra.mxu0 0.0
        %961 = vmatprep.subr.mxu0 0.0
        %962 = vmatpush1.msra.mxu0 0.0
        %963 = vmatprep.subr.mxu0 0.0
        %964 = vmatpush1.msra.mxu0 0.0
        %965 = vmatprep.subr.mxu0 0.0
        %966 = vmatpush1.msra.mxu0 0.0
        %967 = vmatprep.subr.mxu0 0.0
        %968 = vmatpush1.msra.mxu0 0.0
        %969 = vmatprep.subr.mxu0 0.0
        %970 = vmatpush1.msra.mxu0 0.0
        %971 = vmatprep.subr.mxu0 0.0
        %972 = vmatpush1.msra.mxu0 0.0
        %973 = vmatprep.subr.mxu0 0.0
        %974 = vmatpush1.msra.mxu0 0.0
        %975 = vmatprep.subr.mxu0 0.0
        %976 = vmatpush1.msra.mxu0 0.0
        %977 = vmatprep.subr.mxu0 0.0
        %978 = vmatpush1.msra.mxu0 0.0
        %979 = vmatprep.subr.mxu0 0.0
        %980 = vmatpush1.msra.mxu0 0.0
        %981 = vmatprep.subr.mxu0 0.0
        %982 = vmatpush1.msra.mxu0 0.0
        %983 = vmatprep.subr.mxu0 0.0
        %984 = vmatpush1.msra.mxu0 0.0
        %985 = vmatprep.subr.mxu0 0.0
        %986 = vmatpush1.msra.mxu0 0.0
        %987 = vmatprep.subr.mxu0 0.0
        %988 = vmatpush1.msra.mxu0 0.0
        %989 = vmatprep.subr.mxu0 0.0
        %990 = vmatpush1.msra.mxu0 0.0
        %991 = vmatprep.subr.mxu0 0.0
        %992 = vmatpush1.msra.mxu0 0.0
        %993 = vmatprep.subr.mxu0 0.0
        %994 = vmatpush1.msra.mxu0 0.0
        %995 = vmatprep.subr.mxu0 0.0
        %996 = vmatpush1.msra.mxu0 0.0
        %997 = vmatprep.subr.mxu0 0.0
        %998 = vmatpush1.msra.mxu0 0.0
        %999 = vmatprep.subr.mxu0 0.0
        %1000 = vmatpush1.msra.mxu0 0.0
        %1001 = vmatprep.subr.mxu0 0.0
        %1002 = vmatpush1.msra.mxu0 0.0
        %1003 = vmatprep.subr.mxu0 0.0
        %1004 = vmatpush1.msra.mxu0 0.0
        %1005 = vmatprep.subr.mxu0 0.0
        %1006 = vmatpush1.msra.mxu0 0.0
        %1007 = vmatprep.subr.mxu0 0.0
        %1008 = vmatpush1.msra.mxu0 0.0
        %1009 = vmatprep.subr.mxu0 0.0
        %1010 = vmatpush1.msra.mxu0 0.0
        %1011 = vmatprep.subr.mxu0 0.0
        %1012 = vmatpush1.msra.mxu0 0.0
        %1013 = vmatprep.subr.mxu0 0.0
        %1014 = vmatpush1.msra.mxu0 0.0
        %1015 = vmatprep.subr.mxu0 0.0
        %1016 = vmatpush1.msra.mxu0 0.0
        %1017 = vmatprep.subr.mxu0 0.0
        %1018 = vmatpush1.msra.mxu0 0.0
        %1019 = vmatprep.subr.mxu0 0.0
        %1020 = vmatpush1.msra.mxu0 0.0
        %1021 = vmatprep.mubr.f32.mxu0 0.0
        %1022 = vmatmul.mubr.f32.gmra.mrb[0].mxu0 %v955
        %v1023 = vpop.f32.mrb[0].mxu0
        %v1024 = vadd.f32 0.0, %v1023
        %v1025 = vpop.f32.mrb[0].mxu0
        %1026 = vdwg.mxu0
        %1027 = vrot.lane.b32.xlu0 %v449, 64
        %v1028 = vpop.permute.xlu0 %1027
        %v1031 = vsel %vm452, %v798, 0
        %1033 = vmatprep.subr.mxu0 0.0
        %1034 = vmatpush1.msra.mxu0 %v1028
        %1035 = vmatprep.subr.mxu0 0.0
        %1036 = vmatpush1.msra.mxu0 0.0
        %1037 = vmatprep.subr.mxu0 0.0
        %1038 = vmatpush1.msra.mxu0 0.0
        %1039 = vmatprep.subr.mxu0 0.0
        %1040 = vmatpush1.msra.mxu0 0.0
        %1041 = vmatprep.subr.mxu0 0.0
        %1042 = vmatpush1.msra.mxu0 0.0
        %1043 = vmatprep.subr.mxu0 0.0
        %1044 = vmatpush1.msra.mxu0 0.0
        %1045 = vmatprep.subr.mxu0 0.0
        %1046 = vmatpush1.msra.mxu0 0.0
        %1047 = vmatprep.subr.mxu0 0.0
        %1048 = vmatpush1.msra.mxu0 0.0
        %1049 = vmatprep.subr.mxu0 0.0
        %1050 = vmatpush1.msra.mxu0 0.0
        %1051 = vmatprep.subr.mxu0 0.0
        %1052 = vmatpush1.msra.mxu0 0.0
        %1053 = vmatprep.subr.mxu0 0.0
        %1054 = vmatpush1.msra.mxu0 0.0
        %1055 = vmatprep.subr.mxu0 0.0
        %1056 = vmatpush1.msra.mxu0 0.0
        %1057 = vmatprep.subr.mxu0 0.0
        %1058 = vmatpush1.msra.mxu0 0.0
        %1059 = vmatprep.subr.mxu0 0.0
        %1060 = vmatpush1.msra.mxu0 0.0
        %1061 = vmatprep.subr.mxu0 0.0
        %1062 = vmatpush1.msra.mxu0 0.0
        %1063 = vmatprep.subr.mxu0 0.0
        %1064 = vmatpush1.msra.mxu0 0.0
        %1065 = vmatprep.subr.mxu0 0.0
        %1066 = vmatpush1.msra.mxu0 0.0
        %1067 = vmatprep.subr.mxu0 0.0
        %1068 = vmatpush1.msra.mxu0 0.0
        %1069 = vmatprep.subr.mxu0 0.0
        %1070 = vmatpush1.msra.mxu0 0.0
        %1071 = vmatprep.subr.mxu0 0.0
        %1072 = vmatpush1.msra.mxu0 0.0
        %1073 = vmatprep.subr.mxu0 0.0
        %1074 = vmatpush1.msra.mxu0 0.0
        %1075 = vmatprep.subr.mxu0 0.0
        %1076 = vmatpush1.msra.mxu0 0.0
        %1077 = vmatprep.subr.mxu0 0.0
        %1078 = vmatpush1.msra.mxu0 0.0
        %1079 = vmatprep.subr.mxu0 0.0
        %1080 = vmatpush1.msra.mxu0 0.0
        %1081 = vmatprep.subr.mxu0 0.0
        %1082 = vmatpush1.msra.mxu0 0.0
        %1083 = vmatprep.subr.mxu0 0.0
        %1084 = vmatpush1.msra.mxu0 0.0
        %1085 = vmatprep.subr.mxu0 0.0
        %1086 = vmatpush1.msra.mxu0 0.0
        %1087 = vmatprep.subr.mxu0 0.0
        %1088 = vmatpush1.msra.mxu0 0.0
        %1089 = vmatprep.subr.mxu0 0.0
        %1090 = vmatpush1.msra.mxu0 0.0
        %1091 = vmatprep.subr.mxu0 0.0
        %1092 = vmatpush1.msra.mxu0 0.0
        %1093 = vmatprep.subr.mxu0 0.0
        %1094 = vmatpush1.msra.mxu0 0.0
        %1095 = vmatprep.subr.mxu0 0.0
        %1096 = vmatpush1.msra.mxu0 0.0
        %1097 = vmatprep.mubr.f32.mxu0 0.0
        %1098 = vmatmul.mubr.f32.gmra.mrb[0].mxu0 %v1031
        %v1099 = vpop.f32.mrb[0].mxu0
        %v1100 = vadd.f32 0.0, %v1099
        %v1101 = vpop.f32.mrb[0].mxu0
        %1102 = vdwg.mxu0
        %1104 = vrot.lane.b32.xlu0 %v948, 8
        %v1105 = vpop.permute.xlu0 %1104
        %1108 = vrot.lane.b32.xlu0 %v1024, 16
        %v1109 = vpop.permute.xlu0 %1108
        %1112 = vrot.lane.b32.xlu0 %v1100, 24
        %v1113 = vpop.permute.xlu0 %1112
        %v1115 = vsel %vm452, %v872, %v1105
        %vm1116 = vcmask 130048
        %v1117 = vsel %vm1116, %v1115, %v1109
        %vm1118 = vcmask 195584
        %v1119 = vsel %vm1118, %v1117, %v1113
        %v1120 = vld [vmem:[#allocation7] sm:$0xff]
        %v1121 = vld [vmem:[#allocation7 + $0x8] sm:$0xff]
        %v1122 = vld [vmem:[#allocation7 + $0x10] sm:$0xff]
        %v1123 = vld [vmem:[#allocation7 + $0x18] sm:$0xff]
        %v1124 = vlaneseq
        %v1125 = vshrl.u32 %v1124, 7
        %v1126 = vsub.s32 3, %v1125
        %v1127 = vrot.slane %v326, %v1126
        %v1129 = vsel %vm332, %v1119, 0
        %1131 = vmatprep.subr.mxu0 0.0
        %1132 = vmatpush1.msra.mxu0 %v1120
        %1133 = vmatprep.subr.mxu0 0.0
        %1134 = vmatpush1.msra.mxu0 %v1121
        %1135 = vmatprep.subr.mxu0 0.0
        %1136 = vmatpush1.msra.mxu0 %v1122
        %1137 = vmatprep.subr.mxu0 0.0
        %1138 = vmatpush1.msra.mxu0 %v1123
        %1139 = vmatprep.subr.mxu0 0.0
        %1140 = vmatpush1.msra.mxu0 0.0
        %1141 = vmatprep.subr.mxu0 0.0
        %1142 = vmatpush1.msra.mxu0 0.0
        %1143 = vmatprep.subr.mxu0 0.0
        %1144 = vmatpush1.msra.mxu0 0.0
        %1145 = vmatprep.subr.mxu0 0.0
        %1146 = vmatpush1.msra.mxu0 0.0
        %1147 = vmatprep.subr.mxu0 0.0
        %1148 = vmatpush1.msra.mxu0 0.0
        %1149 = vmatprep.subr.mxu0 0.0
        %1150 = vmatpush1.msra.mxu0 0.0
        %1151 = vmatprep.subr.mxu0 0.0
        %1152 = vmatpush1.msra.mxu0 0.0
        %1153 = vmatprep.subr.mxu0 0.0
        %1154 = vmatpush1.msra.mxu0 0.0
        %1155 = vmatprep.subr.mxu0 0.0
        %1156 = vmatpush1.msra.mxu0 0.0
        %1157 = vmatprep.subr.mxu0 0.0
        %1158 = vmatpush1.msra.mxu0 0.0
        %1159 = vmatprep.subr.mxu0 0.0
        %1160 = vmatpush1.msra.mxu0 0.0
        %1161 = vmatprep.subr.mxu0 0.0
        %1162 = vmatpush1.msra.mxu0 0.0
        %1163 = vmatprep.subr.mxu0 0.0
        %1164 = vmatpush1.msra.mxu0 0.0
        %1165 = vmatprep.subr.mxu0 0.0
        %1166 = vmatpush1.msra.mxu0 0.0
        %1167 = vmatprep.subr.mxu0 0.0
        %1168 = vmatpush1.msra.mxu0 0.0
        %1169 = vmatprep.subr.mxu0 0.0
        %1170 = vmatpush1.msra.mxu0 0.0
        %1171 = vmatprep.subr.mxu0 0.0
        %1172 = vmatpush1.msra.mxu0 0.0
        %1173 = vmatprep.subr.mxu0 0.0
        %1174 = vmatpush1.msra.mxu0 0.0
        %1175 = vmatprep.subr.mxu0 0.0
        %1176 = vmatpush1.msra.mxu0 0.0
        %1177 = vmatprep.subr.mxu0 0.0
        %1178 = vmatpush1.msra.mxu0 0.0
        %1179 = vmatprep.subr.mxu0 0.0
        %1180 = vmatpush1.msra.mxu0 0.0
        %1181 = vmatprep.subr.mxu0 0.0
        %1182 = vmatpush1.msra.mxu0 0.0
        %1183 = vmatprep.subr.mxu0 0.0
        %1184 = vmatpush1.msra.mxu0 0.0
        %1185 = vmatprep.subr.mxu0 0.0
        %1186 = vmatpush1.msra.mxu0 0.0
        %1187 = vmatprep.subr.mxu0 0.0
        %1188 = vmatpush1.msra.mxu0 0.0
        %1189 = vmatprep.subr.mxu0 0.0
        %1190 = vmatpush1.msra.mxu0 0.0
        %1191 = vmatprep.subr.mxu0 0.0
        %1192 = vmatpush1.msra.mxu0 0.0
        %1193 = vmatprep.subr.mxu0 0.0
        %1194 = vmatpush1.msra.mxu0 0.0
        %1195 = vmatprep.mubr.f32.mxu0 0.0
        %1196 = vmatmul.mubr.f32.gmra.mrb[0].mxu0 %v1129
        %v1197 = vpop.f32.mrb[0].mxu0
        %v1198 = vadd.f32 %v1127, %v1197
        %v1199 = vpop.f32.mrb[0].mxu0
        %1200 = vdwg.mxu0
        %v1201 = vadd.f32 %v325, %v1198
        %v1202 = vsel %vm332, %v1201, 0.0
        %1203 = vadd.xlane.f32.xlu0 %v1202
        %v1204 = vpop.xlane.xlu0 %1203
        %v1205 = vrcp.pop 32.0
        %v1206 = vmul.f32 %v1204, %v1205
        %v1207 = vsub.f32 %v1201, %v1206
        %v1208 = vmul.f32 %v1207, %v1207
        %v1209 = vsel %vm332, %v1208, 0.0
        %1210 = vadd.xlane.f32.xlu0 %v1209
        %v1211 = vpop.xlane.xlu0 %1210
        %v1212 = vmul.f32 %v1211, %v1205
        %v1213 = vadd.f32 %v1212, 1e-05
        %v1214 = vrsqrt.pop %v1213
        %v1215 = vmul.f32 %v1207, %v1214
        %v1216 = vlaneseq
        %v1217 = vshrl.u32 %v1216, 7
        %v1218 = vsub.s32 6, %v1217
        %v1219 = vrot.slane %v326, %v1218
        %v1220 = vmul.f32 %v1215, %v1219
        %v1221 = vlaneseq
        %v1222 = vshrl.u32 %v1221, 7
        %v1223 = vsub.s32 7, %v1222
        %v1224 = vrot.slane %v326, %v1223
        %v1225 = vadd.f32 %v1220, %v1224
        %v1226 = vld [vmem:[#allocation8] sm:$0xff]
        %v1227 = vld [vmem:[#allocation8 + $0x8] sm:$0xff]
        %v1228 = vld [vmem:[#allocation8 + $0x10] sm:$0xff]
        %v1229 = vld [vmem:[#allocation8 + $0x18] sm:$0xff]
        %v1230 = vlaneseq
        %v1231 = vshrl.u32 %v1230, 7
        %v1232 = vsub.s32 4, %v1231
        %v1233 = vrot.slane %v326, %v1232
        %v1235 = vsel %vm332, %v1225, 0
        %1237 = vmatprep.subr.mxu0 0.0
        %1238 = vmatpush1.msra.mxu0 %v1226
        %1239 = vmatprep.subr.mxu0 0.0
        %1240 = vmatpush1.msra.mxu0 %v1227
        %1241 = vmatprep.subr.mxu0 0.0
        %1242 = vmatpush1.msra.mxu0 %v1228
        %1243 = vmatprep.subr.mxu0 0.0
        %1244 = vmatpush1.msra.mxu0 %v1229
        %1245 = vmatprep.subr.mxu0 0.0
        %1246 = vmatpush1.msra.mxu0 0.0
        %1247 = vmatprep.subr.mxu0 0.0
        %1248 = vmatpush1.msra.mxu0 0.0
        %1249 = vmatprep.subr.mxu0 0.0
        %1250 = vmatpush1.msra.mxu0 0.0
        %1251 = vmatprep.subr.mxu0 0.0
        %1252 = vmatpush1.msra.mxu0 0.0
        %1253 = vmatprep.subr.mxu0 0.0
        %1254 = vmatpush1.msra.mxu0 0.0
        %1255 = vmatprep.subr.mxu0 0.0
        %1256 = vmatpush1.msra.mxu0 0.0
        %1257 = vmatprep.subr.mxu0 0.0
        %1258 = vmatpush1.msra.mxu0 0.0
        %1259 = vmatprep.subr.mxu0 0.0
        %1260 = vmatpush1.msra.mxu0 0.0
        %1261 = vmatprep.subr.mxu0 0.0
        %1262 = vmatpush1.msra.mxu0 0.0
        %1263 = vmatprep.subr.mxu0 0.0
        %1264 = vmatpush1.msra.mxu0 0.0
        %1265 = vmatprep.subr.mxu0 0.0
        %1266 = vmatpush1.msra.mxu0 0.0
        %1267 = vmatprep.subr.mxu0 0.0
        %1268 = vmatpush1.msra.mxu0 0.0
        %1269 = vmatprep.subr.mxu0 0.0
        %1270 = vmatpush1.msra.mxu0 0.0
        %1271 = vmatprep.subr.mxu0 0.0
        %1272 = vmatpush1.msra.mxu0 0.0
        %1273 = vmatprep.subr.mxu0 0.0
        %1274 = vmatpush1.msra.mxu0 0.0
        %1275 = vmatprep.subr.mxu0 0.0
        %1276 = vmatpush1.msra.mxu0 0.0
        %1277 = vmatprep.subr.mxu0 0.0
        %1278 = vmatpush1.msra.mxu0 0.0
        %1279 = vmatprep.subr.mxu0 0.0
        %1280 = vmatpush1.msra.mxu0 0.0
        %1281 = vmatprep.subr.mxu0 0.0
        %1282 = vmatpush1.msra.mxu0 0.0
        %1283 = vmatprep.subr.mxu0 0.0
        %1284 = vmatpush1.msra.mxu0 0.0
        %1285 = vmatprep.subr.mxu0 0.0
        %1286 = vmatpush1.msra.mxu0 0.0
        %1287 = vmatprep.subr.mxu0 0.0
        %1288 = vmatpush1.msra.mxu0 0.0
        %1289 = vmatprep.subr.mxu0 0.0
        %1290 = vmatpush1.msra.mxu0 0.0
        %1291 = vmatprep.subr.mxu0 0.0
        %1292 = vmatpush1.msra.mxu0 0.0
        %1293 = vmatprep.subr.mxu0 0.0
        %1294 = vmatpush1.msra.mxu0 0.0
        %1295 = vmatprep.subr.mxu0 0.0
        %1296 = vmatpush1.msra.mxu0 0.0
        %1297 = vmatprep.subr.mxu0 0.0
        %1298 = vmatpush1.msra.mxu0 0.0
        %1299 = vmatprep.subr.mxu0 0.0
        %1300 = vmatpush1.msra.mxu0 0.0
        %1301 = vmatprep.mubr.f32.mxu0 0.0
        %1302 = vmatmul.mubr.f32.gmra.mrb[0].mxu0 %v1235
        %v1303 = vpop.f32.mrb[0].mxu0
        %v1304 = vadd.f32 %v1233, %v1303
        %v1305 = vpop.f32.mrb[0].mxu0
        %1306 = vdwg.mxu0
        %v1307 = vmax.f32 %v1304, 0.0
        %v1308 = vld [vmem:[#allocation10] sm:$0xff]
        %v1309 = vld [vmem:[#allocation10 + $0x8] sm:$0xff]
        %v1310 = vld [vmem:[#allocation10 + $0x10] sm:$0xff]
        %v1311 = vld [vmem:[#allocation10 + $0x18] sm:$0xff]
        %v1312 = vlaneseq
        %v1313 = vshrl.u32 %v1312, 7
        %v1314 = vsub.s32 5, %v1313
        %v1315 = vrot.slane %v326, %v1314
        %v1317 = vsel %vm332, %v1307, 0
        %1319 = vmatprep.subr.mxu0 0.0
        %1320 = vmatpush1.msra.mxu0 %v1308
        %1321 = vmatprep.subr.mxu0 0.0
        %1322 = vmatpush1.msra.mxu0 %v1309
        %1323 = vmatprep.subr.mxu0 0.0
        %1324 = vmatpush1.msra.mxu0 %v1310
        %1325 = vmatprep.subr.mxu0 0.0
        %1326 = vmatpush1.msra.mxu0 %v1311
        %1327 = vmatprep.subr.mxu0 0.0
        %1328 = vmatpush1.msra.mxu0 0.0
        %1329 = vmatprep.subr.mxu0 0.0
        %1330 = vmatpush1.msra.mxu0 0.0
        %1331 = vmatprep.subr.mxu0 0.0
        %1332 = vmatpush1.msra.mxu0 0.0
        %1333 = vmatprep.subr.mxu0 0.0
        %1334 = vmatpush1.msra.mxu0 0.0
        %1335 = vmatprep.subr.mxu0 0.0
        %1336 = vmatpush1.msra.mxu0 0.0
        %1337 = vmatprep.subr.mxu0 0.0
        %1338 = vmatpush1.msra.mxu0 0.0
        %1339 = vmatprep.subr.mxu0 0.0
        %1340 = vmatpush1.msra.mxu0 0.0
        %1341 = vmatprep.subr.mxu0 0.0
        %1342 = vmatpush1.msra.mxu0 0.0
        %1343 = vmatprep.subr.mxu0 0.0
        %1344 = vmatpush1.msra.mxu0 0.0
        %1345 = vmatprep.subr.mxu0 0.0
        %1346 = vmatpush1.msra.mxu0 0.0
        %1347 = vmatprep.subr.mxu0 0.0
        %1348 = vmatpush1.msra.mxu0 0.0
        %1349 = vmatprep.subr.mxu0 0.0
        %1350 = vmatpush1.msra.mxu0 0.0
        %1351 = vmatprep.subr.mxu0 0.0
        %1352 = vmatpush1.msra.mxu0 0.0
        %1353 = vmatprep.subr.mxu0 0.0
        %1354 = vmatpush1.msra.mxu0 0.0
        %1355 = vmatprep.subr.mxu0 0.0
        %1356 = vmatpush1.msra.mxu0 0.0
        %1357 = vmatprep.subr.mxu0 0.0
        %1358 = vmatpush1.msra.mxu0 0.0
        %1359 = vmatprep.subr.mxu0 0.0
        %1360 = vmatpush1.msra.mxu0 0.0
        %1361 = vmatprep.subr.mxu0 0.0
        %1362 = vmatpush1.msra.mxu0 0.0
        %1363 = vmatprep.subr.mxu0 0.0
        %1364 = vmatpush1.msra.mxu0 0.0
        %1365 = vmatprep.subr.mxu0 0.0
        %1366 = vmatpush1.msra.mxu0 0.0
        %1367 = vmatprep.subr.mxu0 0.0
        %1368 = vmatpush1.msra.mxu0 0.0
        %1369 = vmatprep.subr.mxu0 0.0
        %1370 = vmatpush1.msra.mxu0 0.0
        %1371 = vmatprep.subr.mxu0 0.0
        %1372 = vmatpush1.msra.mxu0 0.0
        %1373 = vmatprep.subr.mxu0 0.0
        %1374 = vmatpush1.msra.mxu0 0.0
        %1375 = vmatprep.subr.mxu0 0.0
        %1376 = vmatpush1.msra.mxu0 0.0
        %1377 = vmatprep.subr.mxu0 0.0
        %1378 = vmatpush1.msra.mxu0 0.0
        %1379 = vmatprep.subr.mxu0 0.0
        %1380 = vmatpush1.msra.mxu0 0.0
        %1381 = vmatprep.subr.mxu0 0.0
        %1382 = vmatpush1.msra.mxu0 0.0
        %1383 = vmatprep.mubr.f32.mxu0 0.0
        %1384 = vmatmul.mubr.f32.gmra.mrb[0].mxu0 %v1317
        %v1385 = vpop.f32.mrb[0].mxu0
        %v1386 = vadd.f32 %v1315, %v1385
        %v1387 = vpop.f32.mrb[0].mxu0
        %1388 = vdwg.mxu0
        %v1389 = vadd.f32 %v1225, %v1386
        %v1390 = vsel %vm332, %v1389, 0.0
        %1391 = vadd.xlane.f32.xlu0 %v1390
        %v1392 = vpop.xlane.xlu0 %1391
        %v1393 = vmul.f32 %v1392, %v1205
        %v1394 = vsub.f32 %v1389, %v1393
        %v1395 = vmul.f32 %v1394, %v1394
        %v1396 = vsel %vm332, %v1395, 0.0
        %1397 = vadd.xlane.f32.xlu0 %v1396
        %v1398 = vpop.xlane.xlu0 %1397
        %v1399 = vmul.f32 %v1398, %v1205
        %v1400 = vadd.f32 %v1399, 1e-05
        %v1401 = vrsqrt.pop %v1400
        %v1402 = vmul.f32 %v1394, %v1401
        %v1403 = vlaneseq
        %v1404 = vshrl.u32 %v1403, 7
        %v1405 = vsub.s32 0, %v1404
        %v1406 = vrot.slane %v327, %v1405
        %v1407 = vmul.f32 %v1402, %v1406
        %v1408 = vlaneseq
        %v1409 = vshrl.u32 %v1408, 7
        %v1410 = vsub.s32 1, %v1409
        %v1411 = vrot.slane %v327, %v1410
        %v1412 = vadd.f32 %v1407, %v1411
        %1413 = vst.msk [vmem:[%s324] sm:$0xff] %vm332, %v1412
        %s1414 = sand.u32 %s164, 1
        %s1415 = scalar_lea.sflag [#allocation4], %s1414
        %s1416 = sand.u32 %s164, 1
        %s1417 = smul.addr %s1416, 8
        %s1418 = scalar_lea.vmem [#allocation11], %s1417
        // Predicated region
        $region65: #{tpu_custom_call.1} parent=43 // pred_check
          %p1419 = pneg %p174
        $region66: #{tpu_custom_call.1} parent=43 // pred_check_branch
          %1421 = sbr.rel (%p1419) target = $region68
        $region67: #{tpu_custom_call.1} parent=43 // pred_region
          %s1423 = ssub.s32 128, 128
          %1424 = vsyncadd %s1415, %s1423
          %s1425 = smul.addr %s25, 128
          %s1426 = scalar_lea.hbm %s6, %s1425
          %s1428 = sshll.u32 %s1418, 4
          %s1429 = int_to_ptr.vmem [resolvable:$true] %s1428
          %1431 = dma.vmem_to_hbm [thread:$0]  %s1429, 128, %s1426, %s1415
        $region68: #{tpu_custom_call.1} parent=43 // pred_fallthru
          _
      $region44: #{tpu_custom_call.1} parent=5 // pred_fallthru
        _
      %p1432 = scmp.le.s32.totalorder 2, %s20
      // Predicated region
      $region69: #{tpu_custom_call.1} parent=5 // pred_check
        %p1433 = pneg %p1432
      $region70: #{tpu_custom_call.1} parent=5 // pred_check_branch
        %1435 = sbr.rel (%p1433) target = $region72
      $region71: #{tpu_custom_call.1} parent=5 // pred_region
        %s1436 = ssub.s32 %s20, 2
        // Predicated region
        $region73: #{tpu_custom_call.1} parent=71 // pred_check
          %p1437 = pneg %p180
        $region74: #{tpu_custom_call.1} parent=71 // pred_check_branch
          %1439 = sbr.rel (%p1437) target = $region76
        $region75: #{tpu_custom_call.1} parent=71 // pred_region
          %s1440 = sand.u32 %s165, 1
          %s1441 = scalar_lea.sflag [#allocation4], %s1440
          %s1442 = sand.u32 %s165, 1
          %s1443 = smul.addr %s1442, 8
          %s1444 = scalar_lea.vmem [#allocation11], %s1443
          %1445 = dma.done %s1441, 128
        $region76: #{tpu_custom_call.1} parent=71 // pred_fallthru
          _
      $region72: #{tpu_custom_call.1} parent=5 // pred_fallthru
        _
    $region6: #{tpu_custom_call.1} parent=1 // loop_footer
      %s24 = sadd.s32 1, %s20
    $region7: #{tpu_custom_call.1} parent=1 // loop_footer_branch
      %19 = sbr.rel target = $region3
    $region8: #{tpu_custom_call.1} parent=1 // loop_exit
      _
    %1446 = vsyncpa [#allocation3], 1
    %s1447 = scalar_lea.sflag [#allocation3], 1
    %1448 = vsyncpa %s1447, 1
    %1449 = vsyncpa [#allocation6], 1
    %1450 = vsyncpa [#allocation9], 1
    %1451 = vsyncpa [#allocation4], 1
    %s1452 = scalar_lea.sflag [#allocation4], 1
    %1453 = vsyncpa %s1452, 1

// kernel: tpu_custom_call.1
$region0: #{tpu_custom_call.1}
  #allocation0 [shape = 'u32[]', space=smem, size = 0x4, offset = 0x4, fixed_abs, tag = 'smem constant byte address 0x4 - core index']
  #allocation1 [shape = 'u32[144,128]{1,0:T(1,128)}', space=vmem, size = 0x12000, scoped, tag = 'internal scratch']
  %s0 = inlined_call_operand.hbm [shape: f32[16,32], index: 0, kind: input, shape index: {}]
  %s1 = inlined_call_operand.hbm [shape: f32[32,96], index: 1, kind: input, shape index: {}]
  %s2 = inlined_call_operand.hbm [shape: f32[32,32], index: 2, kind: input, shape index: {}]
  %s3 = inlined_call_operand.hbm [shape: f32[32,32], index: 3, kind: input, shape index: {}]
  %s4 = inlined_call_operand.hbm [shape: f32[32,32], index: 4, kind: input, shape index: {}]
  %s5 = inlined_call_operand.vmem [shape: f32[10,32], index: 5, kind: input, shape index: {}]
  %s6 = inlined_call_operand.hbm [shape: f32[16,32], index: 6, kind: output, shape index: {}]
  %s7 = sld [smem:[#allocation0]]
  $region77: #{tpu_custom_call.1} parent=0
    _
  %s9 = ssub.s32 1, %s7
  %s10 = scalar_select 0, %s9, %s7
  $region1: #{tpu_custom_call.1} parent=0
    #allocation2 [shape = 'u8[8192]{0}', space=vmem, size = 0x2000, scoped, tag = 'input window, operand 0']
    #allocation3 [shape = 's32[2]{0}', space=sflag, size = 0x8, scoped, tag = 'scoped memory for tpu_custom_call.1']
    #allocation4 [shape = 's32[2]{0}', space=sflag, size = 0x8, scoped, tag = 'scoped memory for tpu_custom_call.1']
    #allocation5 [shape = 'u8[16384]{0}', space=vmem, size = 0x4000, scoped, tag = 'input window, operand 1, single buffered']
    #allocation6 [shape = 's32[1]{0}', space=sflag, size = 0x4, scoped, tag = 'scoped memory for tpu_custom_call.1']
    #allocation7 [shape = 'u8[16384]{0}', space=vmem, size = 0x4000, scoped, tag = 'input window, operand 2, single buffered']
    #allocation8 [shape = 'u8[16384]{0}', space=vmem, size = 0x4000, scoped, tag = 'input window, operand 3, single buffered']
    #allocation9 [shape = 's32[1]{0}', space=sflag, size = 0x4, scoped, tag = 'scoped memory for tpu_custom_call.1']
    #allocation10 [shape = 'u8[16384]{0}', space=vmem, size = 0x4000, scoped, tag = 'input window, operand 4, single buffered']
    #allocation11 [shape = 'u8[8192]{0}', space=vmem, size = 0x2000, scoped, tag = 'output window, operand 0']
    %11 = vsyncpa [#allocation3], 0
    %s12 = scalar_lea.sflag [#allocation3], 1
    %13 = vsyncpa %s12, 0
    %14 = vsyncpa [#allocation6], 0
    %15 = vsyncpa [#allocation9], 0
    %16 = vsyncpa [#allocation4], 0
    %s17 = scalar_lea.sflag [#allocation4], 1
    %18 = vsyncpa %s17, 0
    loop: start=0, step=1, limit=4
    $region2: #{tpu_custom_call.1} parent=1 // loop_pre_header
      _
    $region3: #{tpu_custom_call.1} parent=1 // loop_header
      %s20 = sphi 0, %s24
      %p21 = scmp.ge.s32.totalorder %s20, 4
      %s30 = sphi 0, %s32
      %s33 = sphi 0, %s30
      %s34 = sphi 0, %s33
      %s50 = sphi 0, %s34
      %s54 = sphi 0, %s54
      %s56 = sphi 0, %s54
      %s57 = sphi 0, %s56
      %s71 = sphi 0, %s57
      %s75 = sphi 0, %s75
      %s77 = sphi 0, %s75
      %s78 = sphi 0, %s77
      %s92 = sphi 0, %s78
      %s96 = sphi 0, %s96
      %s98 = sphi 0, %s96
      %s99 = sphi 0, %s98
      %s113 = sphi 0, %s99
      %s117 = sphi 0, %s117
      %s119 = sphi 0, %s117
      %s120 = sphi 0, %s119
      %s134 = sphi 0, %s120
      %s138 = sphi 0, %s138
      %s140 = sphi 0, %s138
      %s141 = sphi 0, %s140
      %s155 = sphi 0, %s141
      %s161 = sphi 0, %s163
      %s164 = sphi 0, %s161
      %s165 = sphi 0, %s164
      %s181 = sphi 0, %s165
    $region4: #{tpu_custom_call.1} parent=1 // loop_header_branch
      %23 = sbr.rel (%p21) target = $region8
    $region5: #{tpu_custom_call.1} parent=1 // loop_body
      %s25 = ssub.s32 %s20, 1
      %s26 = ssub.s32 %s20, 2
      %s27 = sadd.s32 %s20, 1
      %s28 = ssub.s32 %s20, %s27
      %p29 = scmp.eq.s32.totalorder %s28, 0
      %s31 = sadd.s32 %s30, 1
      %s32 = scalar_select %p29, %s30, %s31
      %p35 = pneg %p29
      %p36 = scmp.eq.s32.totalorder %s20, 1
      %p37 = por %p35, %p36
      %p38 = scmp.ne.s32.totalorder %s30, %s33
      %p39 = scmp.eq.s32.totalorder %s20, 0
      %p40 = por %p38, %p39
      %p41 = scmp.ne.s32.totalorder %s30, %s33
      %p42 = scmp.eq.s32.totalorder %s25, 1
      %p43 = por %p41, %p42
      %p44 = scmp.ne.s32.totalorder %s33, %s34
      %p45 = scmp.eq.s32.totalorder %s25, 0
      %p46 = por %p44, %p45
      %p47 = scmp.ne.s32.totalorder %s33, %s34
      %p48 = scmp.eq.s32.totalorder %s26, 1
      %p49 = por %p47, %p48
      %p51 = scmp.ne.s32.totalorder %s34, %s50
      %p52 = scmp.eq.s32.totalorder %s26, 0
      %p53 = por %p51, %p52
      %s55 = sadd.s32 %s54, 1
      %p58 = scmp.eq.s32.totalorder %s20, 1
      %p59 = scmp.ne.s32.totalorder %s54, %s56
      %p60 = scmp.eq.s32.totalorder %s20, 0
      %p61 = por %p59, %p60
      %p62 = scmp.ne.s32.totalorder %s54, %s56
      %p63 = scmp.eq.s32.totalorder %s25, 1
      %p64 = por %p62, %p63
      %p65 = scmp.ne.s32.totalorder %s56, %s57
      %p66 = scmp.eq.s32.totalorder %s25, 0
      %p67 = por %p65, %p66
      %p68 = scmp.ne.s32.totalorder %s56, %s57
      %p69 = scmp.eq.s32.totalorder %s26, 1
      %p70 = por %p68, %p69
      %p72 = scmp.ne.s32.totalorder %s57, %s71
      %p73 = scmp.eq.s32.totalorder %s26, 0
      %p74 = por %p72, %p73
      %s76 = sadd.s32 %s75, 1
      %p79 = scmp.eq.s32.totalorder %s20, 1
      %p80 = scmp.ne.s32.totalorder %s75, %s77
      %p81 = scmp.eq.s32.totalorder %s20, 0
      %p82 = por %p80, %p81
      %p83 = scmp.ne.s32.totalorder %s75, %s77
      %p84 = scmp.eq.s32.totalorder %s25, 1
      %p85 = por %p83, %p84
      %p86 = scmp.ne.s32.totalorder %s77, %s78
      %p87 = scmp.eq.s32.totalorder %s25, 0
      %p88 = por %p86, %p87
      %p89 = scmp.ne.s32.totalorder %s77, %s78
      %p90 = scmp.eq.s32.totalorder %s26, 1
      %p91 = por %p89, %p90
      %p93 = scmp.ne.s32.totalorder %s78, %s92
      %p94 = scmp.eq.s32.totalorder %s26, 0
      %p95 = por %p93, %p94
      %s97 = sadd.s32 %s96, 1
      %p100 = scmp.eq.s32.totalorder %s20, 1
      %p101 = scmp.ne.s32.totalorder %s96, %s98
      %p102 = scmp.eq.s32.totalorder %s20, 0
      %p103 = por %p101, %p102
      %p104 = scmp.ne.s32.totalorder %s96, %s98
      %p105 = scmp.eq.s32.totalorder %s25, 1
      %p106 = por %p104, %p105
      %p107 = scmp.ne.s32.totalorder %s98, %s99
      %p108 = scmp.eq.s32.totalorder %s25, 0
      %p109 = por %p107, %p108
      %p110 = scmp.ne.s32.totalorder %s98, %s99
      %p111 = scmp.eq.s32.totalorder %s26, 1
      %p112 = por %p110, %p111
      %p114 = scmp.ne.s32.totalorder %s99, %s113
      %p115 = scmp.eq.s32.totalorder %s26, 0
      %p116 = por %p114, %p115
      %s118 = sadd.s32 %s117, 1
      %p121 = scmp.eq.s32.totalorder %s20, 1
      %p122 = scmp.ne.s32.totalorder %s117, %s119
      %p123 = scmp.eq.s32.totalorder %s20, 0
      %p124 = por %p122, %p123
      %p125 = scmp.ne.s32.totalorder %s117, %s119
      %p126 = scmp.eq.s32.totalorder %s25, 1
      %p127 = por %p125, %p126
      %p128 = scmp.ne.s32.totalorder %s119, %s120
      %p129 = scmp.eq.s32.totalorder %s25, 0
      %p130 = por %p128, %p129
      %p131 = scmp.ne.s32.totalorder %s119, %s120
      %p132 = scmp.eq.s32.totalorder %s26, 1
      %p133 = por %p131, %p132
      %p135 = scmp.ne.s32.totalorder %s120, %s134
      %p136 = scmp.eq.s32.totalorder %s26, 0
      %p137 = por %p135, %p136
      %s139 = sadd.s32 %s138, 1
      %p142 = scmp.eq.s32.totalorder %s20, 1
      %p143 = scmp.ne.s32.totalorder %s138, %s140
      %p144 = scmp.eq.s32.totalorder %s20, 0
      %p145 = por %p143, %p144
      %p146 = scmp.ne.s32.totalorder %s138, %s140
      %p147 = scmp.eq.s32.totalorder %s25, 1
      %p148 = por %p146, %p147
      %p149 = scmp.ne.s32.totalorder %s140, %s141
      %p150 = scmp.eq.s32.totalorder %s25, 0
      %p151 = por %p149, %p150
      %p152 = scmp.ne.s32.totalorder %s140, %s141
      %p153 = scmp.eq.s32.totalorder %s26, 1
      %p154 = por %p152, %p153
      %p156 = scmp.ne.s32.totalorder %s141, %s155
      %p157 = scmp.eq.s32.totalorder %s26, 0
      %p158 = por %p156, %p157
      %s159 = ssub.s32 %s20, %s27
      %p160 = scmp.eq.s32.totalorder %s159, 0
      %s162 = sadd.s32 %s161, 1
      %s163 = scalar_select %p160, %s161, %s162
      %p166 = pneg %p160
      %p167 = scmp.eq.s32.totalorder %s20, 1
      %p168 = por %p166, %p167
      %p169 = scmp.ne.s32.totalorder %s161, %s164
      %p170 = scmp.eq.s32.totalorder %s20, 0
      %p171 = por %p169, %p170
      %p172 = scmp.ne.s32.totalorder %s161, %s164
      %p173 = scmp.eq.s32.totalorder %s25, 1
      %p174 = por %p172, %p173
      %p175 = scmp.ne.s32.totalorder %s164, %s165
      %p176 = scmp.eq.s32.totalorder %s25, 0
      %p177 = por %p175, %p176
      %p178 = scmp.ne.s32.totalorder %s164, %s165
      %p179 = scmp.eq.s32.totalorder %s26, 1
      %p180 = por %p178, %p179
      %p182 = scmp.ne.s32.totalorder %s165, %s181
      %p183 = scmp.eq.s32.totalorder %s26, 0
      %p184 = por %p182, %p183
      %p185 = scmp.le.s32.totalorder 1, %s20
      %p186 = scmp.lt.s32.totalorder %s20, 3
      %p187 = pnand %p185, %p186
      %p188 = pneg %p187
      // Predicated region
      $region9: #{tpu_custom_call.1} parent=5 // pred_check
        _
      $region10: #{tpu_custom_call.1} parent=5 // pred_check_branch
        %190 = sbr.rel (%p187) target = $region12
      $region11: #{tpu_custom_call.1} parent=5 // pred_region
        %s191 = ssub.s32 %s20, 1
        // Predicated region
        $region13: #{tpu_custom_call.1} parent=11 // pred_check
          %p192 = pneg %p67
        $region14: #{tpu_custom_call.1} parent=11 // pred_check_branch
          %194 = sbr.rel (%p192) target = $region16
        $region15: #{tpu_custom_call.1} parent=11 // pred_region
          %s196 = ssub.s32 512, 512
          %197 = vsyncadd [#allocation6], %s196
          %s198 = sshll.u32 [#allocation5], 4
          %s199 = int_to_ptr.vmem [resolvable:$true] %s198
          %204 = dma.hbm_to_vmem [thread:$0]  %s1, 512, %s199, [#allocation6], 128, 128, 8
        $region16: #{tpu_custom_call.1} parent=11 // pred_fallthru
          _
        // Predicated region
        $region17: #{tpu_custom_call.1} parent=11 // pred_check
          %p205 = pneg %p88
        $region18: #{tpu_custom_call.1} parent=11 // pred_check_branch
          %207 = sbr.rel (%p205) target = $region20
        $region19: #{tpu_custom_call.1} parent=11 // pred_region
          %s209 = ssub.s32 512, 512
          %210 = vsyncadd [#allocation6], %s209
          %s211 = sshll.u32 [#allocation7], 4
          %s212 = int_to_ptr.vmem [resolvable:$true] %s211
          %217 = dma.hbm_to_vmem [thread:$0]  %s2, 512, %s212, [#allocation6], 128, 128, 8
        $region20: #{tpu_custom_call.1} parent=11 // pred_fallthru
          _
        // Predicated region
        $region21: #{tpu_custom_call.1} parent=11 // pred_check
          %p218 = pneg %p109
        $region22: #{tpu_custom_call.1} parent=11 // pred_check_branch
          %220 = sbr.rel (%p218) target = $region24
        $region23: #{tpu_custom_call.1} parent=11 // pred_region
          %s222 = ssub.s32 512, 512
          %223 = vsyncadd [#allocation9], %s222
          %s224 = sshll.u32 [#allocation8], 4
          %s225 = int_to_ptr.vmem [resolvable:$true] %s224
          %230 = dma.hbm_to_vmem [thread:$0]  %s3, 512, %s225, [#allocation9], 128, 128, 8
        $region24: #{tpu_custom_call.1} parent=11 // pred_fallthru
          _
        // Predicated region
        $region25: #{tpu_custom_call.1} parent=11 // pred_check
          %p231 = pneg %p130
        $region26: #{tpu_custom_call.1} parent=11 // pred_check_branch
          %233 = sbr.rel (%p231) target = $region28
        $region27: #{tpu_custom_call.1} parent=11 // pred_region
          %s235 = ssub.s32 512, 512
          %236 = vsyncadd [#allocation9], %s235
          %s237 = sshll.u32 [#allocation10], 4
          %s238 = int_to_ptr.vmem [resolvable:$true] %s237
          %243 = dma.hbm_to_vmem [thread:$0]  %s4, 512, %s238, [#allocation9], 128, 128, 8
        $region28: #{tpu_custom_call.1} parent=11 // pred_fallthru
          _
        // Predicated region
        $region29: #{tpu_custom_call.1} parent=11 // pred_check
          %p244 = pneg %p151
        $region30: #{tpu_custom_call.1} parent=11 // pred_check_branch
          %246 = sbr.rel (%p244) target = $region32
        $region31: #{tpu_custom_call.1} parent=11 // pred_region
          _
        $region32: #{tpu_custom_call.1} parent=11 // pred_fallthru
          _
      $region12: #{tpu_custom_call.1} parent=5 // pred_fallthru
        _
      %p247 = scmp.lt.s32.totalorder %s20, 2
      // Predicated region
      $region33: #{tpu_custom_call.1} parent=5 // pred_check
        %p248 = pneg %p247
      $region34: #{tpu_custom_call.1} parent=5 // pred_check_branch
        %250 = sbr.rel (%p248) target = $region36
      $region35: #{tpu_custom_call.1} parent=5 // pred_region
        // Predicated region
        $region37: #{tpu_custom_call.1} parent=35 // pred_check
          %p251 = pneg %p40
        $region38: #{tpu_custom_call.1} parent=35 // pred_check_branch
          %253 = sbr.rel (%p251) target = $region40
        $region39: #{tpu_custom_call.1} parent=35 // pred_region
          %s254 = sand.u32 %s30, 1
          %s255 = scalar_lea.sflag [#allocation3], %s254
          %s256 = sand.u32 %s30, 1
          %s257 = smul.addr %s256, 8
          %s258 = scalar_lea.vmem [#allocation2], %s257
          %s260 = ssub.s32 128, 128
          %261 = vsyncadd %s255, %s260
          %s262 = smul.addr %s20, 128
          %s263 = scalar_lea.hbm %s0, %s262
          %s265 = sshll.u32 %s258, 4
          %s266 = int_to_ptr.vmem [resolvable:$true] %s265
          %268 = dma.hbm_to_vmem [thread:$0]  %s263, 128, %s266, %s255
        $region40: #{tpu_custom_call.1} parent=35 // pred_fallthru
          _
      $region36: #{tpu_custom_call.1} parent=5 // pred_fallthru
        _
      %p269 = scmp.le.s32.totalorder 1, %s20
      %p270 = scmp.lt.s32.totalorder %s20, 3
      %p271 = pnand %p269, %p270
      %p272 = pneg %p271
      // Predicated region
      $region41: #{tpu_custom_call.1} parent=5 // pred_check
        _
      $region42: #{tpu_custom_call.1} parent=5 // pred_check_branch
        %274 = sbr.rel (%p271) target = $region44
      $region43: #{tpu_custom_call.1} parent=5 // pred_region
        %s275 = ssub.s32 %s20, 1
        %s276 = sand.u32 %s33, 1
        %s277 = scalar_lea.sflag [#allocation3], %s276
        %s278 = sand.u32 %s33, 1
        %s279 = smul.addr %s278, 8
        %s280 = scalar_lea.vmem [#allocation2], %s279
        // Predicated region
        $region45: #{tpu_custom_call.1} parent=43 // pred_check
          %p281 = pneg %p46
        $region46: #{tpu_custom_call.1} parent=43 // pred_check_branch
          %283 = sbr.rel (%p281) target = $region48
        $region47: #{tpu_custom_call.1} parent=43 // pred_region
          %284 = dma.done %s277, 128
        $region48: #{tpu_custom_call.1} parent=43 // pred_fallthru
          _
        // Predicated region
        $region49: #{tpu_custom_call.1} parent=43 // pred_check
          %p285 = pneg %p67
        $region50: #{tpu_custom_call.1} parent=43 // pred_check_branch
          %287 = sbr.rel (%p285) target = $region52
        $region51: #{tpu_custom_call.1} parent=43 // pred_region
          %288 = dma.done [#allocation6], 512
        $region52: #{tpu_custom_call.1} parent=43 // pred_fallthru
          _
        // Predicated region
        $region53: #{tpu_custom_call.1} parent=43 // pred_check
          %p289 = pneg %p88
        $region54: #{tpu_custom_call.1} parent=43 // pred_check_branch
          %291 = sbr.rel (%p289) target = $region56
        $region55: #{tpu_custom_call.1} parent=43 // pred_region
          %292 = dma.done [#allocation6], 512
        $region56: #{tpu_custom_call.1} parent=43 // pred_fallthru
          _
        // Predicated region
        $region57: #{tpu_custom_call.1} parent=43 // pred_check
          %p293 = pneg %p109
        $region58: #{tpu_custom_call.1} parent=43 // pred_check_branch
          %295 = sbr.rel (%p293) target = $region60
        $region59: #{tpu_custom_call.1} parent=43 // pred_region
          %296 = dma.done [#allocation9], 512
        $region60: #{tpu_custom_call.1} parent=43 // pred_fallthru
          _
        // Predicated region
        $region61: #{tpu_custom_call.1} parent=43 // pred_check
          %p297 = pneg %p130
        $region62: #{tpu_custom_call.1} parent=43 // pred_check_branch
          %299 = sbr.rel (%p297) target = $region64
        $region63: #{tpu_custom_call.1} parent=43 // pred_region
          %300 = dma.done [#allocation9], 512
        $region64: #{tpu_custom_call.1} parent=43 // pred_fallthru
          _
        %s301 = sand.u32 %s33, 1
        %s302 = scalar_lea.sflag [#allocation3], %s301
        %s303 = sand.u32 %s33, 1
        %s304 = smul.addr %s303, 8
        %s305 = scalar_lea.vmem [#allocation2], %s304
        %p306 = pneg %p46
        %p307 = pneg %p43
        %p308 = pneg %p67
        %p309 = pneg %p64
        %p310 = pneg %p88
        %p311 = pneg %p85
        %p312 = pneg %p109
        %p313 = pneg %p106
        %p314 = pneg %p130
        %p315 = pneg %p127
        %p316 = pneg %p151
        %p317 = pneg %p148
        %p318 = pneg %p177
        %p319 = pneg %p174
        %s320 = sand.u32 %s164, 1
        %s321 = scalar_lea.sflag [#allocation4], %s320
        %s322 = sand.u32 %s164, 1
        %s323 = smul.addr %s322, 8
        %s324 = scalar_lea.vmem [#allocation11], %s323
        %v325 = vld [vmem:[%s280] sm:$0xff]
        %v326 = vld [vmem:[%s5] sm:$0xff]
        %v327 = vld [vmem:[%s5 + $0x8] sm:$0x3]
        %v328 = vld [vmem:[#allocation5] sm:$0xff]
        %v329 = vld [vmem:[#allocation5 + $0x8] sm:$0xff]
        %v330 = vld [vmem:[#allocation5 + $0x10] sm:$0xff]
        %v331 = vld [vmem:[#allocation5 + $0x18] sm:$0xff]
        %vm332 = vcmask 261120
        %v334 = vsel %vm332, %v325, 0
        %336 = vmatprep.subr.mxu0 0.0
        %337 = vmatpush1.msra.mxu0 %v328
        %338 = vmatprep.subr.mxu0 0.0
        %339 = vmatpush1.msra.mxu0 %v329
        %340 = vmatprep.subr.mxu0 0.0
        %341 = vmatpush1.msra.mxu0 %v330
        %342 = vmatprep.subr.mxu0 0.0
        %343 = vmatpush1.msra.mxu0 %v331
        %344 = vmatprep.subr.mxu0 0.0
        %345 = vmatpush1.msra.mxu0 0.0
        %346 = vmatprep.subr.mxu0 0.0
        %347 = vmatpush1.msra.mxu0 0.0
        %348 = vmatprep.subr.mxu0 0.0
        %349 = vmatpush1.msra.mxu0 0.0
        %350 = vmatprep.subr.mxu0 0.0
        %351 = vmatpush1.msra.mxu0 0.0
        %352 = vmatprep.subr.mxu0 0.0
        %353 = vmatpush1.msra.mxu0 0.0
        %354 = vmatprep.subr.mxu0 0.0
        %355 = vmatpush1.msra.mxu0 0.0
        %356 = vmatprep.subr.mxu0 0.0
        %357 = vmatpush1.msra.mxu0 0.0
        %358 = vmatprep.subr.mxu0 0.0
        %359 = vmatpush1.msra.mxu0 0.0
        %360 = vmatprep.subr.mxu0 0.0
        %361 = vmatpush1.msra.mxu0 0.0
        %362 = vmatprep.subr.mxu0 0.0
        %363 = vmatpush1.msra.mxu0 0.0
        %364 = vmatprep.subr.mxu0 0.0
        %365 = vmatpush1.msra.mxu0 0.0
        %366 = vmatprep.subr.mxu0 0.0
        %367 = vmatpush1.msra.mxu0 0.0
        %368 = vmatprep.subr.mxu0 0.0
        %369 = vmatpush1.msra.mxu0 0.0
        %370 = vmatprep.subr.mxu0 0.0
        %371 = vmatpush1.msra.mxu0 0.0
        %372 = vmatprep.subr.mxu0 0.0
        %373 = vmatpush1.msra.mxu0 0.0
        %374 = vmatprep.subr.mxu0 0.0
        %375 = vmatpush1.msra.mxu0 0.0
        %376 = vmatprep.subr.mxu0 0.0
        %377 = vmatpush1.msra.mxu0 0.0
        %378 = vmatprep.subr.mxu0 0.0
        %379 = vmatpush1.msra.mxu0 0.0
        %380 = vmatprep.subr.mxu0 0.0
        %381 = vmatpush1.msra.mxu0 0.0
        %382 = vmatprep.subr.mxu0 0.0
        %383 = vmatpush1.msra.mxu0 0.0
        %384 = vmatprep.subr.mxu0 0.0
        %385 = vmatpush1.msra.mxu0 0.0
        %386 = vmatprep.subr.mxu0 0.0
        %387 = vmatpush1.msra.mxu0 0.0
        %388 = vmatprep.subr.mxu0 0.0
        %389 = vmatpush1.msra.mxu0 0.0
        %390 = vmatprep.subr.mxu0 0.0
        %391 = vmatpush1.msra.mxu0 0.0
        %392 = vmatprep.subr.mxu0 0.0
        %393 = vmatpush1.msra.mxu0 0.0
        %394 = vmatprep.subr.mxu0 0.0
        %395 = vmatpush1.msra.mxu0 0.0
        %396 = vmatprep.subr.mxu0 0.0
        %397 = vmatpush1.msra.mxu0 0.0
        %398 = vmatprep.subr.mxu0 0.0
        %399 = vmatpush1.msra.mxu0 0.0
        %400 = vmatprep.mubr.f32.mxu0 0.0
        %401 = vmatmul.mubr.f32.gmra.mrb[0].mxu0 %v334
        %v402 = vpop.f32.mrb[0].mxu0
        %v403 = vadd.f32 0.0, %v402
        %v404 = vpop.f32.mrb[0].mxu0
        %405 = vdwg.mxu0
        %v406 = vlaneseq
        %v407 = vshrl.u32 %v406, 7
        %v408 = vsub.s32 0, %v407
        %v409 = vrot.slane %v326, %v408
        %v410 = vadd.f32 %v403, %v409
        %v411 = vlaneseq
        %v412 = vshrl.u32 %v411, 7
        %v413 = vsub.s32 1, %v412
        %v414 = vrot.slane %v326, %v413
        %416 = vrot.lane.b32.xlu0 %v414, 32
        %v417 = vpop.permute.xlu0 %416
        %v419 = vadd.f32 %v403, %v417
        %v420 = vlaneseq
        %v421 = vshrl.u32 %v420, 7
        %v422 = vsub.s32 2, %v421
        %v423 = vrot.slane %v326, %v422
        %425 = vrot.lane.b32.xlu0 %v423, 64
        %v426 = vpop.permute.xlu0 %425
        %v428 = vadd.f32 %v403, %v426
        %430 = vrot.lane.b32.xlu0 %v410, 120
        %v431 = vpop.permute.xlu0 %430
        %432 = vrot.lane.b32.xlu0 %v410, 112
        %v433 = vpop.permute.xlu0 %432
        %434 = vrot.lane.b32.xlu0 %v410, 104
        %v435 = vpop.permute.xlu0 %434
        %437 = vrot.lane.b32.xlu0 %v419, 120
        %v438 = vpop.permute.xlu0 %437
        %439 = vrot.lane.b32.xlu0 %v419, 112
        %v440 = vpop.permute.xlu0 %439
        %441 = vrot.lane.b32.xlu0 %v419, 104
        %v442 = vpop.permute.xlu0 %441
        %444 = vrot.lane.b32.xlu0 %v428, 120
        %v445 = vpop.permute.xlu0 %444
        %446 = vrot.lane.b32.xlu0 %v428, 112
        %v447 = vpop.permute.xlu0 %446
        %448 = vrot.lane.b32.xlu0 %v428, 104
        %v449 = vpop.permute.xlu0 %448
        %450 = vrot.lane.b32.xlu0 %v419, 96
        %v451 = vpop.permute.xlu0 %450
        %vm452 = vcmask 64512
        %v453 = vsel %vm452, %v410, 0
        %v455 = vsel %vm452, %v451, 0
        %457 = vmatprep.subr.mxu0 0.0
        %458 = vmatpush1.xpose.msra.mxu0 %v455
        %459 = vmatprep.subr.mxu0 0.0
        %460 = vmatpush1.xpose.msra.mxu0 0.0
        %461 = vmatprep.subr.mxu0 0.0
        %462 = vmatpush1.xpose.msra.mxu0 0.0
        %463 = vmatprep.subr.mxu0 0.0
        %464 = vmatpush1.xpose.msra.mxu0 0.0
        %465 = vmatprep.subr.mxu0 0.0
        %466 = vmatpush1.xpose.msra.mxu0 0.0
        %467 = vmatprep.subr.mxu0 0.0
        %468 = vmatpush1.xpose.msra.mxu0 0.0
        %469 = vmatprep.subr.mxu0 0.0
        %470 = vmatpush1.xpose.msra.mxu0 0.0
        %471 = vmatprep.subr.mxu0 0.0
        %472 = vmatpush1.xpose.msra.mxu0 0.0
        %473 = vmatprep.subr.mxu0 0.0
        %474 = vmatpush1.xpose.msra.mxu0 0.0
        %475 = vmatprep.subr.mxu0 0.0
        %476 = vmatpush1.xpose.msra.mxu0 0.0
        %477 = vmatprep.subr.mxu0 0.0
        %478 = vmatpush1.xpose.msra.mxu0 0.0
        %479 = vmatprep.subr.mxu0 0.0
        %480 = vmatpush1.xpose.msra.mxu0 0.0
        %481 = vmatprep.subr.mxu0 0.0
        %482 = vmatpush1.xpose.msra.mxu0 0.0
        %483 = vmatprep.subr.mxu0 0.0
        %484 = vmatpush1.xpose.msra.mxu0 0.0
        %485 = vmatprep.subr.mxu0 0.0
        %486 = vmatpush1.xpose.msra.mxu0 0.0
        %487 = vmatprep.subr.mxu0 0.0
        %488 = vmatpush1.xpose.msra.mxu0 0.0
        %489 = vmatprep.subr.mxu0 0.0
        %490 = vmatpush1.xpose.msra.mxu0 0.0
        %491 = vmatprep.subr.mxu0 0.0
        %492 = vmatpush1.xpose.msra.mxu0 0.0
        %493 = vmatprep.subr.mxu0 0.0
        %494 = vmatpush1.xpose.msra.mxu0 0.0
        %495 = vmatprep.subr.mxu0 0.0
        %496 = vmatpush1.xpose.msra.mxu0 0.0
        %497 = vmatprep.subr.mxu0 0.0
        %498 = vmatpush1.xpose.msra.mxu0 0.0
        %499 = vmatprep.subr.mxu0 0.0
        %500 = vmatpush1.xpose.msra.mxu0 0.0
        %501 = vmatprep.subr.mxu0 0.0
        %502 = vmatpush1.xpose.msra.mxu0 0.0
        %503 = vmatprep.subr.mxu0 0.0
        %504 = vmatpush1.xpose.msra.mxu0 0.0
        %505 = vmatprep.subr.mxu0 0.0
        %506 = vmatpush1.xpose.msra.mxu0 0.0
        %507 = vmatprep.subr.mxu0 0.0
        %508 = vmatpush1.xpose.msra.mxu0 0.0
        %509 = vmatprep.subr.mxu0 0.0
        %510 = vmatpush1.xpose.msra.mxu0 0.0
        %511 = vmatprep.subr.mxu0 0.0
        %512 = vmatpush1.xpose.msra.mxu0 0.0
        %513 = vmatprep.subr.mxu0 0.0
        %514 = vmatpush1.xpose.msra.mxu0 0.0
        %515 = vmatprep.subr.mxu0 0.0
        %516 = vmatpush1.xpose.msra.mxu0 0.0
        %517 = vmatprep.subr.mxu0 0.0
        %518 = vmatpush1.xpose.msra.mxu0 0.0
        %519 = vmatprep.subr.mxu0 0.0
        %520 = vmatpush1.xpose.msra.mxu0 0.0
        %521 = vmatprep.mubr.f32.mxu0 0.0
        %522 = vmatmul.mubr.f32.gmra.mrb[0].mxu0 %v453
        %v523 = vpop.f32.mrb[0].mxu0
        %v524 = vadd.f32 0.0, %v523
        %v525 = vpop.f32.mrb[0].mxu0
        %526 = vdwg.mxu0
        %527 = vrot.lane.b32.xlu0 %v438, 96
        %v528 = vpop.permute.xlu0 %527
        %v529 = vsel %vm452, %v431, 0
        %v531 = vsel %vm452, %v528, 0
        %533 = vmatprep.subr.mxu0 0.0
        %534 = vmatpush1.xpose.msra.mxu0 %v531
        %535 = vmatprep.subr.mxu0 0.0
        %536 = vmatpush1.xpose.msra.mxu0 0.0
        %537 = vmatprep.subr.mxu0 0.0
        %538 = vmatpush1.xpose.msra.mxu0 0.0
        %539 = vmatprep.subr.mxu0 0.0
        %540 = vmatpush1.xpose.msra.mxu0 0.0
        %541 = vmatprep.subr.mxu0 0.0
        %542 = vmatpush1.xpose.msra.mxu0 0.0
        %543 = vmatprep.subr.mxu0 0.0
        %544 = vmatpush1.xpose.msra.mxu0 0.0
        %545 = vmatprep.subr.mxu0 0.0
        %546 = vmatpush1.xpose.msra.mxu0 0.0
        %547 = vmatprep.subr.mxu0 0.0
        %548 = vmatpush1.xpose.msra.mxu0 0.0
        %549 = vmatprep.subr.mxu0 0.0
        %550 = vmatpush1.xpose.msra.mxu0 0.0
        %551 = vmatprep.subr.mxu0 0.0
        %552 = vmatpush1.xpose.msra.mxu0 0.0
        %553 = vmatprep.subr.mxu0 0.0
        %554 = vmatpush1.xpose.msra.mxu0 0.0
        %555 = vmatprep.subr.mxu0 0.0
        %556 = vmatpush1.xpose.msra.mxu0 0.0
        %557 = vmatprep.subr.mxu0 0.0
        %558 = vmatpush1.xpose.msra.mxu0 0.0
        %559 = vmatprep.subr.mxu0 0.0
        %560 = vmatpush1.xpose.msra.mxu0 0.0
        %561 = vmatprep.subr.mxu0 0.0
        %562 = vmatpush1.xpose.msra.mxu0 0.0
        %563 = vmatprep.subr.mxu0 0.0
        %564 = vmatpush1.xpose.msra.mxu0 0.0
        %565 = vmatprep.subr.mxu0 0.0
        %566 = vmatpush1.xpose.msra.mxu0 0.0
        %567 = vmatprep.subr.mxu0 0.0
        %568 = vmatpush1.xpose.msra.mxu0 0.0
        %569 = vmatprep.subr.mxu0 0.0
        %570 = vmatpush1.xpose.msra.mxu0 0.0
        %571 = vmatprep.subr.mxu0 0.0
        %572 = vmatpush1.xpose.msra.mxu0 0.0
        %573 = vmatprep.subr.mxu0 0.0
        %574 = vmatpush1.xpose.msra.mxu0 0.0
        %575 = vmatprep.subr.mxu0 0.0
        %576 = vmatpush1.xpose.msra.mxu0 0.0
        %577 = vmatprep.subr.mxu0 0.0
        %578 = vmatpush1.xpose.msra.mxu0 0.0
        %579 = vmatprep.subr.mxu0 0.0
        %580 = vmatpush1.xpose.msra.mxu0 0.0
        %581 = vmatprep.subr.mxu0 0.0
        %582 = vmatpush1.xpose.msra.mxu0 0.0
        %583 = vmatprep.subr.mxu0 0.0
        %584 = vmatpush1.xpose.msra.mxu0 0.0
        %585 = vmatprep.subr.mxu0 0.0
        %586 = vmatpush1.xpose.msra.mxu0 0.0
        %587 = vmatprep.subr.mxu0 0.0
        %588 = vmatpush1.xpose.msra.mxu0 0.0
        %589 = vmatprep.subr.mxu0 0.0
        %590 = vmatpush1.xpose.msra.mxu0 0.0
        %591 = vmatprep.subr.mxu0 0.0
        %592 = vmatpush1.xpose.msra.mxu0 0.0
        %593 = vmatprep.subr.mxu0 0.0
        %594 = vmatpush1.xpose.msra.mxu0 0.0
        %595 = vmatprep.subr.mxu0 0.0
        %596 = vmatpush1.xpose.msra.mxu0 0.0
        %597 = vmatprep.mubr.f32.mxu0 0.0
        %598 = vmatmul.mubr.f32.gmra.mrb[0].mxu0 %v529
        %v599 = vpop.f32.mrb[0].mxu0
        %v600 = vadd.f32 0.0, %v599
        %v601 = vpop.f32.mrb[0].mxu0
        %602 = vdwg.mxu0
        %603 = vrot.lane.b32.xlu0 %v440, 96
        %v604 = vpop.permute.xlu0 %603
        %v605 = vsel %vm452, %v433, 0
        %v607 = vsel %vm452, %v604, 0
        %609 = vmatprep.subr.mxu0 0.0
        %610 = vmatpush1.xpose.msra.mxu0 %v607
        %611 = vmatprep.subr.mxu0 0.0
        %612 = vmatpush1.xpose.msra.mxu0 0.0
        %613 = vmatprep.subr.mxu0 0.0
        %614 = vmatpush1.xpose.msra.mxu0 0.0
        %615 = vmatprep.subr.mxu0 0.0
        %616 = vmatpush1.xpose.msra.mxu0 0.0
        %617 = vmatprep.subr.mxu0 0.0
        %618 = vmatpush1.xpose.msra.mxu0 0.0
        %619 = vmatprep.subr.mxu0 0.0
        %620 = vmatpush1.xpose.msra.mxu0 0.0
        %621 = vmatprep.subr.mxu0 0.0
        %622 = vmatpush1.xpose.msra.mxu0 0.0
        %623 = vmatprep.subr.mxu0 0.0
        %624 = vmatpush1.xpose.msra.mxu0 0.0
        %625 = vmatprep.subr.mxu0 0.0
        %626 = vmatpush1.xpose.msra.mxu0 0.0
        %627 = vmatprep.subr.mxu0 0.0
        %628 = vmatpush1.xpose.msra.mxu0 0.0
        %629 = vmatprep.subr.mxu0 0.0
        %630 = vmatpush1.xpose.msra.mxu0 0.0
        %631 = vmatprep.subr.mxu0 0.0
        %632 = vmatpush1.xpose.msra.mxu0 0.0
        %633 = vmatprep.subr.mxu0 0.0
        %634 = vmatpush1.xpose.msra.mxu0 0.0
        %635 = vmatprep.subr.mxu0 0.0
        %636 = vmatpush1.xpose.msra.mxu0 0.0
        %637 = vmatprep.subr.mxu0 0.0
        %638 = vmatpush1.xpose.msra.mxu0 0.0
        %639 = vmatprep.subr.mxu0 0.0
        %640 = vmatpush1.xpose.msra.mxu0 0.0
        %641 = vmatprep.subr.mxu0 0.0
        %642 = vmatpush1.xpose.msra.mxu0 0.0
        %643 = vmatprep.subr.mxu0 0.0
        %644 = vmatpush1.xpose.msra.mxu0 0.0
        %645 = vmatprep.subr.mxu0 0.0
        %646 = vmatpush1.xpose.msra.mxu0 0.0
        %647 = vmatprep.subr.mxu0 0.0
        %648 = vmatpush1.xpose.msra.mxu0 0.0
        %649 = vmatprep.subr.mxu0 0.0
        %650 = vmatpush1.xpose.msra.mxu0 0.0
        %651 = vmatprep.subr.mxu0 0.0
        %652 = vmatpush1.xpose.msra.mxu0 0.0
        %653 = vmatprep.subr.mxu0 0.0
        %654 = vmatpush1.xpose.msra.mxu0 0.0
        %655 = vmatprep.subr.mxu0 0.0
        %656 = vmatpush1.xpose.msra.mxu0 0.0
        %657 = vmatprep.subr.mxu0 0.0
        %658 = vmatpush1.xpose.msra.mxu0 0.0
        %659 = vmatprep.subr.mxu0 0.0
        %660 = vmatpush1.xpose.msra.mxu0 0.0
        %661 = vmatprep.subr.mxu0 0.0
        %662 = vmatpush1.xpose.msra.mxu0 0.0
        %663 = vmatprep.subr.mxu0 0.0
        %664 = vmatpush1.xpose.msra.mxu0 0.0
        %665 = vmatprep.subr.mxu0 0.0
        %666 = vmatpush1.xpose.msra.mxu0 0.0
        %667 = vmatprep.subr.mxu0 0.0
        %668 = vmatpush1.xpose.msra.mxu0 0.0
        %669 = vmatprep.subr.mxu0 0.0
        %670 = vmatpush1.xpose.msra.mxu0 0.0
        %671 = vmatprep.subr.mxu0 0.0
        %672 = vmatpush1.xpose.msra.mxu0 0.0
        %673 = vmatprep.mubr.f32.mxu0 0.0
        %674 = vmatmul.mubr.f32.gmra.mrb[0].mxu0 %v605
        %v675 = vpop.f32.mrb[0].mxu0
        %v676 = vadd.f32 0.0, %v675
        %v677 = vpop.f32.mrb[0].mxu0
        %678 = vdwg.mxu0
        %679 = vrot.lane.b32.xlu0 %v442, 96
        %v680 = vpop.permute.xlu0 %679
        %v681 = vsel %vm452, %v435, 0
        %v683 = vsel %vm452, %v680, 0
        %685 = vmatprep.subr.mxu0 0.0
        %686 = vmatpush1.xpose.msra.mxu0 %v683
        %687 = vmatprep.subr.mxu0 0.0
        %688 = vmatpush1.xpose.msra.mxu0 0.0
        %689 = vmatprep.subr.mxu0 0.0
        %690 = vmatpush1.xpose.msra.mxu0 0.0
        %691 = vmatprep.subr.mxu0 0.0
        %692 = vmatpush1.xpose.msra.mxu0 0.0
        %693 = vmatprep.subr.mxu0 0.0
        %694 = vmatpush1.xpose.msra.mxu0 0.0
        %695 = vmatprep.subr.mxu0 0.0
        %696 = vmatpush1.xpose.msra.mxu0 0.0
        %697 = vmatprep.subr.mxu0 0.0
        %698 = vmatpush1.xpose.msra.mxu0 0.0
        %699 = vmatprep.subr.mxu0 0.0
        %700 = vmatpush1.xpose.msra.mxu0 0.0
        %701 = vmatprep.subr.mxu0 0.0
        %702 = vmatpush1.xpose.msra.mxu0 0.0
        %703 = vmatprep.subr.mxu0 0.0
        %704 = vmatpush1.xpose.msra.mxu0 0.0
        %705 = vmatprep.subr.mxu0 0.0
        %706 = vmatpush1.xpose.msra.mxu0 0.0
        %707 = vmatprep.subr.mxu0 0.0
        %708 = vmatpush1.xpose.msra.mxu0 0.0
        %709 = vmatprep.subr.mxu0 0.0
        %710 = vmatpush1.xpose.msra.mxu0 0.0
        %711 = vmatprep.subr.mxu0 0.0
        %712 = vmatpush1.xpose.msra.mxu0 0.0
        %713 = vmatprep.subr.mxu0 0.0
        %714 = vmatpush1.xpose.msra.mxu0 0.0
        %715 = vmatprep.subr.mxu0 0.0
        %716 = vmatpush1.xpose.msra.mxu0 0.0
        %717 = vmatprep.subr.mxu0 0.0
        %718 = vmatpush1.xpose.msra.mxu0 0.0
        %719 = vmatprep.subr.mxu0 0.0
        %720 = vmatpush1.xpose.msra.mxu0 0.0
        %721 = vmatprep.subr.mxu0 0.0
        %722 = vmatpush1.xpose.msra.mxu0 0.0
        %723 = vmatprep.subr.mxu0 0.0
        %724 = vmatpush1.xpose.msra.mxu0 0.0
        %725 = vmatprep.subr.mxu0 0.0
        %726 = vmatpush1.xpose.msra.mxu0 0.0
        %727 = vmatprep.subr.mxu0 0.0
        %728 = vmatpush1.xpose.msra.mxu0 0.0
        %729 = vmatprep.subr.mxu0 0.0
        %730 = vmatpush1.xpose.msra.mxu0 0.0
        %731 = vmatprep.subr.mxu0 0.0
        %732 = vmatpush1.xpose.msra.mxu0 0.0
        %733 = vmatprep.subr.mxu0 0.0
        %734 = vmatpush1.xpose.msra.mxu0 0.0
        %735 = vmatprep.subr.mxu0 0.0
        %736 = vmatpush1.xpose.msra.mxu0 0.0
        %737 = vmatprep.subr.mxu0 0.0
        %738 = vmatpush1.xpose.msra.mxu0 0.0
        %739 = vmatprep.subr.mxu0 0.0
        %740 = vmatpush1.xpose.msra.mxu0 0.0
        %741 = vmatprep.subr.mxu0 0.0
        %742 = vmatpush1.xpose.msra.mxu0 0.0
        %743 = vmatprep.subr.mxu0 0.0
        %744 = vmatpush1.xpose.msra.mxu0 0.0
        %745 = vmatprep.subr.mxu0 0.0
        %746 = vmatpush1.xpose.msra.mxu0 0.0
        %747 = vmatprep.subr.mxu0 0.0
        %748 = vmatpush1.xpose.msra.mxu0 0.0
        %749 = vmatprep.mubr.f32.mxu0 0.0
        %750 = vmatmul.mubr.f32.gmra.mrb[0].mxu0 %v681
        %v751 = vpop.f32.mrb[0].mxu0
        %v752 = vadd.f32 0.0, %v751
        %v753 = vpop.f32.mrb[0].mxu0
        %754 = vdwg.mxu0
        %v755 = vsel %vm452, %v524, -inf
        %756 = vmax.xlane.f32.xlu0 %v755
        %v757 = vpop.xlane.xlu0 %756
        %v758 = vsel %vm452, %v600, -inf
        %759 = vmax.xlane.f32.xlu0 %v758
        %v760 = vpop.xlane.xlu0 %759
        %v761 = vsel %vm452, %v676, -inf
        %762 = vmax.xlane.f32.xlu0 %v761
        %v763 = vpop.xlane.xlu0 %762
        %v764 = vsel %vm452, %v752, -inf
        %765 = vmax.xlane.f32.xlu0 %v764
        %v766 = vpop.xlane.xlu0 %765
        %v767 = vsub.f32 %v524, %v757
        %v768 = vsub.f32 %v600, %v760
        %v769 = vsub.f32 %v676, %v763
        %v770 = vsub.f32 %v752, %v766
        %v771 = vmul.f32 %v767, 1.442695
        %v772 = vpow.pop %v771
        %v773 = vmul.f32 %v768, 1.442695
        %v774 = vpow.pop %v773
        %v775 = vmul.f32 %v769, 1.442695
        %v776 = vpow.pop %v775
        %v777 = vmul.f32 %v770, 1.442695
        %v778 = vpow.pop %v777
        %v779 = vsel %vm452, %v772, 0.0
        %780 = vadd.xlane.f32.xlu0 %v779
        %v781 = vpop.xlane.xlu0 %780
        %v782 = vsel %vm452, %v774, 0.0
        %783 = vadd.xlane.f32.xlu0 %v782
        %v784 = vpop.xlane.xlu0 %783
        %v785 = vsel %vm452, %v776, 0.0
        %786 = vadd.xlane.f32.xlu0 %v785
        %v787 = vpop.xlane.xlu0 %786
        %v788 = vsel %vm452, %v778, 0.0
        %789 = vadd.xlane.f32.xlu0 %v788
        %v790 = vpop.xlane.xlu0 %789
        %v791 = vrcp.pop %v781
        %v792 = vrcp.pop %v784
        %v793 = vrcp.pop %v787
        %v794 = vrcp.pop %v790
        %v795 = vmul.f32 %v772, %v791
        %v796 = vmul.f32 %v774, %v792
        %v797 = vmul.f32 %v776, %v793
        %v798 = vmul.f32 %v778, %v794
        %799 = vrot.lane.b32.xlu0 %v428, 64
        %v800 = vpop.permute.xlu0 %799
        %v803 = vsel %vm452, %v795, 0
        %805 = vmatprep.subr.mxu0 0.0
        %806 = vmatpush1.msra.mxu0 %v800
        %807 = vmatprep.subr.mxu0 0.0
        %808 = vmatpush1.msra.mxu0 0.0
        %809 = vmatprep.subr.mxu0 0.0
        %810 = vmatpush1.msra.mxu0 0.0
        %811 = vmatprep.subr.mxu0 0.0
        %812 = vmatpush1.msra.mxu0 0.0
        %813 = vmatprep.subr.mxu0 0.0
        %814 = vmatpush1.msra.mxu0 0.0
        %815 = vmatprep.subr.mxu0 0.0
        %816 = vmatpush1.msra.mxu0 0.0
        %817 = vmatprep.subr.mxu0 0.0
        %818 = vmatpush1.msra.mxu0 0.0
        %819 = vmatprep.subr.mxu0 0.0
        %820 = vmatpush1.msra.mxu0 0.0
        %821 = vmatprep.subr.mxu0 0.0
        %822 = vmatpush1.msra.mxu0 0.0
        %823 = vmatprep.subr.mxu0 0.0
        %824 = vmatpush1.msra.mxu0 0.0
        %825 = vmatprep.subr.mxu0 0.0
        %826 = vmatpush1.msra.mxu0 0.0
        %827 = vmatprep.subr.mxu0 0.0
        %828 = vmatpush1.msra.mxu0 0.0
        %829 = vmatprep.subr.mxu0 0.0
        %830 = vmatpush1.msra.mxu0 0.0
        %831 = vmatprep.subr.mxu0 0.0
        %832 = vmatpush1.msra.mxu0 0.0
        %833 = vmatprep.subr.mxu0 0.0
        %834 = vmatpush1.msra.mxu0 0.0
        %835 = vmatprep.subr.mxu0 0.0
        %836 = vmatpush1.msra.mxu0 0.0
        %837 = vmatprep.subr.mxu0 0.0
        %838 = vmatpush1.msra.mxu0 0.0
        %839 = vmatprep.subr.mxu0 0.0
        %840 = vmatpush1.msra.mxu0 0.0
        %841 = vmatprep.subr.mxu0 0.0
        %842 = vmatpush1.msra.mxu0 0.0
        %843 = vmatprep.subr.mxu0 0.0
        %844 = vmatpush1.msra.mxu0 0.0
        %845 = vmatprep.subr.mxu0 0.0
        %846 = vmatpush1.msra.mxu0 0.0
        %847 = vmatprep.subr.mxu0 0.0
        %848 = vmatpush1.msra.mxu0 0.0
        %849 = vmatprep.subr.mxu0 0.0
        %850 = vmatpush1.msra.mxu0 0.0
        %851 = vmatprep.subr.mxu0 0.0
        %852 = vmatpush1.msra.mxu0 0.0
        %853 = vmatprep.subr.mxu0 0.0
        %854 = vmatpush1.msra.mxu0 0.0
        %855 = vmatprep.subr.mxu0 0.0
        %856 = vmatpush1.msra.mxu0 0.0
        %857 = vmatprep.subr.mxu0 0.0
        %858 = vmatpush1.msra.mxu0 0.0
        %859 = vmatprep.subr.mxu0 0.0
        %860 = vmatpush1.msra.mxu0 0.0
        %861 = vmatprep.subr.mxu0 0.0
        %862 = vmatpush1.msra.mxu0 0.0
        %863 = vmatprep.subr.mxu0 0.0
        %864 = vmatpush1.msra.mxu0 0.0
        %865 = vmatprep.subr.mxu0 0.0
        %866 = vmatpush1.msra.mxu0 0.0
        %867 = vmatprep.subr.mxu0 0.0
        %868 = vmatpush1.msra.mxu0 0.0
        %869 = vmatprep.mubr.f32.mxu0 0.0
        %870 = vmatmul.mubr.f32.gmra.mrb[0].mxu0 %v803
        %v871 = vpop.f32.mrb[0].mxu0
        %v872 = vadd.f32 0.0, %v871
        %v873 = vpop.f32.mrb[0].mxu0
        %874 = vdwg.mxu0
        %875 = vrot.lane.b32.xlu0 %v445, 64
        %v876 = vpop.permute.xlu0 %875
        %v879 = vsel %vm452, %v796, 0
        %881 = vmatprep.subr.mxu0 0.0
        %882 = vmatpush1.msra.mxu0 %v876
        %883 = vmatprep.subr.mxu0 0.0
        %884 = vmatpush1.msra.mxu0 0.0
        %885 = vmatprep.subr.mxu0 0.0
        %886 = vmatpush1.msra.mxu0 0.0
        %887 = vmatprep.subr.mxu0 0.0
        %888 = vmatpush1.msra.mxu0 0.0
        %889 = vmatprep.subr.mxu0 0.0
        %890 = vmatpush1.msra.mxu0 0.0
        %891 = vmatprep.subr.mxu0 0.0
        %892 = vmatpush1.msra.mxu0 0.0
        %893 = vmatprep.subr.mxu0 0.0
        %894 = vmatpush1.msra.mxu0 0.0
        %895 = vmatprep.subr.mxu0 0.0
        %896 = vmatpush1.msra.mxu0 0.0
        %897 = vmatprep.subr.mxu0 0.0
        %898 = vmatpush1.msra.mxu0 0.0
        %899 = vmatprep.subr.mxu0 0.0
        %900 = vmatpush1.msra.mxu0 0.0
        %901 = vmatprep.subr.mxu0 0.0
        %902 = vmatpush1.msra.mxu0 0.0
        %903 = vmatprep.subr.mxu0 0.0
        %904 = vmatpush1.msra.mxu0 0.0
        %905 = vmatprep.subr.mxu0 0.0
        %906 = vmatpush1.msra.mxu0 0.0
        %907 = vmatprep.subr.mxu0 0.0
        %908 = vmatpush1.msra.mxu0 0.0
        %909 = vmatprep.subr.mxu0 0.0
        %910 = vmatpush1.msra.mxu0 0.0
        %911 = vmatprep.subr.mxu0 0.0
        %912 = vmatpush1.msra.mxu0 0.0
        %913 = vmatprep.subr.mxu0 0.0
        %914 = vmatpush1.msra.mxu0 0.0
        %915 = vmatprep.subr.mxu0 0.0
        %916 = vmatpush1.msra.mxu0 0.0
        %917 = vmatprep.subr.mxu0 0.0
        %918 = vmatpush1.msra.mxu0 0.0
        %919 = vmatprep.subr.mxu0 0.0
        %920 = vmatpush1.msra.mxu0 0.0
        %921 = vmatprep.subr.mxu0 0.0
        %922 = vmatpush1.msra.mxu0 0.0
        %923 = vmatprep.subr.mxu0 0.0
        %924 = vmatpush1.msra.mxu0 0.0
        %925 = vmatprep.subr.mxu0 0.0
        %926 = vmatpush1.msra.mxu0 0.0
        %927 = vmatprep.subr.mxu0 0.0
        %928 = vmatpush1.msra.mxu0 0.0
        %929 = vmatprep.subr.mxu0 0.0
        %930 = vmatpush1.msra.mxu0 0.0
        %931 = vmatprep.subr.mxu0 0.0
        %932 = vmatpush1.msra.mxu0 0.0
        %933 = vmatprep.subr.mxu0 0.0
        %934 = vmatpush1.msra.mxu0 0.0
        %935 = vmatprep.subr.mxu0 0.0
        %936 = vmatpush1.msra.mxu0 0.0
        %937 = vmatprep.subr.mxu0 0.0
        %938 = vmatpush1.msra.mxu0 0.0
        %939 = vmatprep.subr.mxu0 0.0
        %940 = vmatpush1.msra.mxu0 0.0
        %941 = vmatprep.subr.mxu0 0.0
        %942 = vmatpush1.msra.mxu0 0.0
        %943 = vmatprep.subr.mxu0 0.0
        %944 = vmatpush1.msra.mxu0 0.0
        %945 = vmatprep.mubr.f32.mxu0 0.0
        %946 = vmatmul.mubr.f32.gmra.mrb[0].mxu0 %v879
        %v947 = vpop.f32.mrb[0].mxu0
        %v948 = vadd.f32 0.0, %v947
        %v949 = vpop.f32.mrb[0].mxu0
        %950 = vdwg.mxu0
        %951 = vrot.lane.b32.xlu0 %v447, 64
        %v952 = vpop.permute.xlu0 %951
        %v955 = vsel %vm452, %v797, 0
        %957 = vmatprep.subr.mxu0 0.0
        %958 = vmatpush1.msra.mxu0 %v952
        %959 = vmatprep.subr.mxu0 0.0
        %960 = vmatpush1.msra.mxu0 0.0
        %961 = vmatprep.subr.mxu0 0.0
        %962 = vmatpush1.msra.mxu0 0.0
        %963 = vmatprep.subr.mxu0 0.0
        %964 = vmatpush1.msra.mxu0 0.0
        %965 = vmatprep.subr.mxu0 0.0
        %966 = vmatpush1.msra.mxu0 0.0
        %967 = vmatprep.subr.mxu0 0.0
        %968 = vmatpush1.msra.mxu0 0.0
        %969 = vmatprep.subr.mxu0 0.0
        %970 = vmatpush1.msra.mxu0 0.0
        %971 = vmatprep.subr.mxu0 0.0
        %972 = vmatpush1.msra.mxu0 0.0
        %973 = vmatprep.subr.mxu0 0.0
        %974 = vmatpush1.msra.mxu0 0.0
        %975 = vmatprep.subr.mxu0 0.0
        %976 = vmatpush1.msra.mxu0 0.0
        %977 = vmatprep.subr.mxu0 0.0
        %978 = vmatpush1.msra.mxu0 0.0
        %979 = vmatprep.subr.mxu0 0.0
        %980 = vmatpush1.msra.mxu0 0.0
        %981 = vmatprep.subr.mxu0 0.0
        %982 = vmatpush1.msra.mxu0 0.0
        %983 = vmatprep.subr.mxu0 0.0
        %984 = vmatpush1.msra.mxu0 0.0
        %985 = vmatprep.subr.mxu0 0.0
        %986 = vmatpush1.msra.mxu0 0.0
        %987 = vmatprep.subr.mxu0 0.0
        %988 = vmatpush1.msra.mxu0 0.0
        %989 = vmatprep.subr.mxu0 0.0
        %990 = vmatpush1.msra.mxu0 0.0
        %991 = vmatprep.subr.mxu0 0.0
        %992 = vmatpush1.msra.mxu0 0.0
        %993 = vmatprep.subr.mxu0 0.0
        %994 = vmatpush1.msra.mxu0 0.0
        %995 = vmatprep.subr.mxu0 0.0
        %996 = vmatpush1.msra.mxu0 0.0
        %997 = vmatprep.subr.mxu0 0.0
        %998 = vmatpush1.msra.mxu0 0.0
        %999 = vmatprep.subr.mxu0 0.0
        %1000 = vmatpush1.msra.mxu0 0.0
        %1001 = vmatprep.subr.mxu0 0.0
        %1002 = vmatpush1.msra.mxu0 0.0
        %1003 = vmatprep.subr.mxu0 0.0
        %1004 = vmatpush1.msra.mxu0 0.0
        %1005 = vmatprep.subr.mxu0 0.0
        %1006 = vmatpush1.msra.mxu0 0.0
        %1007 = vmatprep.subr.mxu0 0.0
        %1008 = vmatpush1.msra.mxu0 0.0
        %1009 = vmatprep.subr.mxu0 0.0
        %1010 = vmatpush1.msra.mxu0 0.0
        %1011 = vmatprep.subr.mxu0 0.0
        %1012 = vmatpush1.msra.mxu0 0.0
        %1013 = vmatprep.subr.mxu0 0.0
        %1014 = vmatpush1.msra.mxu0 0.0
        %1015 = vmatprep.subr.mxu0 0.0
        %1016 = vmatpush1.msra.mxu0 0.0
        %1017 = vmatprep.subr.mxu0 0.0
        %1018 = vmatpush1.msra.mxu0 0.0
        %1019 = vmatprep.subr.mxu0 0.0
        %1020 = vmatpush1.msra.mxu0 0.0
        %1021 = vmatprep.mubr.f32.mxu0 0.0
        %1022 = vmatmul.mubr.f32.gmra.mrb[0].mxu0 %v955
        %v1023 = vpop.f32.mrb[0].mxu0
        %v1024 = vadd.f32 0.0, %v1023
        %v1025 = vpop.f32.mrb[0].mxu0
        %1026 = vdwg.mxu0
        %1027 = vrot.lane.b32.xlu0 %v449, 64
        %v1028 = vpop.permute.xlu0 %1027
        %v1031 = vsel %vm452, %v798, 0
        %1033 = vmatprep.subr.mxu0 0.0
        %1034 = vmatpush1.msra.mxu0 %v1028
        %1035 = vmatprep.subr.mxu0 0.0
        %1036 = vmatpush1.msra.mxu0 0.0
        %1037 = vmatprep.subr.mxu0 0.0
        %1038 = vmatpush1.msra.mxu0 0.0
        %1039 = vmatprep.subr.mxu0 0.0
        %1040 = vmatpush1.msra.mxu0 0.0
        %1041 = vmatprep.subr.mxu0 0.0
        %1042 = vmatpush1.msra.mxu0 0.0
        %1043 = vmatprep.subr.mxu0 0.0
        %1044 = vmatpush1.msra.mxu0 0.0
        %1045 = vmatprep.subr.mxu0 0.0
        %1046 = vmatpush1.msra.mxu0 0.0
        %1047 = vmatprep.subr.mxu0 0.0
        %1048 = vmatpush1.msra.mxu0 0.0
        %1049 = vmatprep.subr.mxu0 0.0
        %1050 = vmatpush1.msra.mxu0 0.0
        %1051 = vmatprep.subr.mxu0 0.0
        %1052 = vmatpush1.msra.mxu0 0.0
        %1053 = vmatprep.subr.mxu0 0.0
        %1054 = vmatpush1.msra.mxu0 0.0
        %1055 = vmatprep.subr.mxu0 0.0
        %1056 = vmatpush1.msra.mxu0 0.0
        %1057 = vmatprep.subr.mxu0 0.0
        %1058 = vmatpush1.msra.mxu0 0.0
        %1059 = vmatprep.subr.mxu0 0.0
        %1060 = vmatpush1.msra.mxu0 0.0
        %1061 = vmatprep.subr.mxu0 0.0
        %1062 = vmatpush1.msra.mxu0 0.0
        %1063 = vmatprep.subr.mxu0 0.0
        %1064 = vmatpush1.msra.mxu0 0.0
        %1065 = vmatprep.subr.mxu0 0.0
        %1066 = vmatpush1.msra.mxu0 0.0
        %1067 = vmatprep.subr.mxu0 0.0
        %1068 = vmatpush1.msra.mxu0 0.0
        %1069 = vmatprep.subr.mxu0 0.0
        %1070 = vmatpush1.msra.mxu0 0.0
        %1071 = vmatprep.subr.mxu0 0.0
        %1072 = vmatpush1.msra.mxu0 0.0
        %1073 = vmatprep.subr.mxu0 0.0
        %1074 = vmatpush1.msra.mxu0 0.0
        %1075 = vmatprep.subr.mxu0 0.0
        %1076 = vmatpush1.msra.mxu0 0.0
        %1077 = vmatprep.subr.mxu0 0.0
        %1078 = vmatpush1.msra.mxu0 0.0
        %1079 = vmatprep.subr.mxu0 0.0
        %1080 = vmatpush1.msra.mxu0 0.0
        %1081 = vmatprep.subr.mxu0 0.0
        %1082 = vmatpush1.msra.mxu0 0.0
        %1083 = vmatprep.subr.mxu0 0.0
        %1084 = vmatpush1.msra.mxu0 0.0
        %1085 = vmatprep.subr.mxu0 0.0
        %1086 = vmatpush1.msra.mxu0 0.0
        %1087 = vmatprep.subr.mxu0 0.0
        %1088 = vmatpush1.msra.mxu0 0.0
        %1089 = vmatprep.subr.mxu0 0.0
        %1090 = vmatpush1.msra.mxu0 0.0
        %1091 = vmatprep.subr.mxu0 0.0
        %1092 = vmatpush1.msra.mxu0 0.0
        %1093 = vmatprep.subr.mxu0 0.0
        %1094 = vmatpush1.msra.mxu0 0.0
        %1095 = vmatprep.subr.mxu0 0.0
        %1096 = vmatpush1.msra.mxu0 0.0
        %1097 = vmatprep.mubr.f32.mxu0 0.0
        %1098 = vmatmul.mubr.f32.gmra.mrb[0].mxu0 %v1031
        %v1099 = vpop.f32.mrb[0].mxu0
        %v1100 = vadd.f32 0.0, %v1099
        %v1101 = vpop.f32.mrb[0].mxu0
        %1102 = vdwg.mxu0
        %1104 = vrot.lane.b32.xlu0 %v948, 8
        %v1105 = vpop.permute.xlu0 %1104
        %1108 = vrot.lane.b32.xlu0 %v1024, 16
        %v1109 = vpop.permute.xlu0 %1108
        %1112 = vrot.lane.b32.xlu0 %v1100, 24
        %v1113 = vpop.permute.xlu0 %1112
        %v1115 = vsel %vm452, %v872, %v1105
        %vm1116 = vcmask 130048
        %v1117 = vsel %vm1116, %v1115, %v1109
        %vm1118 = vcmask 195584
        %v1119 = vsel %vm1118, %v1117, %v1113
        %v1120 = vld [vmem:[#allocation7] sm:$0xff]
        %v1121 = vld [vmem:[#allocation7 + $0x8] sm:$0xff]
        %v1122 = vld [vmem:[#allocation7 + $0x10] sm:$0xff]
        %v1123 = vld [vmem:[#allocation7 + $0x18] sm:$0xff]
        %v1124 = vlaneseq
        %v1125 = vshrl.u32 %v1124, 7
        %v1126 = vsub.s32 3, %v1125
        %v1127 = vrot.slane %v326, %v1126
        %v1129 = vsel %vm332, %v1119, 0
        %1131 = vmatprep.subr.mxu0 0.0
        %1132 = vmatpush1.msra.mxu0 %v1120
        %1133 = vmatprep.subr.mxu0 0.0
        %1134 = vmatpush1.msra.mxu0 %v1121
        %1135 = vmatprep.subr.mxu0 0.0
        %1136 = vmatpush1.msra.mxu0 %v1122
        %1137 = vmatprep.subr.mxu0 0.0
        %1138 = vmatpush1.msra.mxu0 %v1123
        %1139 = vmatprep.subr.mxu0 0.0
        %1140 = vmatpush1.msra.mxu0 0.0
        %1141 = vmatprep.subr.mxu0 0.0
        %1142 = vmatpush1.msra.mxu0 0.0
        %1143 = vmatprep.subr.mxu0 0.0
        %1144 = vmatpush1.msra.mxu0 0.0
        %1145 = vmatprep.subr.mxu0 0.0
        %1146 = vmatpush1.msra.mxu0 0.0
        %1147 = vmatprep.subr.mxu0 0.0
        %1148 = vmatpush1.msra.mxu0 0.0
        %1149 = vmatprep.subr.mxu0 0.0
        %1150 = vmatpush1.msra.mxu0 0.0
        %1151 = vmatprep.subr.mxu0 0.0
        %1152 = vmatpush1.msra.mxu0 0.0
        %1153 = vmatprep.subr.mxu0 0.0
        %1154 = vmatpush1.msra.mxu0 0.0
        %1155 = vmatprep.subr.mxu0 0.0
        %1156 = vmatpush1.msra.mxu0 0.0
        %1157 = vmatprep.subr.mxu0 0.0
        %1158 = vmatpush1.msra.mxu0 0.0
        %1159 = vmatprep.subr.mxu0 0.0
        %1160 = vmatpush1.msra.mxu0 0.0
        %1161 = vmatprep.subr.mxu0 0.0
        %1162 = vmatpush1.msra.mxu0 0.0
        %1163 = vmatprep.subr.mxu0 0.0
        %1164 = vmatpush1.msra.mxu0 0.0
        %1165 = vmatprep.subr.mxu0 0.0
        %1166 = vmatpush1.msra.mxu0 0.0
        %1167 = vmatprep.subr.mxu0 0.0
        %1168 = vmatpush1.msra.mxu0 0.0
        %1169 = vmatprep.subr.mxu0 0.0
        %1170 = vmatpush1.msra.mxu0 0.0
        %1171 = vmatprep.subr.mxu0 0.0
        %1172 = vmatpush1.msra.mxu0 0.0
        %1173 = vmatprep.subr.mxu0 0.0
        %1174 = vmatpush1.msra.mxu0 0.0
        %1175 = vmatprep.subr.mxu0 0.0
        %1176 = vmatpush1.msra.mxu0 0.0
        %1177 = vmatprep.subr.mxu0 0.0
        %1178 = vmatpush1.msra.mxu0 0.0
        %1179 = vmatprep.subr.mxu0 0.0
        %1180 = vmatpush1.msra.mxu0 0.0
        %1181 = vmatprep.subr.mxu0 0.0
        %1182 = vmatpush1.msra.mxu0 0.0
        %1183 = vmatprep.subr.mxu0 0.0
        %1184 = vmatpush1.msra.mxu0 0.0
        %1185 = vmatprep.subr.mxu0 0.0
        %1186 = vmatpush1.msra.mxu0 0.0
        %1187 = vmatprep.subr.mxu0 0.0
        %1188 = vmatpush1.msra.mxu0 0.0
        %1189 = vmatprep.subr.mxu0 0.0
        %1190 = vmatpush1.msra.mxu0 0.0
        %1191 = vmatprep.subr.mxu0 0.0
        %1192 = vmatpush1.msra.mxu0 0.0
        %1193 = vmatprep.subr.mxu0 0.0
        %1194 = vmatpush1.msra.mxu0 0.0
        %1195 = vmatprep.mubr.f32.mxu0 0.0
        %1196 = vmatmul.mubr.f32.gmra.mrb[0].mxu0 %v1129
        %v1197 = vpop.f32.mrb[0].mxu0
        %v1198 = vadd.f32 %v1127, %v1197
        %v1199 = vpop.f32.mrb[0].mxu0
        %1200 = vdwg.mxu0
        %v1201 = vadd.f32 %v325, %v1198
        %v1202 = vsel %vm332, %v1201, 0.0
        %1203 = vadd.xlane.f32.xlu0 %v1202
        %v1204 = vpop.xlane.xlu0 %1203
        %v1205 = vrcp.pop 32.0
        %v1206 = vmul.f32 %v1204, %v1205
        %v1207 = vsub.f32 %v1201, %v1206
        %v1208 = vmul.f32 %v1207, %v1207
        %v1209 = vsel %vm332, %v1208, 0.0
        %1210 = vadd.xlane.f32.xlu0 %v1209
        %v1211 = vpop.xlane.xlu0 %1210
        %v1212 = vmul.f32 %v1211, %v1205
        %v1213 = vadd.f32 %v1212, 1e-05
        %v1214 = vrsqrt.pop %v1213
        %v1215 = vmul.f32 %v1207, %v1214
        %v1216 = vlaneseq
        %v1217 = vshrl.u32 %v1216, 7
        %v1218 = vsub.s32 6, %v1217
        %v1219 = vrot.slane %v326, %v1218
        %v1220 = vmul.f32 %v1215, %v1219
        %v1221 = vlaneseq
        %v1222 = vshrl.u32 %v1221, 7
        %v1223 = vsub.s32 7, %v1222
        %v1224 = vrot.slane %v326, %v1223
        %v1225 = vadd.f32 %v1220, %v1224
        %v1226 = vld [vmem:[#allocation8] sm:$0xff]
        %v1227 = vld [vmem:[#allocation8 + $0x8] sm:$0xff]
        %v1228 = vld [vmem:[#allocation8 + $0x10] sm:$0xff]
        %v1229 = vld [vmem:[#allocation8 + $0x18] sm:$0xff]
        %v1230 = vlaneseq
        %v1231 = vshrl.u32 %v1230, 7
        %v1232 = vsub.s32 4, %v1231
        %v1233 = vrot.slane %v326, %v1232
        %v1235 = vsel %vm332, %v1225, 0
        %1237 = vmatprep.subr.mxu0 0.0
        %1238 = vmatpush1.msra.mxu0 %v1226
        %1239 = vmatprep.subr.mxu0 0.0
        %1240 = vmatpush1.msra.mxu0 %v1227
        %1241 = vmatprep.subr.mxu0 0.0
        %1242 = vmatpush1.msra.mxu0 %v1228
        %1243 = vmatprep.subr.mxu0 0.0
        %1244 = vmatpush1.msra.mxu0 %v1229
        %1245 = vmatprep.subr.mxu0 0.0
        %1246 = vmatpush1.msra.mxu0 0.0
        %1247 = vmatprep.subr.mxu0 0.0
        %1248 = vmatpush1.msra.mxu0 0.0
        %1249 = vmatprep.subr.mxu0 0.0
        %1250 = vmatpush1.msra.mxu0 0.0
        %1251 = vmatprep.subr.mxu0 0.0
        %1252 = vmatpush1.msra.mxu0 0.0
        %1253 = vmatprep.subr.mxu0 0.0
        %1254 = vmatpush1.msra.mxu0 0.0
        %1255 = vmatprep.subr.mxu0 0.0
        %1256 = vmatpush1.msra.mxu0 0.0
        %1257 = vmatprep.subr.mxu0 0.0
        %1258 = vmatpush1.msra.mxu0 0.0
        %1259 = vmatprep.subr.mxu0 0.0
        %1260 = vmatpush1.msra.mxu0 0.0
        %1261 = vmatprep.subr.mxu0 0.0
        %1262 = vmatpush1.msra.mxu0 0.0
        %1263 = vmatprep.subr.mxu0 0.0
        %1264 = vmatpush1.msra.mxu0 0.0
        %1265 = vmatprep.subr.mxu0 0.0
        %1266 = vmatpush1.msra.mxu0 0.0
        %1267 = vmatprep.subr.mxu0 0.0
        %1268 = vmatpush1.msra.mxu0 0.0
        %1269 = vmatprep.subr.mxu0 0.0
        %1270 = vmatpush1.msra.mxu0 0.0
        %1271 = vmatprep.subr.mxu0 0.0
        %1272 = vmatpush1.msra.mxu0 0.0
        %1273 = vmatprep.subr.mxu0 0.0
        %1274 = vmatpush1.msra.mxu0 0.0
        %1275 = vmatprep.subr.mxu0 0.0
        %1276 = vmatpush1.msra.mxu0 0.0
        %1277 = vmatprep.subr.mxu0 0.0
        %1278 = vmatpush1.msra.mxu0 0.0
        %1279 = vmatprep.subr.mxu0 0.0
        %1280 = vmatpush1.msra.mxu0 0.0
        %1281 = vmatprep.subr.mxu0 0.0
        %1282 = vmatpush1.msra.mxu0 0.0
        %1283 = vmatprep.subr.mxu0 0.0
        %1284 = vmatpush1.msra.mxu0 0.0
        %1285 = vmatprep.subr.mxu0 0.0
        %1286 = vmatpush1.msra.mxu0 0.0
        %1287 = vmatprep.subr.mxu0 0.0
        %1288 = vmatpush1.msra.mxu0 0.0
        %1289 = vmatprep.subr.mxu0 0.0
        %1290 = vmatpush1.msra.mxu0 0.0
        %1291 = vmatprep.subr.mxu0 0.0
        %1292 = vmatpush1.msra.mxu0 0.0
        %1293 = vmatprep.subr.mxu0 0.0
        %1294 = vmatpush1.msra.mxu0 0.0
        %1295 = vmatprep.subr.mxu0 0.0
        %1296 = vmatpush1.msra.mxu0 0.0
        %1297 = vmatprep.subr.mxu0 0.0
        %1298 = vmatpush1.msra.mxu0 0.0
        %1299 = vmatprep.subr.mxu0 0.0
        %1300 = vmatpush1.msra.mxu0 0.0
        %1301 = vmatprep.mubr.f32.mxu0 0.0
        %1302 = vmatmul.mubr.f32.gmra.mrb[0].mxu0 %v1235
        %v1303 = vpop.f32.mrb[0].mxu0
        %v1304 = vadd.f32 %v1233, %v1303
        %v1305 = vpop.f32.mrb[0].mxu0
        %1306 = vdwg.mxu0
        %v1307 = vmax.f32 %v1304, 0.0
        %v1308 = vld [vmem:[#allocation10] sm:$0xff]
        %v1309 = vld [vmem:[#allocation10 + $0x8] sm:$0xff]
        %v1310 = vld [vmem:[#allocation10 + $0x10] sm:$0xff]
        %v1311 = vld [vmem:[#allocation10 + $0x18] sm:$0xff]
        %v1312 = vlaneseq
        %v1313 = vshrl.u32 %v1312, 7
        %v1314 = vsub.s32 5, %v1313
        %v1315 = vrot.slane %v326, %v1314
        %v1317 = vsel %vm332, %v1307, 0
        %1319 = vmatprep.subr.mxu0 0.0
        %1320 = vmatpush1.msra.mxu0 %v1308
        %1321 = vmatprep.subr.mxu0 0.0
        %1322 = vmatpush1.msra.mxu0 %v1309
        %1323 = vmatprep.subr.mxu0 0.0
        %1324 = vmatpush1.msra.mxu0 %v1310
        %1325 = vmatprep.subr.mxu0 0.0
        %1326 = vmatpush1.msra.mxu0 %v1311
        %1327 = vmatprep.subr.mxu0 0.0
        %1328 = vmatpush1.msra.mxu0 0.0
        %1329 = vmatprep.subr.mxu0 0.0
        %1330 = vmatpush1.msra.mxu0 0.0
        %1331 = vmatprep.subr.mxu0 0.0
        %1332 = vmatpush1.msra.mxu0 0.0
        %1333 = vmatprep.subr.mxu0 0.0
        %1334 = vmatpush1.msra.mxu0 0.0
        %1335 = vmatprep.subr.mxu0 0.0
        %1336 = vmatpush1.msra.mxu0 0.0
        %1337 = vmatprep.subr.mxu0 0.0
        %1338 = vmatpush1.msra.mxu0 0.0
        %1339 = vmatprep.subr.mxu0 0.0
        %1340 = vmatpush1.msra.mxu0 0.0
        %1341 = vmatprep.subr.mxu0 0.0
        %1342 = vmatpush1.msra.mxu0 0.0
        %1343 = vmatprep.subr.mxu0 0.0
        %1344 = vmatpush1.msra.mxu0 0.0
        %1345 = vmatprep.subr.mxu0 0.0
        %1346 = vmatpush1.msra.mxu0 0.0
        %1347 = vmatprep.subr.mxu0 0.0
        %1348 = vmatpush1.msra.mxu0 0.0
        %1349 = vmatprep.subr.mxu0 0.0
        %1350 = vmatpush1.msra.mxu0 0.0
        %1351 = vmatprep.subr.mxu0 0.0
        %1352 = vmatpush1.msra.mxu0 0.0
        %1353 = vmatprep.subr.mxu0 0.0
        %1354 = vmatpush1.msra.mxu0 0.0
        %1355 = vmatprep.subr.mxu0 0.0
        %1356 = vmatpush1.msra.mxu0 0.0
        %1357 = vmatprep.subr.mxu0 0.0
        %1358 = vmatpush1.msra.mxu0 0.0
        %1359 = vmatprep.subr.mxu0 0.0
        %1360 = vmatpush1.msra.mxu0 0.0
        %1361 = vmatprep.subr.mxu0 0.0
        %1362 = vmatpush1.msra.mxu0 0.0
        %1363 = vmatprep.subr.mxu0 0.0
        %1364 = vmatpush1.msra.mxu0 0.0
        %1365 = vmatprep.subr.mxu0 0.0
        %1366 = vmatpush1.msra.mxu0 0.0
        %1367 = vmatprep.subr.mxu0 0.0
        %1368 = vmatpush1.msra.mxu0 0.0
        %1369 = vmatprep.subr.mxu0 0.0
        %1370 = vmatpush1.msra.mxu0 0.0
        %1371 = vmatprep.subr.mxu0 0.0
        %1372 = vmatpush1.msra.mxu0 0.0
        %1373 = vmatprep.subr.mxu0 0.0
        %1374 = vmatpush1.msra.mxu0 0.0
        %1375 = vmatprep.subr.mxu0 0.0
        %1376 = vmatpush1.msra.mxu0 0.0
        %1377 = vmatprep.subr.mxu0 0.0
        %1378 = vmatpush1.msra.mxu0 0.0
        %1379 = vmatprep.subr.mxu0 0.0
        %1380 = vmatpush1.msra.mxu0 0.0
        %1381 = vmatprep.subr.mxu0 0.0
        %1382 = vmatpush1.msra.mxu0 0.0
        %1383 = vmatprep.mubr.f32.mxu0 0.0
        %1384 = vmatmul.mubr.f32.gmra.mrb[0].mxu0 %v1317
        %v1385 = vpop.f32.mrb[0].mxu0
        %v1386 = vadd.f32 %v1315, %v1385
        %v1387 = vpop.f32.mrb[0].mxu0
        %1388 = vdwg.mxu0
        %v1389 = vadd.f32 %v1225, %v1386
        %v1390 = vsel %vm332, %v1389, 0.0
        %1391 = vadd.xlane.f32.xlu0 %v1390
        %v1392 = vpop.xlane.xlu0 %1391
        %v1393 = vmul.f32 %v1392, %v1205
        %v1394 = vsub.f32 %v1389, %v1393
        %v1395 = vmul.f32 %v1394, %v1394
        %v1396 = vsel %vm332, %v1395, 0.0
        %1397 = vadd.xlane.f32.xlu0 %v1396
        %v1398 = vpop.xlane.xlu0 %1397
        %v1399 = vmul.f32 %v1398, %v1205
        %v1400 = vadd.f32 %v1399, 1e-05
        %v1401 = vrsqrt.pop %v1400
        %v1402 = vmul.f32 %v1394, %v1401
        %v1403 = vlaneseq
        %v1404 = vshrl.u32 %v1403, 7
        %v1405 = vsub.s32 0, %v1404
        %v1406 = vrot.slane %v327, %v1405
        %v1407 = vmul.f32 %v1402, %v1406
        %v1408 = vlaneseq
        %v1409 = vshrl.u32 %v1408, 7
        %v1410 = vsub.s32 1, %v1409
        %v1411 = vrot.slane %v327, %v1410
        %v1412 = vadd.f32 %v1407, %v1411
        %1413 = vst.msk [vmem:[%s324] sm:$0xff] %vm332, %v1412
        %s1414 = sand.u32 %s164, 1
        %s1415 = scalar_lea.sflag [#allocation4], %s1414
        %s1416 = sand.u32 %s164, 1
        %s1417 = smul.addr %s1416, 8
        %s1418 = scalar_lea.vmem [#allocation11], %s1417
        // Predicated region
        $region65: #{tpu_custom_call.1} parent=43 // pred_check
          %p1419 = pneg %p174
        $region66: #{tpu_custom_call.1} parent=43 // pred_check_branch
          %1421 = sbr.rel (%p1419) target = $region68
        $region67: #{tpu_custom_call.1} parent=43 // pred_region
          %s1423 = ssub.s32 128, 128
          %1424 = vsyncadd %s1415, %s1423
          %s1425 = smul.addr %s25, 128
          %s1426 = scalar_lea.hbm %s6, %s1425
          %s1428 = sshll.u32 %s1418, 4
          %s1429 = int_to_ptr.vmem [resolvable:$true] %s1428
          %1431 = dma.vmem_to_hbm [thread:$0]  %s1429, 128, %s1426, %s1415
        $region68: #{tpu_custom_call.1} parent=43 // pred_fallthru
          _
      $region44: #{tpu_custom_call.1} parent=5 // pred_fallthru
        _
      %p1432 = scmp.le.s32.totalorder 2, %s20
      // Predicated region
      $region69: #{tpu_custom_call.1} parent=5 // pred_check
        %p1433 = pneg %p1432
      $region70: #{tpu_custom_call.1} parent=5 // pred_check_branch
        %1435 = sbr.rel (%p1433) target = $region72
      $region71: #{tpu_custom_call.1} parent=5 // pred_region
        %s1436 = ssub.s32 %s20, 2
        // Predicated region
        $region73: #{tpu_custom_call.1} parent=71 // pred_check
          %p1437 = pneg %p180
        $region74: #{tpu_custom_call.1} parent=71 // pred_check_branch
          %1439 = sbr.rel (%p1437) target = $region76
        $region75: #{tpu_custom_call.1} parent=71 // pred_region
          %s1440 = sand.u32 %s165, 1
          %s1441 = scalar_lea.sflag [#allocation4], %s1440
          %s1442 = sand.u32 %s165, 1
          %s1443 = smul.addr %s1442, 8
          %s1444 = scalar_lea.vmem [#allocation11], %s1443
          %1445 = dma.done %s1441, 128
        $region76: #{tpu_custom_call.1} parent=71 // pred_fallthru
          _
      $region72: #{tpu_custom_call.1} parent=5 // pred_fallthru
        _
    $region6: #{tpu_custom_call.1} parent=1 // loop_footer
      %s24 = sadd.s32 1, %s20
    $region7: #{tpu_custom_call.1} parent=1 // loop_footer_branch
      %19 = sbr.rel target = $region3
    $region8: #{tpu_custom_call.1} parent=1 // loop_exit
      _
    %1446 = vsyncpa [#allocation3], 1
    %s1447 = scalar_lea.sflag [#allocation3], 1
    %1448 = vsyncpa %s1447, 1
    %1449 = vsyncpa [#allocation6], 1
    %1450 = vsyncpa [#allocation9], 1
    %1451 = vsyncpa [#allocation4], 1
    %s1452 = scalar_lea.sflag [#allocation4], 1
    %1453 = vsyncpa %s1452, 1

</llo_original>
